<compile_context>
chip_gen: v7x
topology: tpu7x:2x2x1
jax: 0.10.0
libtpu: 0.0.40
codegen_flags: <defaults>
</compile_context>

<pallas_src>
import math

import jax
import jax.numpy as jnp
from jax import lax
from jax.experimental import pallas as pl
from jax.experimental.pallas import tpu as pltpu

NEG_INF = -1e9
LN_EPS = 1e-5


def _layer_norm(x, g, b, eps=LN_EPS):
    mu = jnp.mean(x, axis=-1, keepdims=True)
    var = jnp.mean(jnp.square(x - mu), axis=-1, keepdims=True)
    return (x - mu) * lax.rsqrt(var + eps) * g + b


# --------------------------------------------------------------------------------------
# One fused kernel: grid = (batch_block, layer).  Activation lives in VMEM scratch across
# the layer axis; the classification head runs on the last layer iteration.
# --------------------------------------------------------------------------------------
def _make_kernel(Bt, L, E, H, Dh, Fh, fh_chunk):
    n_ch = Fh // fh_chunk

    def kernel(e_ref, pos_ref, padk_ref, padq_ref, padqf_ref,
               wqkv_ref, wo_ref, w1_ref, w2_ref,
               bqkv_ref, b1_ref, vecE_ref,
               lnf_ref, wout_ref, bout_ref,
               out_ref, act_ref, bias_ref):
        d = pl.program_id(1)
        n_layers = pl.num_programs(1)

        # ---- once per batch block: load embeddings + build additive attention-mask bias ----
        @pl.when(d == 0)
        def _():
            act_ref[...] = e_ref[...]
            diag_bias = jnp.where(
                lax.broadcasted_iota(jnp.int32, (L, L), 0)
                == lax.broadcasted_iota(jnp.int32, (L, L), 1),
                NEG_INF, 0.0)
            for i in range(Bt):
                pq = padq_ref[i] > 0.5                      # (L, 1) padded query
                pk = padk_ref[i] > 0.5                      # (1, L) padded key
                bias_ref[i] = jnp.where(pq | pk, NEG_INF, diag_bias)

        x = act_ref[...] + pos_ref[...]                     # (Bt*L, E): e += pos_enc each block
        xb = x.astype(jnp.bfloat16)

        # ---- fused QKV: one (Bt*L,E)@(E,3E) matmul (1/sqrt(Dh) folded into Wq) ----
        qkv = jnp.dot(xb, wqkv_ref[0],
                      preferred_element_type=jnp.float32) + bqkv_ref[0]   # (Bt*L, 3E)
        qkvb = qkv.astype(jnp.bfloat16)

        # ---- attention: per sequence / per head via static lane slices ----
        ctx_rows = []
        for i in range(Bt):
            bias_i = bias_ref[i]                            # (L, L) additive 0 / -1e9
            r0, r1 = i * L, (i + 1) * L
            head_ctx = []
            for h in range(H):
                c0, c1 = h * Dh, (h + 1) * Dh
                qh = qkvb[r0:r1, c0:c1]                     # (L, Dh)
                kh = qkvb[r0:r1, E + c0:E + c1]
                vh = qkvb[r0:r1, 2 * E + c0:2 * E + c1]
                s = lax.dot_general(qh, kh, (((1,), (1,)), ((), ())),
                                    preferred_element_type=jnp.float32) + bias_i
                s = s - jnp.max(s, axis=-1, keepdims=True)
                p = jnp.exp(s)
                p = p * pl.reciprocal(jnp.sum(p, axis=-1, keepdims=True), approx=True)
                head_ctx.append(jnp.dot(p.astype(jnp.bfloat16), vh,
                                        preferred_element_type=jnp.float32))
            ctx_rows.append(jnp.concatenate(head_ctx, axis=-1))            # (L, E)
        ctx = jnp.concatenate(ctx_rows, axis=0)                            # (Bt*L, E)

        # ---- output projection: single (Bt*L,E)@(E,E) matmul ----
        vec = vecE_ref[0]                                   # (6, E): bo,ln1_g,ln1_b,b2,ln2_g,ln2_b
        bo, ln1_g, ln1_b = vec[0:1, :], vec[1:2, :], vec[2:3, :]
        b2, ln2_g, ln2_b = vec[3:4, :], vec[4:5, :], vec[5:6, :]

        attn = jnp.dot(ctx.astype(jnp.bfloat16), wo_ref[0],
                       preferred_element_type=jnp.float32) + bo

        x1 = _layer_norm(x + attn, ln1_g, ln1_b)
        x1b = x1.astype(jnp.bfloat16)

        # ---- FFN, chunked over Fh to bound the (Bt*L, Fh) intermediate ----
        b1 = b1_ref[0]                                      # (1, Fh)
        h2 = None
        for c in range(n_ch):
            f0, f1 = c * fh_chunk, (c + 1) * fh_chunk
            h1c = jnp.maximum(
                jnp.dot(x1b, w1_ref[0, :, f0:f1],
                        preferred_element_type=jnp.float32) + b1[:, f0:f1], 0.0)
            pc = jnp.dot(h1c.astype(jnp.bfloat16), w2_ref[0, f0:f1, :],
                         preferred_element_type=jnp.float32)
            h2 = pc if h2 is None else h2 + pc

        x2 = _layer_norm(x1 + h2 + b2, ln2_g, ln2_b)
        x2 = jnp.where(padqf_ref[...] > 0.5, 0.0, x2)       # zero padded rows
        act_ref[...] = x2                                   # carry to next layer in VMEM

        # ---- fused head at last layer: final LN + unmasked mean over L + output Linear ----
        @pl.when(d == n_layers - 1)
        def _():
            xn = _layer_norm(act_ref[...], lnf_ref[0:1, :], lnf_ref[1:2, :])
            rows = [jnp.mean(xn[i * L:(i + 1) * L, :], axis=0, keepdims=True)
                    for i in range(Bt)]
            m = jnp.concatenate(rows, axis=0)               # (Bt, E)
            out_ref[...] = (jnp.dot(m.astype(jnp.bfloat16), wout_ref[...],
                                    preferred_element_type=jnp.float32) + bout_ref[...])

    return kernel


# --------------------------------------------------------------------------------------
# Plain-JAX glue: embedding gather + random-walk positional encoding, then one pallas_call.
# --------------------------------------------------------------------------------------
def random_walk_pe(adj, k):
    deg = jnp.sum(adj, axis=-1, keepdims=True)
    P = adj / jnp.maximum(deg, 1.0)
    diags = []
    M = P
    for _ in range(k):
        diags.append(jnp.diagonal(M, axis1=-2, axis2=-1))               # (B, L)
        M = jnp.matmul(M, P)
    return jnp.stack(diags, axis=-1)                                    # (B, L, k)


def _pick_batch_block(B, L, target_rows=256):
    want = max(1, min(B, max(1, target_rows // max(L, 1))))
    for bt in range(want, 0, -1):
        if B % bt == 0:
            return bt
    return 1


def transformer_forward(params, tokens, padding, adj, num_heads):
    B, L = tokens.shape
    E = params["embed"].shape[1]
    D = params["wqkv"].shape[0]
    Fh = params["w1"].shape[2]
    H = num_heads
    Dh = E // H
    Fpad = params["out_w"].shape[1]
    F = params["out_features"]

    Bt = _pick_batch_block(B, L)                            # sequences per grid step
    Bb = B // Bt
    fh_chunk = 512 if Fh % 512 == 0 else Fh

    e = jnp.take(params["embed"], tokens, axis=0).reshape(B * L, E)
    rw = random_walk_pe(adj.astype(jnp.float32), params["pe_w"].shape[0])
    pos = (jnp.matmul(rw, params["pe_w"]) + params["pe_b"]).reshape(B * L, E)

    padf = padding.astype(jnp.float32)
    padk = padf[:, None, :]                                 # (B, 1, L)
    padq = padf[:, :, None]                                 # (B, L, 1)
    padqf = padf.reshape(B * L, 1)                          # (B*L, 1)

    batch2 = lambda b, d: (b, 0)
    batch3 = lambda b, d: (b, 0, 0)
    layer3 = lambda b, d: (d, 0, 0)
    shared2 = lambda b, d: (0, 0)

    in_specs = [
        pl.BlockSpec((Bt * L, E), batch2),                  # embeddings (flat)
        pl.BlockSpec((Bt * L, E), batch2),                  # pos_enc (flat)
        pl.BlockSpec((Bt, 1, L), batch3),                   # padding, key view
        pl.BlockSpec((Bt, L, 1), batch3),                   # padding, query view
        pl.BlockSpec((Bt * L, 1), batch2),                  # padding, flat row view
        pl.BlockSpec((1, E, 3 * E), layer3),                # Wqkv (fused, q pre-scaled)
        pl.BlockSpec((1, E, E), layer3),                    # Wo
        pl.BlockSpec((1, E, Fh), layer3),                   # W1
        pl.BlockSpec((1, Fh, E), layer3),                   # W2
        pl.BlockSpec((1, 1, 3 * E), layer3),                # bqkv
        pl.BlockSpec((1, 1, Fh), layer3),                   # b1
        pl.BlockSpec((1, 6, E), layer3),                    # packed: bo,ln1_g,ln1_b,b2,ln2_g,ln2_b
        pl.BlockSpec((2, E), shared2),                      # final LN gamma/beta
        pl.BlockSpec((E, Fpad), shared2),                   # out_w (lane-padded to 128)
        pl.BlockSpec((1, Fpad), shared2),                   # out_b
    ]

    grid_spec = pltpu.PrefetchScalarGridSpec(
        num_scalar_prefetch=0,
        grid=(Bb, D),                                       # batch blocks (parallel), layers (seq)
        in_specs=in_specs,
        out_specs=pl.BlockSpec((Bt, Fpad), batch2),
        scratch_shapes=[pltpu.VMEM((Bt * L, E), jnp.float32),   # activation carried across layers
                        pltpu.VMEM((Bt, L, L), jnp.float32)],   # additive attention-mask bias
    )

    kernel = _make_kernel(Bt, L, E, H, Dh, Fh, fh_chunk)

    out = pl.pallas_call(
        kernel,
        out_shape=jax.ShapeDtypeStruct((B, Fpad), jnp.float32),
        grid_spec=grid_spec,
        compiler_params=pltpu.CompilerParams(
            dimension_semantics=("parallel", "arbitrary"),
            vmem_limit_bytes=64 * 1024 * 1024),
    )(e, pos, padk, padq, padqf,
      params["wqkv"], params["wo"], params["w1"], params["w2"],
      params["bqkv"], params["b1"], params["vecE"],
      params["lnf"], params["out_w"], params["out_b"])
    return out[:, :F]


def init_params(key, n_tokens, out_features, E, H, D, k_pe=8):
    Dh = E // H
    Fh = 4 * E
    Fpad = ((out_features + 127) // 128) * 128
    s = 0.1
    keys = jax.random.split(key, 9)

    embed = s * jax.random.normal(keys[0], (n_tokens, E), jnp.float32)
    embed = embed.at[0].set(0.0)                                        # padding_idx=0

    wq = s * jax.random.normal(keys[1], (D, E, E), jnp.float32)
    wk = s * jax.random.normal(keys[2], (D, E, E), jnp.float32)
    wv = s * jax.random.normal(keys[3], (D, E, E), jnp.float32)
    wo = s * jax.random.normal(keys[4], (D, E, E), jnp.float32)
    w1 = s * jax.random.normal(keys[5], (D, E, Fh), jnp.float32)
    w2 = s * jax.random.normal(keys[6], (D, Fh, E), jnp.float32)
    out_w = s * jax.random.normal(keys[7], (E, out_features), jnp.float32)
    pe_w = s * jax.random.normal(keys[8], (k_pe, E), jnp.float32)

    scale = 1.0 / math.sqrt(Dh)
    wqkv = jnp.concatenate([wq * scale, wk, wv], axis=-1)               # scale folded into Wq

    vecE = jnp.zeros((D, 6, E), jnp.float32)                            # bo,ln1_g,ln1_b,b2,ln2_g,ln2_b
    vecE = vecE.at[:, 1, :].set(1.0)                                    # ln1 gamma
    vecE = vecE.at[:, 4, :].set(1.0)                                    # ln2 gamma

    lnf = jnp.concatenate([jnp.ones((1, E), jnp.float32),
                           jnp.zeros((1, E), jnp.float32)], axis=0)

    out_w_pad = jnp.zeros((E, Fpad), jnp.float32).at[:, :out_features].set(out_w)

    return {
        "out_features": out_features,
        "embed": embed,
        "pe_w": pe_w,
        "pe_b": jnp.zeros((1, E), jnp.float32),
        "wqkv": wqkv.astype(jnp.bfloat16),
        "bqkv": jnp.zeros((D, 1, 3 * E), jnp.float32),                  # q part also scale-folded
        "wo": wo.astype(jnp.bfloat16),
        "w1": w1.astype(jnp.bfloat16),
        "b1": jnp.zeros((D, 1, Fh), jnp.float32),
        "w2": w2.astype(jnp.bfloat16),
        "vecE": vecE,
        "lnf": lnf,
        "out_w": out_w_pad.astype(jnp.bfloat16),
        "out_b": jnp.zeros((1, Fpad), jnp.float32),
    }


if __name__ == "__main__":
    B, L = 2, 8
    n_tokens, out_features, E, H, D = 20, 16, 32, 4, 2

    key = jax.random.PRNGKey(0)
    k_tok, k_adj, k_par = jax.random.split(key, 3)

    # padding: last couple of positions per sequence are padded
    valid_len = jnp.array([6, 5], dtype=jnp.int32)
    padding = jnp.arange(L)[None, :] >= valid_len[:, None]              # (B, L) bool

    tokens = jax.random.randint(k_tok, (B, L), 1, n_tokens, dtype=jnp.int32)
    tokens = jnp.where(padding, 0, tokens)                              # padded tokens -> idx 0

    a = (jax.random.uniform(k_adj, (B, L, L)) > 0.5).astype(jnp.float32)
    adj = jnp.maximum(a, jnp.swapaxes(a, -1, -2))                       # symmetric adjacency
    adj = adj * (1.0 - jnp.eye(L)[None])                                # no self loops

    params = init_params(k_par, n_tokens, out_features, E, H, D, k_pe=8)

    out = transformer_forward(params, tokens, padding, adj, num_heads=H)
    out = jax.block_until_ready(out)

    assert out.shape == (B, out_features)
    assert bool(jnp.all(jnp.isfinite(out)))
    print("KERNEL_OK")
</pallas_src>

<mosaic_0001>
module attributes {stable_mosaic.version = 11 : i64} {
  func.func @kernel(%arg0: i32, %arg1: i32, %arg2: memref<16x32xf32, #tpu.memory_space<vmem>>, %arg3: memref<16x32xf32, #tpu.memory_space<vmem>>, %arg4: memref<2x1x8xf32, #tpu.memory_space<vmem>>, %arg5: memref<2x8x1xf32, #tpu.memory_space<vmem>>, %arg6: memref<16x1xf32, #tpu.memory_space<vmem>>, %arg7: memref<1x32x96xbf16, #tpu.memory_space<vmem>>, %arg8: memref<1x32x32xbf16, #tpu.memory_space<vmem>>, %arg9: memref<1x32x128xbf16, #tpu.memory_space<vmem>>, %arg10: memref<1x128x32xbf16, #tpu.memory_space<vmem>>, %arg11: memref<1x1x96xf32, #tpu.memory_space<vmem>>, %arg12: memref<1x1x128xf32, #tpu.memory_space<vmem>>, %arg13: memref<1x6x32xf32, #tpu.memory_space<vmem>>, %arg14: memref<2x32xf32, #tpu.memory_space<vmem>>, %arg15: memref<32x128xbf16, #tpu.memory_space<vmem>>, %arg16: memref<1x128xf32, #tpu.memory_space<vmem>>, %arg17: memref<2x128xf32, #tpu.memory_space<vmem>>, %arg18: memref<16x32xf32, #tpu.memory_space<vmem>>, %arg19: memref<2x8x8xf32, #tpu.memory_space<vmem>>) attributes {dimension_semantics = [#tpu.dimension_semantics<parallel>, #tpu.dimension_semantics<arbitrary>], iteration_bounds = array<i64: 1, 2>, scalar_prefetch = 0 : i64, scratch_operands = 2 : i64, tpu.core_type = #tpu.core_type<tc>, window_params = [{transform_indices = @transform_0, window_bounds = array<i64: 16, 32>}, {transform_indices = @transform_1, window_bounds = array<i64: 16, 32>}, {transform_indices = @transform_2, window_bounds = array<i64: 2, 1, 8>}, {transform_indices = @transform_3, window_bounds = array<i64: 2, 8, 1>}, {transform_indices = @transform_4, window_bounds = array<i64: 16, 1>}, {transform_indices = @transform_5, window_bounds = array<i64: 1, 32, 96>}, {transform_indices = @transform_6, window_bounds = array<i64: 1, 32, 32>}, {transform_indices = @transform_7, window_bounds = array<i64: 1, 32, 128>}, {transform_indices = @transform_8, window_bounds = array<i64: 1, 128, 32>}, {transform_indices = @transform_9, window_bounds = array<i64: 1, 1, 96>}, {transform_indices = @transform_10, window_bounds = array<i64: 1, 1, 128>}, {transform_indices = @transform_11, window_bounds = array<i64: 1, 6, 32>}, {pipeline_mode = #tpu.pipeline_mode<synchronous>, transform_indices = @transform_12, window_bounds = array<i64: 2, 32>}, {pipeline_mode = #tpu.pipeline_mode<synchronous>, transform_indices = @transform_13, window_bounds = array<i64: 32, 128>}, {pipeline_mode = #tpu.pipeline_mode<synchronous>, transform_indices = @transform_14, window_bounds = array<i64: 1, 128>}, {transform_indices = @transform_15, window_bounds = array<i64: 2, 128>}]} {
    %c0_i32 = arith.constant 0 : i32
    %0 = arith.cmpi eq, %arg1, %c0_i32 : i32
    %1 = arith.extui %0 : i1 to i32
    %c0_i32_0 = arith.constant 0 : i32
    %2 = arith.cmpi ne, %1, %c0_i32_0 : i32
    scf.if %2 {
      %c0_83 = arith.constant 0 : index
      %c0_84 = arith.constant 0 : index
      %245 = vector.load %arg2[%c0_83, %c0_84] : memref<16x32xf32, #tpu.memory_space<vmem>>, vector<16x32xf32>
      %c0_85 = arith.constant 0 : index
      %c0_86 = arith.constant 0 : index
      %246 = vector.load %arg18[%c0_85, %c0_86] : memref<16x32xf32, #tpu.memory_space<vmem>>, vector<16x32xf32>
      tpu.vector_store %arg18[%c0_85, %c0_86], %245 {strides = array<i32>} : memref<16x32xf32, #tpu.memory_space<vmem>>, vector<16x32xf32>,
      %247 = tpu.iota {dimensions = array<i32: 0>} : vector<8x8xi32>
      %248 = tpu.iota {dimensions = array<i32: 1>} : vector<8x8xi32>
      %249 = arith.cmpi eq, %247, %248 : vector<8x8xi32>
      %cst_87 = arith.constant -1.000000e+09 : f32
      %cst_88 = arith.constant 0.000000e+00 : f32
      %250 = vector.broadcast %cst_87 : f32 to vector<8x8xf32>
      %251 = vector.broadcast %cst_88 : f32 to vector<8x8xf32>
      %252 = arith.select %249, %250, %251 : vector<8x8xi1>, vector<8x8xf32>
      %c0_89 = arith.constant 0 : index
      %c0_90 = arith.constant 0 : index
      %c0_91 = arith.constant 0 : index
      %253 = vector.load %arg5[%c0_89, %c0_90, %c0_91] : memref<2x8x1xf32, #tpu.memory_space<vmem>>, vector<1x8x1xf32>
      %254 = vector.shape_cast %253 : vector<1x8x1xf32> to vector<8x1xf32>
      %cst_92 = arith.constant 5.000000e-01 : f32
      %255 = vector.broadcast %cst_92 : f32 to vector<8x1xf32>
      %256 = arith.cmpf ogt, %254, %255 : vector<8x1xf32>
      %c0_93 = arith.constant 0 : index
      %c0_94 = arith.constant 0 : index
      %c0_95 = arith.constant 0 : index
      %257 = vector.load %arg4[%c0_93, %c0_94, %c0_95] : memref<2x1x8xf32, #tpu.memory_space<vmem>>, vector<1x1x8xf32>
      %258 = vector.shape_cast %257 : vector<1x1x8xf32> to vector<1x8xf32>
      %cst_96 = arith.constant 5.000000e-01 : f32
      %259 = vector.broadcast %cst_96 : f32 to vector<1x8xf32>
      %260 = arith.cmpf ogt, %258, %259 : vector<1x8xf32>
      %261 = vector.broadcast %256 : vector<8x1xi1> to vector<8x8xi1>
      %262 = vector.broadcast %260 : vector<1x8xi1> to vector<8x8xi1>
      %263 = arith.ori %261, %262 : vector<8x8xi1>
      %cst_97 = arith.constant -1.000000e+09 : f32
      %264 = vector.broadcast %cst_97 : f32 to vector<8x8xf32>
      %265 = arith.select %263, %264, %252 : vector<8x8xi1>, vector<8x8xf32>
      %c0_98 = arith.constant 0 : index
      %c0_99 = arith.constant 0 : index
      %c0_100 = arith.constant 0 : index
      %266 = vector.load %arg19[%c0_98, %c0_99, %c0_100] : memref<2x8x8xf32, #tpu.memory_space<vmem>>, vector<1x8x8xf32>
      %267 = vector.shape_cast %266 : vector<1x8x8xf32> to vector<8x8xf32>
      %268 = vector.shape_cast %265 : vector<8x8xf32> to vector<1x8x8xf32>
      tpu.vector_store %arg19[%c0_98, %c0_99, %c0_100], %268 {strides = array<i32>} : memref<2x8x8xf32, #tpu.memory_space<vmem>>, vector<1x8x8xf32>,
      %c1_101 = arith.constant 1 : index
      %c0_102 = arith.constant 0 : index
      %c0_103 = arith.constant 0 : index
      %269 = vector.load %arg5[%c1_101, %c0_102, %c0_103] : memref<2x8x1xf32, #tpu.memory_space<vmem>>, vector<1x8x1xf32>
      %270 = vector.shape_cast %269 : vector<1x8x1xf32> to vector<8x1xf32>
      %cst_104 = arith.constant 5.000000e-01 : f32
      %271 = vector.broadcast %cst_104 : f32 to vector<8x1xf32>
      %272 = arith.cmpf ogt, %270, %271 : vector<8x1xf32>
      %c1_105 = arith.constant 1 : index
      %c0_106 = arith.constant 0 : index
      %c0_107 = arith.constant 0 : index
      %273 = vector.load %arg4[%c1_105, %c0_106, %c0_107] : memref<2x1x8xf32, #tpu.memory_space<vmem>>, vector<1x1x8xf32>
      %274 = vector.shape_cast %273 : vector<1x1x8xf32> to vector<1x8xf32>
      %cst_108 = arith.constant 5.000000e-01 : f32
      %275 = vector.broadcast %cst_108 : f32 to vector<1x8xf32>
      %276 = arith.cmpf ogt, %274, %275 : vector<1x8xf32>
      %277 = vector.broadcast %272 : vector<8x1xi1> to vector<8x8xi1>
      %278 = vector.broadcast %276 : vector<1x8xi1> to vector<8x8xi1>
      %279 = arith.ori %277, %278 : vector<8x8xi1>
      %cst_109 = arith.constant -1.000000e+09 : f32
      %280 = vector.broadcast %cst_109 : f32 to vector<8x8xf32>
      %281 = arith.select %279, %280, %252 : vector<8x8xi1>, vector<8x8xf32>
      %c1_110 = arith.constant 1 : index
      %c0_111 = arith.constant 0 : index
      %c0_112 = arith.constant 0 : index
      %282 = vector.load %arg19[%c1_110, %c0_111, %c0_112] : memref<2x8x8xf32, #tpu.memory_space<vmem>>, vector<1x8x8xf32>
      %283 = vector.shape_cast %282 : vector<1x8x8xf32> to vector<8x8xf32>
      %284 = vector.shape_cast %281 : vector<8x8xf32> to vector<1x8x8xf32>
      tpu.vector_store %arg19[%c1_110, %c0_111, %c0_112], %284 {strides = array<i32>} : memref<2x8x8xf32, #tpu.memory_space<vmem>>, vector<1x8x8xf32>,
    } else {
    }
    %c0 = arith.constant 0 : index
    %c0_1 = arith.constant 0 : index
    %3 = vector.load %arg18[%c0, %c0_1] : memref<16x32xf32, #tpu.memory_space<vmem>>, vector<16x32xf32>
    %c0_2 = arith.constant 0 : index
    %c0_3 = arith.constant 0 : index
    %4 = vector.load %arg3[%c0_2, %c0_3] : memref<16x32xf32, #tpu.memory_space<vmem>>, vector<16x32xf32>
    %5 = arith.addf %3, %4 : vector<16x32xf32>
    %6 = arith.truncf %5 : vector<16x32xf32> to vector<16x32xbf16>
    %c0_4 = arith.constant 0 : index
    %c0_5 = arith.constant 0 : index
    %c0_6 = arith.constant 0 : index
    %7 = vector.load %arg7[%c0_4, %c0_5, %c0_6] : memref<1x32x96xbf16, #tpu.memory_space<vmem>>, vector<1x32x96xbf16>
    %8 = vector.shape_cast %7 : vector<1x32x96xbf16> to vector<32x96xbf16>
    %cst = arith.constant dense<0.000000e+00> : vector<16x96xf32>
    %9 = tpu.matmul %6, %8, %cst {dimension_numbers = #tpu.dot_dimension_numbers<[1], [0], [0], [1], [0, 0, 1, 1], [], []>} : vector<16x32xbf16>, vector<32x96xbf16>, vector<16x96xf32> -> vector<16x96xf32>
    %c0_7 = arith.constant 0 : index
    %c0_8 = arith.constant 0 : index
    %c0_9 = arith.constant 0 : index
    %10 = vector.load %arg11[%c0_7, %c0_8, %c0_9] : memref<1x1x96xf32, #tpu.memory_space<vmem>>, vector<1x1x96xf32>
    %11 = vector.shape_cast %10 : vector<1x1x96xf32> to vector<1x96xf32>
    %12 = vector.broadcast %11 : vector<1x96xf32> to vector<16x96xf32>
    %13 = arith.addf %9, %12 : vector<16x96xf32>
    %14 = arith.truncf %13 : vector<16x96xf32> to vector<16x96xbf16>
    %c0_10 = arith.constant 0 : index
    %c0_11 = arith.constant 0 : index
    %c0_12 = arith.constant 0 : index
    %15 = vector.load %arg19[%c0_10, %c0_11, %c0_12] : memref<2x8x8xf32, #tpu.memory_space<vmem>>, vector<1x8x8xf32>
    %16 = vector.shape_cast %15 : vector<1x8x8xf32> to vector<8x8xf32>
    %17 = vector.extract_strided_slice %14 {offsets = [0, 0], sizes = [8, 8], strides = [1, 1]} : vector<16x96xbf16> to vector<8x8xbf16>
    %18 = vector.extract_strided_slice %14 {offsets = [0, 32], sizes = [8, 8], strides = [1, 1]} : vector<16x96xbf16> to vector<8x8xbf16>
    %19 = vector.extract_strided_slice %14 {offsets = [0, 64], sizes = [8, 8], strides = [1, 1]} : vector<16x96xbf16> to vector<8x8xbf16>
    %cst_13 = arith.constant dense<0.000000e+00> : vector<8x8xf32>
    %20 = tpu.matmul %17, %18, %cst_13 {dimension_numbers = #tpu.dot_dimension_numbers<[1], [1], [0], [0], [0, 0, 1, 0], [], []>} : vector<8x8xbf16>, vector<8x8xbf16>, vector<8x8xf32> -> vector<8x8xf32>
    %21 = arith.addf %20, %16 : vector<8x8xf32>
    %cst_14 = arith.constant dense<0xFF800000> : vector<8xf32>
    %22 = vector.multi_reduction <maximumf>, %21, %cst_14 [1] : vector<8x8xf32> to vector<8xf32>
    %23 = vector.shape_cast %22 : vector<8xf32> to vector<8x1xf32>
    %24 = vector.broadcast %23 : vector<8x1xf32> to vector<8x8xf32>
    %25 = arith.subf %21, %24 : vector<8x8xf32>
    %26 = math.exp %25 : vector<8x8xf32>
    %cst_15 = arith.constant dense<0.000000e+00> : vector<8xf32>
    %27 = vector.multi_reduction <add>, %26, %cst_15 [1] : vector<8x8xf32> to vector<8xf32>
    %28 = vector.shape_cast %27 : vector<8xf32> to vector<8x1xf32>
    %29 = tpu.reciprocal %28 {approx = true} : vector<8x1xf32> -> vector<8x1xf32>
    %30 = vector.broadcast %29 : vector<8x1xf32> to vector<8x8xf32>
    %31 = arith.mulf %26, %30 : vector<8x8xf32>
    %32 = arith.truncf %31 : vector<8x8xf32> to vector<8x8xbf16>
    %cst_16 = arith.constant dense<0.000000e+00> : vector<8x8xf32>
    %33 = tpu.matmul %32, %19, %cst_16 {dimension_numbers = #tpu.dot_dimension_numbers<[1], [0], [0], [1], [0, 0, 1, 1], [], []>} : vector<8x8xbf16>, vector<8x8xbf16>, vector<8x8xf32> -> vector<8x8xf32>
    %34 = vector.extract_strided_slice %14 {offsets = [0, 8], sizes = [8, 8], strides = [1, 1]} : vector<16x96xbf16> to vector<8x8xbf16>
    %35 = vector.extract_strided_slice %14 {offsets = [0, 40], sizes = [8, 8], strides = [1, 1]} : vector<16x96xbf16> to vector<8x8xbf16>
    %36 = vector.extract_strided_slice %14 {offsets = [0, 72], sizes = [8, 8], strides = [1, 1]} : vector<16x96xbf16> to vector<8x8xbf16>
    %cst_17 = arith.constant dense<0.000000e+00> : vector<8x8xf32>
    %37 = tpu.matmul %34, %35, %cst_17 {dimension_numbers = #tpu.dot_dimension_numbers<[1], [1], [0], [0], [0, 0, 1, 0], [], []>} : vector<8x8xbf16>, vector<8x8xbf16>, vector<8x8xf32> -> vector<8x8xf32>
    %38 = arith.addf %37, %16 : vector<8x8xf32>
    %cst_18 = arith.constant dense<0xFF800000> : vector<8xf32>
    %39 = vector.multi_reduction <maximumf>, %38, %cst_18 [1] : vector<8x8xf32> to vector<8xf32>
    %40 = vector.shape_cast %39 : vector<8xf32> to vector<8x1xf32>
    %41 = vector.broadcast %40 : vector<8x1xf32> to vector<8x8xf32>
    %42 = arith.subf %38, %41 : vector<8x8xf32>
    %43 = math.exp %42 : vector<8x8xf32>
    %cst_19 = arith.constant dense<0.000000e+00> : vector<8xf32>
    %44 = vector.multi_reduction <add>, %43, %cst_19 [1] : vector<8x8xf32> to vector<8xf32>
    %45 = vector.shape_cast %44 : vector<8xf32> to vector<8x1xf32>
    %46 = tpu.reciprocal %45 {approx = true} : vector<8x1xf32> -> vector<8x1xf32>
    %47 = vector.broadcast %46 : vector<8x1xf32> to vector<8x8xf32>
    %48 = arith.mulf %43, %47 : vector<8x8xf32>
    %49 = arith.truncf %48 : vector<8x8xf32> to vector<8x8xbf16>
    %cst_20 = arith.constant dense<0.000000e+00> : vector<8x8xf32>
    %50 = tpu.matmul %49, %36, %cst_20 {dimension_numbers = #tpu.dot_dimension_numbers<[1], [0], [0], [1], [0, 0, 1, 1], [], []>} : vector<8x8xbf16>, vector<8x8xbf16>, vector<8x8xf32> -> vector<8x8xf32>
    %51 = vector.extract_strided_slice %14 {offsets = [0, 16], sizes = [8, 8], strides = [1, 1]} : vector<16x96xbf16> to vector<8x8xbf16>
    %52 = vector.extract_strided_slice %14 {offsets = [0, 48], sizes = [8, 8], strides = [1, 1]} : vector<16x96xbf16> to vector<8x8xbf16>
    %53 = vector.extract_strided_slice %14 {offsets = [0, 80], sizes = [8, 8], strides = [1, 1]} : vector<16x96xbf16> to vector<8x8xbf16>
    %cst_21 = arith.constant dense<0.000000e+00> : vector<8x8xf32>
    %54 = tpu.matmul %51, %52, %cst_21 {dimension_numbers = #tpu.dot_dimension_numbers<[1], [1], [0], [0], [0, 0, 1, 0], [], []>} : vector<8x8xbf16>, vector<8x8xbf16>, vector<8x8xf32> -> vector<8x8xf32>
    %55 = arith.addf %54, %16 : vector<8x8xf32>
    %cst_22 = arith.constant dense<0xFF800000> : vector<8xf32>
    %56 = vector.multi_reduction <maximumf>, %55, %cst_22 [1] : vector<8x8xf32> to vector<8xf32>
    %57 = vector.shape_cast %56 : vector<8xf32> to vector<8x1xf32>
    %58 = vector.broadcast %57 : vector<8x1xf32> to vector<8x8xf32>
    %59 = arith.subf %55, %58 : vector<8x8xf32>
    %60 = math.exp %59 : vector<8x8xf32>
    %cst_23 = arith.constant dense<0.000000e+00> : vector<8xf32>
    %61 = vector.multi_reduction <add>, %60, %cst_23 [1] : vector<8x8xf32> to vector<8xf32>
    %62 = vector.shape_cast %61 : vector<8xf32> to vector<8x1xf32>
    %63 = tpu.reciprocal %62 {approx = true} : vector<8x1xf32> -> vector<8x1xf32>
    %64 = vector.broadcast %63 : vector<8x1xf32> to vector<8x8xf32>
    %65 = arith.mulf %60, %64 : vector<8x8xf32>
    %66 = arith.truncf %65 : vector<8x8xf32> to vector<8x8xbf16>
    %cst_24 = arith.constant dense<0.000000e+00> : vector<8x8xf32>
    %67 = tpu.matmul %66, %53, %cst_24 {dimension_numbers = #tpu.dot_dimension_numbers<[1], [0], [0], [1], [0, 0, 1, 1], [], []>} : vector<8x8xbf16>, vector<8x8xbf16>, vector<8x8xf32> -> vector<8x8xf32>
    %68 = vector.extract_strided_slice %14 {offsets = [0, 24], sizes = [8, 8], strides = [1, 1]} : vector<16x96xbf16> to vector<8x8xbf16>
    %69 = vector.extract_strided_slice %14 {offsets = [0, 56], sizes = [8, 8], strides = [1, 1]} : vector<16x96xbf16> to vector<8x8xbf16>
    %70 = vector.extract_strided_slice %14 {offsets = [0, 88], sizes = [8, 8], strides = [1, 1]} : vector<16x96xbf16> to vector<8x8xbf16>
    %cst_25 = arith.constant dense<0.000000e+00> : vector<8x8xf32>
    %71 = tpu.matmul %68, %69, %cst_25 {dimension_numbers = #tpu.dot_dimension_numbers<[1], [1], [0], [0], [0, 0, 1, 0], [], []>} : vector<8x8xbf16>, vector<8x8xbf16>, vector<8x8xf32> -> vector<8x8xf32>
    %72 = arith.addf %71, %16 : vector<8x8xf32>
    %cst_26 = arith.constant dense<0xFF800000> : vector<8xf32>
    %73 = vector.multi_reduction <maximumf>, %72, %cst_26 [1] : vector<8x8xf32> to vector<8xf32>
    %74 = vector.shape_cast %73 : vector<8xf32> to vector<8x1xf32>
    %75 = vector.broadcast %74 : vector<8x1xf32> to vector<8x8xf32>
    %76 = arith.subf %72, %75 : vector<8x8xf32>
    %77 = math.exp %76 : vector<8x8xf32>
    %cst_27 = arith.constant dense<0.000000e+00> : vector<8xf32>
    %78 = vector.multi_reduction <add>, %77, %cst_27 [1] : vector<8x8xf32> to vector<8xf32>
    %79 = vector.shape_cast %78 : vector<8xf32> to vector<8x1xf32>
    %80 = tpu.reciprocal %79 {approx = true} : vector<8x1xf32> -> vector<8x1xf32>
    %81 = vector.broadcast %80 : vector<8x1xf32> to vector<8x8xf32>
    %82 = arith.mulf %77, %81 : vector<8x8xf32>
    %83 = arith.truncf %82 : vector<8x8xf32> to vector<8x8xbf16>
    %cst_28 = arith.constant dense<0.000000e+00> : vector<8x8xf32>
    %84 = tpu.matmul %83, %70, %cst_28 {dimension_numbers = #tpu.dot_dimension_numbers<[1], [0], [0], [1], [0, 0, 1, 1], [], []>} : vector<8x8xbf16>, vector<8x8xbf16>, vector<8x8xf32> -> vector<8x8xf32>
    %85 = tpu.concatenate %33, %50, %67, %84 in 1 : vector<8x8xf32>, vector<8x8xf32>, vector<8x8xf32>, vector<8x8xf32> -> vector<8x32xf32>
    %c1 = arith.constant 1 : index
    %c0_29 = arith.constant 0 : index
    %c0_30 = arith.constant 0 : index
    %86 = vector.load %arg19[%c1, %c0_29, %c0_30] : memref<2x8x8xf32, #tpu.memory_space<vmem>>, vector<1x8x8xf32>
    %87 = vector.shape_cast %86 : vector<1x8x8xf32> to vector<8x8xf32>
    %88 = vector.extract_strided_slice %14 {offsets = [8, 0], sizes = [8, 8], strides = [1, 1]} : vector<16x96xbf16> to vector<8x8xbf16>
    %89 = vector.extract_strided_slice %14 {offsets = [8, 32], sizes = [8, 8], strides = [1, 1]} : vector<16x96xbf16> to vector<8x8xbf16>
    %90 = vector.extract_strided_slice %14 {offsets = [8, 64], sizes = [8, 8], strides = [1, 1]} : vector<16x96xbf16> to vector<8x8xbf16>
    %cst_31 = arith.constant dense<0.000000e+00> : vector<8x8xf32>
    %91 = tpu.matmul %88, %89, %cst_31 {dimension_numbers = #tpu.dot_dimension_numbers<[1], [1], [0], [0], [0, 0, 1, 0], [], []>} : vector<8x8xbf16>, vector<8x8xbf16>, vector<8x8xf32> -> vector<8x8xf32>
    %92 = arith.addf %91, %87 : vector<8x8xf32>
    %cst_32 = arith.constant dense<0xFF800000> : vector<8xf32>
    %93 = vector.multi_reduction <maximumf>, %92, %cst_32 [1] : vector<8x8xf32> to vector<8xf32>
    %94 = vector.shape_cast %93 : vector<8xf32> to vector<8x1xf32>
    %95 = vector.broadcast %94 : vector<8x1xf32> to vector<8x8xf32>
    %96 = arith.subf %92, %95 : vector<8x8xf32>
    %97 = math.exp %96 : vector<8x8xf32>
    %cst_33 = arith.constant dense<0.000000e+00> : vector<8xf32>
    %98 = vector.multi_reduction <add>, %97, %cst_33 [1] : vector<8x8xf32> to vector<8xf32>
    %99 = vector.shape_cast %98 : vector<8xf32> to vector<8x1xf32>
    %100 = tpu.reciprocal %99 {approx = true} : vector<8x1xf32> -> vector<8x1xf32>
    %101 = vector.broadcast %100 : vector<8x1xf32> to vector<8x8xf32>
    %102 = arith.mulf %97, %101 : vector<8x8xf32>
    %103 = arith.truncf %102 : vector<8x8xf32> to vector<8x8xbf16>
    %cst_34 = arith.constant dense<0.000000e+00> : vector<8x8xf32>
    %104 = tpu.matmul %103, %90, %cst_34 {dimension_numbers = #tpu.dot_dimension_numbers<[1], [0], [0], [1], [0, 0, 1, 1], [], []>} : vector<8x8xbf16>, vector<8x8xbf16>, vector<8x8xf32> -> vector<8x8xf32>
    %105 = vector.extract_strided_slice %14 {offsets = [8, 8], sizes = [8, 8], strides = [1, 1]} : vector<16x96xbf16> to vector<8x8xbf16>
    %106 = vector.extract_strided_slice %14 {offsets = [8, 40], sizes = [8, 8], strides = [1, 1]} : vector<16x96xbf16> to vector<8x8xbf16>
    %107 = vector.extract_strided_slice %14 {offsets = [8, 72], sizes = [8, 8], strides = [1, 1]} : vector<16x96xbf16> to vector<8x8xbf16>
    %cst_35 = arith.constant dense<0.000000e+00> : vector<8x8xf32>
    %108 = tpu.matmul %105, %106, %cst_35 {dimension_numbers = #tpu.dot_dimension_numbers<[1], [1], [0], [0], [0, 0, 1, 0], [], []>} : vector<8x8xbf16>, vector<8x8xbf16>, vector<8x8xf32> -> vector<8x8xf32>
    %109 = arith.addf %108, %87 : vector<8x8xf32>
    %cst_36 = arith.constant dense<0xFF800000> : vector<8xf32>
    %110 = vector.multi_reduction <maximumf>, %109, %cst_36 [1] : vector<8x8xf32> to vector<8xf32>
    %111 = vector.shape_cast %110 : vector<8xf32> to vector<8x1xf32>
    %112 = vector.broadcast %111 : vector<8x1xf32> to vector<8x8xf32>
    %113 = arith.subf %109, %112 : vector<8x8xf32>
    %114 = math.exp %113 : vector<8x8xf32>
    %cst_37 = arith.constant dense<0.000000e+00> : vector<8xf32>
    %115 = vector.multi_reduction <add>, %114, %cst_37 [1] : vector<8x8xf32> to vector<8xf32>
    %116 = vector.shape_cast %115 : vector<8xf32> to vector<8x1xf32>
    %117 = tpu.reciprocal %116 {approx = true} : vector<8x1xf32> -> vector<8x1xf32>
    %118 = vector.broadcast %117 : vector<8x1xf32> to vector<8x8xf32>
    %119 = arith.mulf %114, %118 : vector<8x8xf32>
    %120 = arith.truncf %119 : vector<8x8xf32> to vector<8x8xbf16>
    %cst_38 = arith.constant dense<0.000000e+00> : vector<8x8xf32>
    %121 = tpu.matmul %120, %107, %cst_38 {dimension_numbers = #tpu.dot_dimension_numbers<[1], [0], [0], [1], [0, 0, 1, 1], [], []>} : vector<8x8xbf16>, vector<8x8xbf16>, vector<8x8xf32> -> vector<8x8xf32>
    %122 = vector.extract_strided_slice %14 {offsets = [8, 16], sizes = [8, 8], strides = [1, 1]} : vector<16x96xbf16> to vector<8x8xbf16>
    %123 = vector.extract_strided_slice %14 {offsets = [8, 48], sizes = [8, 8], strides = [1, 1]} : vector<16x96xbf16> to vector<8x8xbf16>
    %124 = vector.extract_strided_slice %14 {offsets = [8, 80], sizes = [8, 8], strides = [1, 1]} : vector<16x96xbf16> to vector<8x8xbf16>
    %cst_39 = arith.constant dense<0.000000e+00> : vector<8x8xf32>
    %125 = tpu.matmul %122, %123, %cst_39 {dimension_numbers = #tpu.dot_dimension_numbers<[1], [1], [0], [0], [0, 0, 1, 0], [], []>} : vector<8x8xbf16>, vector<8x8xbf16>, vector<8x8xf32> -> vector<8x8xf32>
    %126 = arith.addf %125, %87 : vector<8x8xf32>
    %cst_40 = arith.constant dense<0xFF800000> : vector<8xf32>
    %127 = vector.multi_reduction <maximumf>, %126, %cst_40 [1] : vector<8x8xf32> to vector<8xf32>
    %128 = vector.shape_cast %127 : vector<8xf32> to vector<8x1xf32>
    %129 = vector.broadcast %128 : vector<8x1xf32> to vector<8x8xf32>
    %130 = arith.subf %126, %129 : vector<8x8xf32>
    %131 = math.exp %130 : vector<8x8xf32>
    %cst_41 = arith.constant dense<0.000000e+00> : vector<8xf32>
    %132 = vector.multi_reduction <add>, %131, %cst_41 [1] : vector<8x8xf32> to vector<8xf32>
    %133 = vector.shape_cast %132 : vector<8xf32> to vector<8x1xf32>
    %134 = tpu.reciprocal %133 {approx = true} : vector<8x1xf32> -> vector<8x1xf32>
    %135 = vector.broadcast %134 : vector<8x1xf32> to vector<8x8xf32>
    %136 = arith.mulf %131, %135 : vector<8x8xf32>
    %137 = arith.truncf %136 : vector<8x8xf32> to vector<8x8xbf16>
    %cst_42 = arith.constant dense<0.000000e+00> : vector<8x8xf32>
    %138 = tpu.matmul %137, %124, %cst_42 {dimension_numbers = #tpu.dot_dimension_numbers<[1], [0], [0], [1], [0, 0, 1, 1], [], []>} : vector<8x8xbf16>, vector<8x8xbf16>, vector<8x8xf32> -> vector<8x8xf32>
    %139 = vector.extract_strided_slice %14 {offsets = [8, 24], sizes = [8, 8], strides = [1, 1]} : vector<16x96xbf16> to vector<8x8xbf16>
    %140 = vector.extract_strided_slice %14 {offsets = [8, 56], sizes = [8, 8], strides = [1, 1]} : vector<16x96xbf16> to vector<8x8xbf16>
    %141 = vector.extract_strided_slice %14 {offsets = [8, 88], sizes = [8, 8], strides = [1, 1]} : vector<16x96xbf16> to vector<8x8xbf16>
    %cst_43 = arith.constant dense<0.000000e+00> : vector<8x8xf32>
    %142 = tpu.matmul %139, %140, %cst_43 {dimension_numbers = #tpu.dot_dimension_numbers<[1], [1], [0], [0], [0, 0, 1, 0], [], []>} : vector<8x8xbf16>, vector<8x8xbf16>, vector<8x8xf32> -> vector<8x8xf32>
    %143 = arith.addf %142, %87 : vector<8x8xf32>
    %cst_44 = arith.constant dense<0xFF800000> : vector<8xf32>
    %144 = vector.multi_reduction <maximumf>, %143, %cst_44 [1] : vector<8x8xf32> to vector<8xf32>
    %145 = vector.shape_cast %144 : vector<8xf32> to vector<8x1xf32>
    %146 = vector.broadcast %145 : vector<8x1xf32> to vector<8x8xf32>
    %147 = arith.subf %143, %146 : vector<8x8xf32>
    %148 = math.exp %147 : vector<8x8xf32>
    %cst_45 = arith.constant dense<0.000000e+00> : vector<8xf32>
    %149 = vector.multi_reduction <add>, %148, %cst_45 [1] : vector<8x8xf32> to vector<8xf32>
    %150 = vector.shape_cast %149 : vector<8xf32> to vector<8x1xf32>
    %151 = tpu.reciprocal %150 {approx = true} : vector<8x1xf32> -> vector<8x1xf32>
    %152 = vector.broadcast %151 : vector<8x1xf32> to vector<8x8xf32>
    %153 = arith.mulf %148, %152 : vector<8x8xf32>
    %154 = arith.truncf %153 : vector<8x8xf32> to vector<8x8xbf16>
    %cst_46 = arith.constant dense<0.000000e+00> : vector<8x8xf32>
    %155 = tpu.matmul %154, %141, %cst_46 {dimension_numbers = #tpu.dot_dimension_numbers<[1], [0], [0], [1], [0, 0, 1, 1], [], []>} : vector<8x8xbf16>, vector<8x8xbf16>, vector<8x8xf32> -> vector<8x8xf32>
    %156 = tpu.concatenate %104, %121, %138, %155 in 1 : vector<8x8xf32>, vector<8x8xf32>, vector<8x8xf32>, vector<8x8xf32> -> vector<8x32xf32>
    %157 = tpu.concatenate %85, %156 in 0 : vector<8x32xf32>, vector<8x32xf32> -> vector<16x32xf32>
    %c0_47 = arith.constant 0 : index
    %c0_48 = arith.constant 0 : index
    %c0_49 = arith.constant 0 : index
    %158 = vector.load %arg13[%c0_47, %c0_48, %c0_49] : memref<1x6x32xf32, #tpu.memory_space<vmem>>, vector<1x6x32xf32>
    %159 = vector.shape_cast %158 : vector<1x6x32xf32> to vector<6x32xf32>
    %160 = vector.extract_strided_slice %159 {offsets = [0, 0], sizes = [1, 32], strides = [1, 1]} : vector<6x32xf32> to vector<1x32xf32>
    %161 = vector.extract_strided_slice %159 {offsets = [1, 0], sizes = [1, 32], strides = [1, 1]} : vector<6x32xf32> to vector<1x32xf32>
    %162 = vector.extract_strided_slice %159 {offsets = [2, 0], sizes = [1, 32], strides = [1, 1]} : vector<6x32xf32> to vector<1x32xf32>
    %163 = vector.extract_strided_slice %159 {offsets = [3, 0], sizes = [1, 32], strides = [1, 1]} : vector<6x32xf32> to vector<1x32xf32>
    %164 = vector.extract_strided_slice %159 {offsets = [4, 0], sizes = [1, 32], strides = [1, 1]} : vector<6x32xf32> to vector<1x32xf32>
    %165 = vector.extract_strided_slice %159 {offsets = [5, 0], sizes = [1, 32], strides = [1, 1]} : vector<6x32xf32> to vector<1x32xf32>
    %166 = arith.truncf %157 : vector<16x32xf32> to vector<16x32xbf16>
    %c0_50 = arith.constant 0 : index
    %c0_51 = arith.constant 0 : index
    %c0_52 = arith.constant 0 : index
    %167 = vector.load %arg8[%c0_50, %c0_51, %c0_52] : memref<1x32x32xbf16, #tpu.memory_space<vmem>>, vector<1x32x32xbf16>
    %168 = vector.shape_cast %167 : vector<1x32x32xbf16> to vector<32x32xbf16>
    %cst_53 = arith.constant dense<0.000000e+00> : vector<16x32xf32>
    %169 = tpu.matmul %166, %168, %cst_53 {dimension_numbers = #tpu.dot_dimension_numbers<[1], [0], [0], [1], [0, 0, 1, 1], [], []>} : vector<16x32xbf16>, vector<32x32xbf16>, vector<16x32xf32> -> vector<16x32xf32>
    %170 = vector.broadcast %160 : vector<1x32xf32> to vector<16x32xf32>
    %171 = arith.addf %169, %170 : vector<16x32xf32>
    %172 = arith.addf %5, %171 : vector<16x32xf32>
    %cst_54 = arith.constant dense<0.000000e+00> : vector<16xf32>
    %173 = vector.multi_reduction <add>, %172, %cst_54 [1] : vector<16x32xf32> to vector<16xf32>
    %174 = vector.shape_cast %173 : vector<16xf32> to vector<16x1xf32>
    %cst_55 = arith.constant 3.200000e+01 : f32
    %175 = vector.broadcast %cst_55 : f32 to vector<16x1xf32>
    %176 = arith.divf %174, %175 : vector<16x1xf32>
    %177 = vector.broadcast %176 : vector<16x1xf32> to vector<16x32xf32>
    %178 = arith.subf %172, %177 : vector<16x32xf32>
    %179 = arith.mulf %178, %178 : vector<16x32xf32>
    %cst_56 = arith.constant dense<0.000000e+00> : vector<16xf32>
    %180 = vector.multi_reduction <add>, %179, %cst_56 [1] : vector<16x32xf32> to vector<16xf32>
    %181 = vector.shape_cast %180 : vector<16xf32> to vector<16x1xf32>
    %cst_57 = arith.constant 3.200000e+01 : f32
    %182 = vector.broadcast %cst_57 : f32 to vector<16x1xf32>
    %183 = arith.divf %181, %182 : vector<16x1xf32>
    %184 = vector.broadcast %176 : vector<16x1xf32> to vector<16x32xf32>
    %185 = arith.subf %172, %184 : vector<16x32xf32>
    %cst_58 = arith.constant 9.99999974E-6 : f32
    %186 = vector.broadcast %cst_58 : f32 to vector<16x1xf32>
    %187 = arith.addf %183, %186 : vector<16x1xf32>
    %188 = math.rsqrt %187 : vector<16x1xf32>
    %189 = vector.broadcast %188 : vector<16x1xf32> to vector<16x32xf32>
    %190 = arith.mulf %185, %189 : vector<16x32xf32>
    %191 = vector.broadcast %161 : vector<1x32xf32> to vector<16x32xf32>
    %192 = arith.mulf %190, %191 : vector<16x32xf32>
    %193 = vector.broadcast %162 : vector<1x32xf32> to vector<16x32xf32>
    %194 = arith.addf %192, %193 : vector<16x32xf32>
    %195 = arith.truncf %194 : vector<16x32xf32> to vector<16x32xbf16>
    %c0_59 = arith.constant 0 : index
    %c0_60 = arith.constant 0 : index
    %c0_61 = arith.constant 0 : index
    %196 = vector.load %arg12[%c0_59, %c0_60, %c0_61] : memref<1x1x128xf32, #tpu.memory_space<vmem>>, vector<1x1x128xf32>
    %197 = vector.shape_cast %196 : vector<1x1x128xf32> to vector<1x128xf32>
    %c0_62 = arith.constant 0 : index
    %c0_63 = arith.constant 0 : index
    %c0_64 = arith.constant 0 : index
    %198 = vector.load %arg9[%c0_62, %c0_63, %c0_64] : memref<1x32x128xbf16, #tpu.memory_space<vmem>>, vector<1x32x128xbf16>
    %199 = vector.shape_cast %198 : vector<1x32x128xbf16> to vector<32x128xbf16>
    %cst_65 = arith.constant dense<0.000000e+00> : vector<16x128xf32>
    %200 = tpu.matmul %195, %199, %cst_65 {dimension_numbers = #tpu.dot_dimension_numbers<[1], [0], [0], [1], [0, 0, 1, 1], [], []>} : vector<16x32xbf16>, vector<32x128xbf16>, vector<16x128xf32> -> vector<16x128xf32>
    %201 = vector.broadcast %197 : vector<1x128xf32> to vector<16x128xf32>
    %202 = arith.addf %200, %201 : vector<16x128xf32>
    %cst_66 = arith.constant 0.000000e+00 : f32
    %203 = vector.broadcast %cst_66 : f32 to vector<16x128xf32>
    %204 = arith.maximumf %202, %203 : vector<16x128xf32>
    %205 = arith.truncf %204 : vector<16x128xf32> to vector<16x128xbf16>
    %c0_67 = arith.constant 0 : index
    %c0_68 = arith.constant 0 : index
    %c0_69 = arith.constant 0 : index
    %206 = vector.load %arg10[%c0_67, %c0_68, %c0_69] : memref<1x128x32xbf16, #tpu.memory_space<vmem>>, vector<1x128x32xbf16>
    %207 = vector.shape_cast %206 : vector<1x128x32xbf16> to vector<128x32xbf16>
    %cst_70 = arith.constant dense<0.000000e+00> : vector<16x32xf32>
    %208 = tpu.matmul %205, %207, %cst_70 {dimension_numbers = #tpu.dot_dimension_numbers<[1], [0], [0], [1], [0, 0, 1, 1], [], []>} : vector<16x128xbf16>, vector<128x32xbf16>, vector<16x32xf32> -> vector<16x32xf32>
    %209 = arith.addf %194, %208 : vector<16x32xf32>
    %210 = vector.broadcast %163 : vector<1x32xf32> to vector<16x32xf32>
    %211 = arith.addf %209, %210 : vector<16x32xf32>
    %cst_71 = arith.constant dense<0.000000e+00> : vector<16xf32>
    %212 = vector.multi_reduction <add>, %211, %cst_71 [1] : vector<16x32xf32> to vector<16xf32>
    %213 = vector.shape_cast %212 : vector<16xf32> to vector<16x1xf32>
    %cst_72 = arith.constant 3.200000e+01 : f32
    %214 = vector.broadcast %cst_72 : f32 to vector<16x1xf32>
    %215 = arith.divf %213, %214 : vector<16x1xf32>
    %216 = vector.broadcast %215 : vector<16x1xf32> to vector<16x32xf32>
    %217 = arith.subf %211, %216 : vector<16x32xf32>
    %218 = arith.mulf %217, %217 : vector<16x32xf32>
    %cst_73 = arith.constant dense<0.000000e+00> : vector<16xf32>
    %219 = vector.multi_reduction <add>, %218, %cst_73 [1] : vector<16x32xf32> to vector<16xf32>
    %220 = vector.shape_cast %219 : vector<16xf32> to vector<16x1xf32>
    %cst_74 = arith.constant 3.200000e+01 : f32
    %221 = vector.broadcast %cst_74 : f32 to vector<16x1xf32>
    %222 = arith.divf %220, %221 : vector<16x1xf32>
    %223 = vector.broadcast %215 : vector<16x1xf32> to vector<16x32xf32>
    %224 = arith.subf %211, %223 : vector<16x32xf32>
    %cst_75 = arith.constant 9.99999974E-6 : f32
    %225 = vector.broadcast %cst_75 : f32 to vector<16x1xf32>
    %226 = arith.addf %222, %225 : vector<16x1xf32>
    %227 = math.rsqrt %226 : vector<16x1xf32>
    %228 = vector.broadcast %227 : vector<16x1xf32> to vector<16x32xf32>
    %229 = arith.mulf %224, %228 : vector<16x32xf32>
    %230 = vector.broadcast %164 : vector<1x32xf32> to vector<16x32xf32>
    %231 = arith.mulf %229, %230 : vector<16x32xf32>
    %232 = vector.broadcast %165 : vector<1x32xf32> to vector<16x32xf32>
    %233 = arith.addf %231, %232 : vector<16x32xf32>
    %c0_76 = arith.constant 0 : index
    %c0_77 = arith.constant 0 : index
    %234 = vector.load %arg6[%c0_76, %c0_77] : memref<16x1xf32, #tpu.memory_space<vmem>>, vector<16x1xf32>
    %cst_78 = arith.constant 5.000000e-01 : f32
    %235 = vector.broadcast %cst_78 : f32 to vector<16x1xf32>
    %236 = arith.cmpf ogt, %234, %235 : vector<16x1xf32>
    %cst_79 = arith.constant 0.000000e+00 : f32
    %237 = vector.shape_cast %236 : vector<16x1xi1> to vector<16x1xi1>
    %238 = vector.broadcast %237 : vector<16x1xi1> to vector<16x32xi1>
    %239 = vector.broadcast %cst_79 : f32 to vector<16x32xf32>
    %240 = arith.select %238, %239, %233 : vector<16x32xi1>, vector<16x32xf32>
    %c0_80 = arith.constant 0 : index
    %c0_81 = arith.constant 0 : index
    %241 = vector.load %arg18[%c0_80, %c0_81] : memref<16x32xf32, #tpu.memory_space<vmem>>, vector<16x32xf32>
    tpu.vector_store %arg18[%c0_80, %c0_81], %240 {strides = array<i32>} : memref<16x32xf32, #tpu.memory_space<vmem>>, vector<16x32xf32>,
    %c1_i32 = arith.constant 1 : i32
    %242 = arith.cmpi eq, %arg1, %c1_i32 : i32
    %243 = arith.extui %242 : i1 to i32
    %c0_i32_82 = arith.constant 0 : i32
    %244 = arith.cmpi ne, %243, %c0_i32_82 : i32
    scf.if %244 {
      %c0_83 = arith.constant 0 : index
      %c0_84 = arith.constant 0 : index
      %245 = vector.load %arg18[%c0_83, %c0_84] : memref<16x32xf32, #tpu.memory_space<vmem>>, vector<16x32xf32>
      %c0_85 = arith.constant 0 : index
      %c0_86 = arith.constant 0 : index
      %246 = vector.load %arg14[%c0_85, %c0_86] : memref<2x32xf32, #tpu.memory_space<vmem>>, vector<1x32xf32>
      %c1_87 = arith.constant 1 : index
      %c0_88 = arith.constant 0 : index
      %247 = vector.load %arg14[%c1_87, %c0_88] : memref<2x32xf32, #tpu.memory_space<vmem>>, vector<1x32xf32>
      %cst_89 = arith.constant dense<0.000000e+00> : vector<16xf32>
      %248 = vector.multi_reduction <add>, %245, %cst_89 [1] : vector<16x32xf32> to vector<16xf32>
      %249 = vector.shape_cast %248 : vector<16xf32> to vector<16x1xf32>
      %cst_90 = arith.constant 3.200000e+01 : f32
      %250 = vector.broadcast %cst_90 : f32 to vector<16x1xf32>
      %251 = arith.divf %249, %250 : vector<16x1xf32>
      %252 = vector.broadcast %251 : vector<16x1xf32> to vector<16x32xf32>
      %253 = arith.subf %245, %252 : vector<16x32xf32>
      %254 = arith.mulf %253, %253 : vector<16x32xf32>
      %cst_91 = arith.constant dense<0.000000e+00> : vector<16xf32>
      %255 = vector.multi_reduction <add>, %254, %cst_91 [1] : vector<16x32xf32> to vector<16xf32>
      %256 = vector.shape_cast %255 : vector<16xf32> to vector<16x1xf32>
      %cst_92 = arith.constant 3.200000e+01 : f32
      %257 = vector.broadcast %cst_92 : f32 to vector<16x1xf32>
      %258 = arith.divf %256, %257 : vector<16x1xf32>
      %259 = vector.broadcast %251 : vector<16x1xf32> to vector<16x32xf32>
      %260 = arith.subf %245, %259 : vector<16x32xf32>
      %cst_93 = arith.constant 9.99999974E-6 : f32
      %261 = vector.broadcast %cst_93 : f32 to vector<16x1xf32>
      %262 = arith.addf %258, %261 : vector<16x1xf32>
      %263 = math.rsqrt %262 : vector<16x1xf32>
      %264 = vector.broadcast %263 : vector<16x1xf32> to vector<16x32xf32>
      %265 = arith.mulf %260, %264 : vector<16x32xf32>
      %266 = vector.broadcast %246 : vector<1x32xf32> to vector<16x32xf32>
      %267 = arith.mulf %265, %266 : vector<16x32xf32>
      %268 = vector.broadcast %247 : vector<1x32xf32> to vector<16x32xf32>
      %269 = arith.addf %267, %268 : vector<16x32xf32>
      %270 = vector.extract_strided_slice %269 {offsets = [0, 0], sizes = [8, 32], strides = [1, 1]} : vector<16x32xf32> to vector<8x32xf32>
      %cst_94 = arith.constant dense<0.000000e+00> : vector<32xf32>
      %271 = vector.multi_reduction <add>, %270, %cst_94 [0] : vector<8x32xf32> to vector<32xf32>
      %272 = vector.shape_cast %271 : vector<32xf32> to vector<1x32xf32>
      %cst_95 = arith.constant 8.000000e+00 : f32
      %273 = vector.broadcast %cst_95 : f32 to vector<1x32xf32>
      %274 = arith.divf %272, %273 : vector<1x32xf32>
      %275 = vector.extract_strided_slice %269 {offsets = [8, 0], sizes = [8, 32], strides = [1, 1]} : vector<16x32xf32> to vector<8x32xf32>
      %cst_96 = arith.constant dense<0.000000e+00> : vector<32xf32>
      %276 = vector.multi_reduction <add>, %275, %cst_96 [0] : vector<8x32xf32> to vector<32xf32>
      %277 = vector.shape_cast %276 : vector<32xf32> to vector<1x32xf32>
      %cst_97 = arith.constant 8.000000e+00 : f32
      %278 = vector.broadcast %cst_97 : f32 to vector<1x32xf32>
      %279 = arith.divf %277, %278 : vector<1x32xf32>
      %280 = tpu.concatenate %274, %279 in 0 : vector<1x32xf32>, vector<1x32xf32> -> vector<2x32xf32>
      %281 = arith.truncf %280 : vector<2x32xf32> to vector<2x32xbf16>
      %c0_98 = arith.constant 0 : index
      %c0_99 = arith.constant 0 : index
      %282 = vector.load %arg15[%c0_98, %c0_99] : memref<32x128xbf16, #tpu.memory_space<vmem>>, vector<32x128xbf16>
      %cst_100 = arith.constant dense<0.000000e+00> : vector<2x128xf32>
      %283 = tpu.matmul %281, %282, %cst_100 {dimension_numbers = #tpu.dot_dimension_numbers<[1], [0], [0], [1], [0, 0, 1, 1], [], []>} : vector<2x32xbf16>, vector<32x128xbf16>, vector<2x128xf32> -> vector<2x128xf32>
      %c0_101 = arith.constant 0 : index
      %c0_102 = arith.constant 0 : index
      %284 = vector.load %arg16[%c0_101, %c0_102] : memref<1x128xf32, #tpu.memory_space<vmem>>, vector<1x128xf32>
      %285 = vector.broadcast %284 : vector<1x128xf32> to vector<2x128xf32>
      %286 = arith.addf %283, %285 : vector<2x128xf32>
      %c0_103 = arith.constant 0 : index
      %c0_104 = arith.constant 0 : index
      %287 = vector.load %arg17[%c0_103, %c0_104] : memref<2x128xf32, #tpu.memory_space<vmem>>, vector<2x128xf32>
      tpu.vector_store %arg17[%c0_103, %c0_104], %286 {strides = array<i32>} : memref<2x128xf32, #tpu.memory_space<vmem>>, vector<2x128xf32>,
    } else {
    }
    return
  }
  func.func @transform_0(%arg0: i32, %arg1: i32) -> (i32, i32) {
    %c0_i32 = arith.constant 0 : i32
    %c0_i32_0 = arith.constant 0 : i32
    return %arg0, %c0_i32 : i32, i32
  }
  func.func @transform_1(%arg0: i32, %arg1: i32) -> (i32, i32) {
    %c0_i32 = arith.constant 0 : i32
    %c0_i32_0 = arith.constant 0 : i32
    return %arg0, %c0_i32 : i32, i32
  }
  func.func @transform_2(%arg0: i32, %arg1: i32) -> (i32, i32, i32) {
    %c0_i32 = arith.constant 0 : i32
    %c0_i32_0 = arith.constant 0 : i32
    %c0_i32_1 = arith.constant 0 : i32
    return %arg0, %c0_i32, %c0_i32_0 : i32, i32, i32
  }
  func.func @transform_3(%arg0: i32, %arg1: i32) -> (i32, i32, i32) {
    %c0_i32 = arith.constant 0 : i32
    %c0_i32_0 = arith.constant 0 : i32
    %c0_i32_1 = arith.constant 0 : i32
    return %arg0, %c0_i32, %c0_i32_0 : i32, i32, i32
  }
  func.func @transform_4(%arg0: i32, %arg1: i32) -> (i32, i32) {
    %c0_i32 = arith.constant 0 : i32
    %c0_i32_0 = arith.constant 0 : i32
    return %arg0, %c0_i32 : i32, i32
  }
  func.func @transform_5(%arg0: i32, %arg1: i32) -> (i32, i32, i32) {
    %c0_i32 = arith.constant 0 : i32
    %c0_i32_0 = arith.constant 0 : i32
    %c0_i32_1 = arith.constant 0 : i32
    return %arg1, %c0_i32, %c0_i32_0 : i32, i32, i32
  }
  func.func @transform_6(%arg0: i32, %arg1: i32) -> (i32, i32, i32) {
    %c0_i32 = arith.constant 0 : i32
    %c0_i32_0 = arith.constant 0 : i32
    %c0_i32_1 = arith.constant 0 : i32
    return %arg1, %c0_i32, %c0_i32_0 : i32, i32, i32
  }
  func.func @transform_7(%arg0: i32, %arg1: i32) -> (i32, i32, i32) {
    %c0_i32 = arith.constant 0 : i32
    %c0_i32_0 = arith.constant 0 : i32
    %c0_i32_1 = arith.constant 0 : i32
    return %arg1, %c0_i32, %c0_i32_0 : i32, i32, i32
  }
  func.func @transform_8(%arg0: i32, %arg1: i32) -> (i32, i32, i32) {
    %c0_i32 = arith.constant 0 : i32
    %c0_i32_0 = arith.constant 0 : i32
    %c0_i32_1 = arith.constant 0 : i32
    return %arg1, %c0_i32, %c0_i32_0 : i32, i32, i32
  }
  func.func @transform_9(%arg0: i32, %arg1: i32) -> (i32, i32, i32) {
    %c0_i32 = arith.constant 0 : i32
    %c0_i32_0 = arith.constant 0 : i32
    %c0_i32_1 = arith.constant 0 : i32
    return %arg1, %c0_i32, %c0_i32_0 : i32, i32, i32
  }
  func.func @transform_10(%arg0: i32, %arg1: i32) -> (i32, i32, i32) {
    %c0_i32 = arith.constant 0 : i32
    %c0_i32_0 = arith.constant 0 : i32
    %c0_i32_1 = arith.constant 0 : i32
    return %arg1, %c0_i32, %c0_i32_0 : i32, i32, i32
  }
  func.func @transform_11(%arg0: i32, %arg1: i32) -> (i32, i32, i32) {
    %c0_i32 = arith.constant 0 : i32
    %c0_i32_0 = arith.constant 0 : i32
    %c0_i32_1 = arith.constant 0 : i32
    return %arg1, %c0_i32, %c0_i32_0 : i32, i32, i32
  }
  func.func @transform_12(%arg0: i32, %arg1: i32) -> (i32, i32) {
    %c0_i32 = arith.constant 0 : i32
    %c0_i32_0 = arith.constant 0 : i32
    %c0_i32_1 = arith.constant 0 : i32
    return %c0_i32, %c0_i32_0 : i32, i32
  }
  func.func @transform_13(%arg0: i32, %arg1: i32) -> (i32, i32) {
    %c0_i32 = arith.constant 0 : i32
    %c0_i32_0 = arith.constant 0 : i32
    %c0_i32_1 = arith.constant 0 : i32
    return %c0_i32, %c0_i32_0 : i32, i32
  }
  func.func @transform_14(%arg0: i32, %arg1: i32) -> (i32, i32) {
    %c0_i32 = arith.constant 0 : i32
    %c0_i32_0 = arith.constant 0 : i32
    %c0_i32_1 = arith.constant 0 : i32
    return %c0_i32, %c0_i32_0 : i32, i32
  }
  func.func @transform_15(%arg0: i32, %arg1: i32) -> (i32, i32) {
    %c0_i32 = arith.constant 0 : i32
    %c0_i32_0 = arith.constant 0 : i32
    return %arg0, %c0_i32 : i32, i32
  }
}

</mosaic_0001>

<llo_original>
// kernel: tpu_custom_call.1
$region0: #{tpu_custom_call.1}
  #allocation0 [shape = 'u32[]', space=smem, size = 0x4, offset = 0x4, fixed_abs, tag = 'smem constant byte address 0x4 - core index']
  #allocation1 [shape = 'u32[144,128]{1,0:T(1,128)}', space=vmem, size = 0x12000, scoped, tag = 'internal scratch']
  #allocation2 [shape = 'f32[16,32]{1,0:T(8,128)}', space=vmem, size = 0x2000, scoped, tag = 'scratch operand']
  #allocation3 [shape = 'f32[2,8,8]{2,1,0:T(8,128)}', space=vmem, size = 0x2000, scoped, tag = 'scratch operand']
  %s0 = inlined_call_operand.hbm [shape: f32[16,32], index: 0, kind: input, shape index: {}]
  %s1 = inlined_call_operand.hbm [shape: f32[16,32], index: 1, kind: input, shape index: {}]
  %s2 = inlined_call_operand.hbm [shape: f32[2,1,8], index: 2, kind: input, shape index: {}]
  %s3 = inlined_call_operand.hbm [shape: f32[2,8,1], index: 3, kind: input, shape index: {}]
  %s4 = inlined_call_operand.hbm [shape: f32[16,1], index: 4, kind: input, shape index: {}]
  %s5 = inlined_call_operand.hbm [shape: bf16[2,32,96], index: 5, kind: input, shape index: {}]
  %s6 = inlined_call_operand.hbm [shape: bf16[2,32,32], index: 6, kind: input, shape index: {}]
  %s7 = inlined_call_operand.hbm [shape: bf16[2,32,128], index: 7, kind: input, shape index: {}]
  %s8 = inlined_call_operand.hbm [shape: bf16[2,128,32], index: 8, kind: input, shape index: {}]
  %s9 = inlined_call_operand.hbm [shape: f32[2,1,96], index: 9, kind: input, shape index: {}]
  %s10 = inlined_call_operand.hbm [shape: f32[2,1,128], index: 10, kind: input, shape index: {}]
  %s11 = inlined_call_operand.hbm [shape: f32[2,6,32], index: 11, kind: input, shape index: {}]
  %s12 = inlined_call_operand.hbm [shape: f32[2,32], index: 12, kind: input, shape index: {}]
  %s13 = inlined_call_operand.hbm [shape: bf16[32,128], index: 13, kind: input, shape index: {}]
  %s14 = inlined_call_operand.hbm [shape: f32[1,128], index: 14, kind: input, shape index: {}]
  %s15 = inlined_call_operand.hbm [shape: f32[2,128], index: 15, kind: output, shape index: {}]
  %s16 = sld [smem:[#allocation0]]
  $region161: #{tpu_custom_call.1} parent=0
    _
  %s18 = ssub.s32 1, %s16
  %s19 = scalar_select 0, %s18, %s16
  $region1: #{tpu_custom_call.1} parent=0
    #allocation4 [shape = 'u8[8192]{0}', space=vmem, size = 0x2000, scoped, tag = 'input window, operand 0, single buffered']
    #allocation5 [shape = 's32[2]{0}', space=sflag, size = 0x8, scoped, tag = 'scoped memory for tpu_custom_call.1']
    #allocation6 [shape = 's32[2]{0}', space=sflag, size = 0x8, scoped, tag = 'scoped memory for tpu_custom_call.1']
    #allocation7 [shape = 'u8[8192]{0}', space=vmem, size = 0x2000, scoped, tag = 'input window, operand 1, single buffered']
    #allocation8 [shape = 's32[1]{0}', space=sflag, size = 0x4, scoped, tag = 'scoped memory for tpu_custom_call.1']
    #allocation9 [shape = 'u8[1024]{0}', space=vmem, size = 0x400, scoped, tag = 'input window, operand 2, single buffered']
    #allocation10 [shape = 'u8[8192]{0}', space=vmem, size = 0x2000, scoped, tag = 'input window, operand 3, single buffered']
    #allocation11 [shape = 's32[1]{0}', space=sflag, size = 0x4, scoped, tag = 'scoped memory for tpu_custom_call.1']
    #allocation12 [shape = 'u8[8192]{0}', space=vmem, size = 0x2000, scoped, tag = 'input window, operand 4, single buffered']
    #allocation13 [shape = 'u8[16384]{0}', space=vmem, size = 0x4000, scoped, tag = 'input window, operand 5']
    #allocation14 [shape = 's32[2]{0}', space=sflag, size = 0x8, scoped, tag = 'scoped memory for tpu_custom_call.1']
    #allocation15 [shape = 'u8[16384]{0}', space=vmem, size = 0x4000, scoped, tag = 'input window, operand 6']
    #allocation16 [shape = 'u8[16384]{0}', space=vmem, size = 0x4000, scoped, tag = 'input window, operand 7']
    #allocation17 [shape = 's32[2]{0}', space=sflag, size = 0x8, scoped, tag = 'scoped memory for tpu_custom_call.1']
    #allocation18 [shape = 'u8[65536]{0}', space=vmem, size = 0x10000, scoped, tag = 'input window, operand 8']
    #allocation19 [shape = 'u8[1024]{0}', space=vmem, size = 0x400, scoped, tag = 'input window, operand 9']
    #allocation20 [shape = 's32[2]{0}', space=sflag, size = 0x8, scoped, tag = 'scoped memory for tpu_custom_call.1']
    #allocation21 [shape = 'u8[1024]{0}', space=vmem, size = 0x400, scoped, tag = 'input window, operand 10']
    #allocation22 [shape = 'u8[8192]{0}', space=vmem, size = 0x2000, scoped, tag = 'input window, operand 11']
    #allocation23 [shape = 's32[2]{0}', space=sflag, size = 0x8, scoped, tag = 'scoped memory for tpu_custom_call.1']
    #allocation24 [shape = 'u8[1024]{0}', space=vmem, size = 0x400, scoped, tag = 'input window, operand 12, single buffered']
    #allocation25 [shape = 'u8[8192]{0}', space=vmem, size = 0x2000, scoped, tag = 'input window, operand 13, single buffered']
    #allocation26 [shape = 's32[1]{0}', space=sflag, size = 0x4, scoped, tag = 'scoped memory for tpu_custom_call.1']
    #allocation27 [shape = 'u8[512]{0}', space=vmem, size = 0x400, scoped, tag = 'input window, operand 14, single buffered']
    #allocation28 [shape = 'u8[1024]{0}', space=vmem, size = 0x400, scoped, tag = 'output window, operand 0, single buffered']
    %20 = vsyncpa [#allocation5], 0
    %21 = vsyncpa [#allocation8], 0
    %22 = vsyncpa [#allocation11], 0
    %23 = vsyncpa [#allocation14], 0
    %s24 = scalar_lea.sflag [#allocation14], 1
    %25 = vsyncpa %s24, 0
    %26 = vsyncpa [#allocation17], 0
    %s27 = scalar_lea.sflag [#allocation17], 1
    %28 = vsyncpa %s27, 0
    %29 = vsyncpa [#allocation20], 0
    %s30 = scalar_lea.sflag [#allocation20], 1
    %31 = vsyncpa %s30, 0
    %32 = vsyncpa [#allocation23], 0
    %s33 = scalar_lea.sflag [#allocation23], 1
    %34 = vsyncpa %s33, 0
    %35 = vsyncpa [#allocation26], 0
    %36 = vsyncpa [#allocation6], 0
    loop: start=0, step=1, limit=4
    $region2: #{tpu_custom_call.1} parent=1 // loop_pre_header
      _
    $region3: #{tpu_custom_call.1} parent=1 // loop_header
      %s38 = sphi 0, %s42
      %p39 = scmp.ge.s32.totalorder %s38, 4
      %s45 = sphi 0, %s57
      %s46 = sphi 0, %s53
      %s47 = sphi 0, %s45
      %s48 = sphi 0, %s46
      %s49 = sphi 0, %s47
      %s50 = sphi 0, %s48
      %s60 = sphi 0, %s62
      %s63 = sphi 0, %s60
      %s64 = sphi 0, %s63
      %s80 = sphi 0, %s64
      %s86 = sphi 0, %s88
      %s89 = sphi 0, %s86
      %s90 = sphi 0, %s89
      %s106 = sphi 0, %s90
      %s112 = sphi 0, %s114
      %s115 = sphi 0, %s112
      %s116 = sphi 0, %s115
      %s132 = sphi 0, %s116
      %s138 = sphi 0, %s140
      %s141 = sphi 0, %s138
      %s142 = sphi 0, %s141
      %s158 = sphi 0, %s142
      %s164 = sphi 0, %s166
      %s167 = sphi 0, %s164
      %s168 = sphi 0, %s167
      %s184 = sphi 0, %s168
      %s190 = sphi 0, %s192
      %s193 = sphi 0, %s190
      %s194 = sphi 0, %s193
      %s210 = sphi 0, %s194
      %s216 = sphi 0, %s218
      %s219 = sphi 0, %s216
      %s220 = sphi 0, %s219
      %s236 = sphi 0, %s220
      %s242 = sphi 0, %s244
      %s245 = sphi 0, %s242
      %s246 = sphi 0, %s245
      %s262 = sphi 0, %s246
      %s268 = sphi 0, %s270
      %s271 = sphi 0, %s268
      %s272 = sphi 0, %s271
      %s288 = sphi 0, %s272
      %s294 = sphi 0, %s296
      %s297 = sphi 0, %s294
      %s298 = sphi 0, %s297
      %s314 = sphi 0, %s298
      %s320 = sphi 0, %s322
      %s323 = sphi 0, %s320
      %s324 = sphi 0, %s323
      %s340 = sphi 0, %s324
      %s346 = sphi 0, %s348
      %s349 = sphi 0, %s346
      %s350 = sphi 0, %s349
      %s366 = sphi 0, %s350
      %s370 = sphi 0, %s370
      %s372 = sphi 0, %s370
      %s373 = sphi 0, %s372
      %s387 = sphi 0, %s373
      %s391 = sphi 0, %s391
      %s393 = sphi 0, %s391
      %s394 = sphi 0, %s393
      %s408 = sphi 0, %s394
      %s412 = sphi 0, %s412
      %s414 = sphi 0, %s412
      %s415 = sphi 0, %s414
      %s429 = sphi 0, %s415
      %s435 = sphi 0, %s437
      %s438 = sphi 0, %s435
      %s439 = sphi 0, %s438
      %s455 = sphi 0, %s439
    $region4: #{tpu_custom_call.1} parent=1 // loop_header_branch
      %41 = sbr.rel (%p39) target = $region8
    $region5: #{tpu_custom_call.1} parent=1 // loop_body
      %s43 = ssub.s32 %s38, 1
      %s44 = ssub.s32 %s38, 2
      %s51 = sadd.s32 1, %s46
      %p52 = scmp.ge.s32.totalorder %s51, 2
      %s53 = scalar_select %p52, 0, %s51
      %s54 = sadd.s32 1, %s45
      %s55 = scalar_select %p52, %s54, %s45
      %p56 = scmp.ge.s32.totalorder %s55, 1
      %s57 = scalar_select %p56, 0, %s55
      %s58 = ssub.s32 %s45, %s57
      %p59 = scmp.eq.s32.totalorder %s58, 0
      %s61 = sadd.s32 %s60, 1
      %s62 = scalar_select %p59, %s60, %s61
      %p65 = pneg %p59
      %p66 = scmp.eq.s32.totalorder %s38, 1
      %p67 = por %p65, %p66
      %p68 = scmp.ne.s32.totalorder %s60, %s63
      %p69 = scmp.eq.s32.totalorder %s38, 0
      %p70 = por %p68, %p69
      %p71 = scmp.ne.s32.totalorder %s60, %s63
      %p72 = scmp.eq.s32.totalorder %s43, 1
      %p73 = por %p71, %p72
      %p74 = scmp.ne.s32.totalorder %s63, %s64
      %p75 = scmp.eq.s32.totalorder %s43, 0
      %p76 = por %p74, %p75
      %p77 = scmp.ne.s32.totalorder %s63, %s64
      %p78 = scmp.eq.s32.totalorder %s44, 1
      %p79 = por %p77, %p78
      %p81 = scmp.ne.s32.totalorder %s64, %s80
      %p82 = scmp.eq.s32.totalorder %s44, 0
      %p83 = por %p81, %p82
      %s84 = ssub.s32 %s45, %s57
      %p85 = scmp.eq.s32.totalorder %s84, 0
      %s87 = sadd.s32 %s86, 1
      %s88 = scalar_select %p85, %s86, %s87
      %p91 = pneg %p85
      %p92 = scmp.eq.s32.totalorder %s38, 1
      %p93 = por %p91, %p92
      %p94 = scmp.ne.s32.totalorder %s86, %s89
      %p95 = scmp.eq.s32.totalorder %s38, 0
      %p96 = por %p94, %p95
      %p97 = scmp.ne.s32.totalorder %s86, %s89
      %p98 = scmp.eq.s32.totalorder %s43, 1
      %p99 = por %p97, %p98
      %p100 = scmp.ne.s32.totalorder %s89, %s90
      %p101 = scmp.eq.s32.totalorder %s43, 0
      %p102 = por %p100, %p101
      %p103 = scmp.ne.s32.totalorder %s89, %s90
      %p104 = scmp.eq.s32.totalorder %s44, 1
      %p105 = por %p103, %p104
      %p107 = scmp.ne.s32.totalorder %s90, %s106
      %p108 = scmp.eq.s32.totalorder %s44, 0
      %p109 = por %p107, %p108
      %s110 = ssub.s32 %s45, %s57
      %p111 = scmp.eq.s32.totalorder %s110, 0
      %s113 = sadd.s32 %s112, 1
      %s114 = scalar_select %p111, %s112, %s113
      %p117 = pneg %p111
      %p118 = scmp.eq.s32.totalorder %s38, 1
      %p119 = por %p117, %p118
      %p120 = scmp.ne.s32.totalorder %s112, %s115
      %p121 = scmp.eq.s32.totalorder %s38, 0
      %p122 = por %p120, %p121
      %p123 = scmp.ne.s32.totalorder %s112, %s115
      %p124 = scmp.eq.s32.totalorder %s43, 1
      %p125 = por %p123, %p124
      %p126 = scmp.ne.s32.totalorder %s115, %s116
      %p127 = scmp.eq.s32.totalorder %s43, 0
      %p128 = por %p126, %p127
      %p129 = scmp.ne.s32.totalorder %s115, %s116
      %p130 = scmp.eq.s32.totalorder %s44, 1
      %p131 = por %p129, %p130
      %p133 = scmp.ne.s32.totalorder %s116, %s132
      %p134 = scmp.eq.s32.totalorder %s44, 0
      %p135 = por %p133, %p134
      %s136 = ssub.s32 %s45, %s57
      %p137 = scmp.eq.s32.totalorder %s136, 0
      %s139 = sadd.s32 %s138, 1
      %s140 = scalar_select %p137, %s138, %s139
      %p143 = pneg %p137
      %p144 = scmp.eq.s32.totalorder %s38, 1
      %p145 = por %p143, %p144
      %p146 = scmp.ne.s32.totalorder %s138, %s141
      %p147 = scmp.eq.s32.totalorder %s38, 0
      %p148 = por %p146, %p147
      %p149 = scmp.ne.s32.totalorder %s138, %s141
      %p150 = scmp.eq.s32.totalorder %s43, 1
      %p151 = por %p149, %p150
      %p152 = scmp.ne.s32.totalorder %s141, %s142
      %p153 = scmp.eq.s32.totalorder %s43, 0
      %p154 = por %p152, %p153
      %p155 = scmp.ne.s32.totalorder %s141, %s142
      %p156 = scmp.eq.s32.totalorder %s44, 1
      %p157 = por %p155, %p156
      %p159 = scmp.ne.s32.totalorder %s142, %s158
      %p160 = scmp.eq.s32.totalorder %s44, 0
      %p161 = por %p159, %p160
      %s162 = ssub.s32 %s45, %s57
      %p163 = scmp.eq.s32.totalorder %s162, 0
      %s165 = sadd.s32 %s164, 1
      %s166 = scalar_select %p163, %s164, %s165
      %p169 = pneg %p163
      %p170 = scmp.eq.s32.totalorder %s38, 1
      %p171 = por %p169, %p170
      %p172 = scmp.ne.s32.totalorder %s164, %s167
      %p173 = scmp.eq.s32.totalorder %s38, 0
      %p174 = por %p172, %p173
      %p175 = scmp.ne.s32.totalorder %s164, %s167
      %p176 = scmp.eq.s32.totalorder %s43, 1
      %p177 = por %p175, %p176
      %p178 = scmp.ne.s32.totalorder %s167, %s168
      %p179 = scmp.eq.s32.totalorder %s43, 0
      %p180 = por %p178, %p179
      %p181 = scmp.ne.s32.totalorder %s167, %s168
      %p182 = scmp.eq.s32.totalorder %s44, 1
      %p183 = por %p181, %p182
      %p185 = scmp.ne.s32.totalorder %s168, %s184
      %p186 = scmp.eq.s32.totalorder %s44, 0
      %p187 = por %p185, %p186
      %s188 = ssub.s32 %s46, %s53
      %p189 = scmp.eq.s32.totalorder %s188, 0
      %s191 = sadd.s32 %s190, 1
      %s192 = scalar_select %p189, %s190, %s191
      %p195 = pneg %p189
      %p196 = scmp.eq.s32.totalorder %s38, 1
      %p197 = por %p195, %p196
      %p198 = scmp.ne.s32.totalorder %s190, %s193
      %p199 = scmp.eq.s32.totalorder %s38, 0
      %p200 = por %p198, %p199
      %p201 = scmp.ne.s32.totalorder %s190, %s193
      %p202 = scmp.eq.s32.totalorder %s43, 1
      %p203 = por %p201, %p202
      %p204 = scmp.ne.s32.totalorder %s193, %s194
      %p205 = scmp.eq.s32.totalorder %s43, 0
      %p206 = por %p204, %p205
      %p207 = scmp.ne.s32.totalorder %s193, %s194
      %p208 = scmp.eq.s32.totalorder %s44, 1
      %p209 = por %p207, %p208
      %p211 = scmp.ne.s32.totalorder %s194, %s210
      %p212 = scmp.eq.s32.totalorder %s44, 0
      %p213 = por %p211, %p212
      %s214 = ssub.s32 %s46, %s53
      %p215 = scmp.eq.s32.totalorder %s214, 0
      %s217 = sadd.s32 %s216, 1
      %s218 = scalar_select %p215, %s216, %s217
      %p221 = pneg %p215
      %p222 = scmp.eq.s32.totalorder %s38, 1
      %p223 = por %p221, %p222
      %p224 = scmp.ne.s32.totalorder %s216, %s219
      %p225 = scmp.eq.s32.totalorder %s38, 0
      %p226 = por %p224, %p225
      %p227 = scmp.ne.s32.totalorder %s216, %s219
      %p228 = scmp.eq.s32.totalorder %s43, 1
      %p229 = por %p227, %p228
      %p230 = scmp.ne.s32.totalorder %s219, %s220
      %p231 = scmp.eq.s32.totalorder %s43, 0
      %p232 = por %p230, %p231
      %p233 = scmp.ne.s32.totalorder %s219, %s220
      %p234 = scmp.eq.s32.totalorder %s44, 1
      %p235 = por %p233, %p234
      %p237 = scmp.ne.s32.totalorder %s220, %s236
      %p238 = scmp.eq.s32.totalorder %s44, 0
      %p239 = por %p237, %p238
      %s240 = ssub.s32 %s46, %s53
      %p241 = scmp.eq.s32.totalorder %s240, 0
      %s243 = sadd.s32 %s242, 1
      %s244 = scalar_select %p241, %s242, %s243
      %p247 = pneg %p241
      %p248 = scmp.eq.s32.totalorder %s38, 1
      %p249 = por %p247, %p248
      %p250 = scmp.ne.s32.totalorder %s242, %s245
      %p251 = scmp.eq.s32.totalorder %s38, 0
      %p252 = por %p250, %p251
      %p253 = scmp.ne.s32.totalorder %s242, %s245
      %p254 = scmp.eq.s32.totalorder %s43, 1
      %p255 = por %p253, %p254
      %p256 = scmp.ne.s32.totalorder %s245, %s246
      %p257 = scmp.eq.s32.totalorder %s43, 0
      %p258 = por %p256, %p257
      %p259 = scmp.ne.s32.totalorder %s245, %s246
      %p260 = scmp.eq.s32.totalorder %s44, 1
      %p261 = por %p259, %p260
      %p263 = scmp.ne.s32.totalorder %s246, %s262
      %p264 = scmp.eq.s32.totalorder %s44, 0
      %p265 = por %p263, %p264
      %s266 = ssub.s32 %s46, %s53
      %p267 = scmp.eq.s32.totalorder %s266, 0
      %s269 = sadd.s32 %s268, 1
      %s270 = scalar_select %p267, %s268, %s269
      %p273 = pneg %p267
      %p274 = scmp.eq.s32.totalorder %s38, 1
      %p275 = por %p273, %p274
      %p276 = scmp.ne.s32.totalorder %s268, %s271
      %p277 = scmp.eq.s32.totalorder %s38, 0
      %p278 = por %p276, %p277
      %p279 = scmp.ne.s32.totalorder %s268, %s271
      %p280 = scmp.eq.s32.totalorder %s43, 1
      %p281 = por %p279, %p280
      %p282 = scmp.ne.s32.totalorder %s271, %s272
      %p283 = scmp.eq.s32.totalorder %s43, 0
      %p284 = por %p282, %p283
      %p285 = scmp.ne.s32.totalorder %s271, %s272
      %p286 = scmp.eq.s32.totalorder %s44, 1
      %p287 = por %p285, %p286
      %p289 = scmp.ne.s32.totalorder %s272, %s288
      %p290 = scmp.eq.s32.totalorder %s44, 0
      %p291 = por %p289, %p290
      %s292 = ssub.s32 %s46, %s53
      %p293 = scmp.eq.s32.totalorder %s292, 0
      %s295 = sadd.s32 %s294, 1
      %s296 = scalar_select %p293, %s294, %s295
      %p299 = pneg %p293
      %p300 = scmp.eq.s32.totalorder %s38, 1
      %p301 = por %p299, %p300
      %p302 = scmp.ne.s32.totalorder %s294, %s297
      %p303 = scmp.eq.s32.totalorder %s38, 0
      %p304 = por %p302, %p303
      %p305 = scmp.ne.s32.totalorder %s294, %s297
      %p306 = scmp.eq.s32.totalorder %s43, 1
      %p307 = por %p305, %p306
      %p308 = scmp.ne.s32.totalorder %s297, %s298
      %p309 = scmp.eq.s32.totalorder %s43, 0
      %p310 = por %p308, %p309
      %p311 = scmp.ne.s32.totalorder %s297, %s298
      %p312 = scmp.eq.s32.totalorder %s44, 1
      %p313 = por %p311, %p312
      %p315 = scmp.ne.s32.totalorder %s298, %s314
      %p316 = scmp.eq.s32.totalorder %s44, 0
      %p317 = por %p315, %p316
      %s318 = ssub.s32 %s46, %s53
      %p319 = scmp.eq.s32.totalorder %s318, 0
      %s321 = sadd.s32 %s320, 1
      %s322 = scalar_select %p319, %s320, %s321
      %p325 = pneg %p319
      %p326 = scmp.eq.s32.totalorder %s38, 1
      %p327 = por %p325, %p326
      %p328 = scmp.ne.s32.totalorder %s320, %s323
      %p329 = scmp.eq.s32.totalorder %s38, 0
      %p330 = por %p328, %p329
      %p331 = scmp.ne.s32.totalorder %s320, %s323
      %p332 = scmp.eq.s32.totalorder %s43, 1
      %p333 = por %p331, %p332
      %p334 = scmp.ne.s32.totalorder %s323, %s324
      %p335 = scmp.eq.s32.totalorder %s43, 0
      %p336 = por %p334, %p335
      %p337 = scmp.ne.s32.totalorder %s323, %s324
      %p338 = scmp.eq.s32.totalorder %s44, 1
      %p339 = por %p337, %p338
      %p341 = scmp.ne.s32.totalorder %s324, %s340
      %p342 = scmp.eq.s32.totalorder %s44, 0
      %p343 = por %p341, %p342
      %s344 = ssub.s32 %s46, %s53
      %p345 = scmp.eq.s32.totalorder %s344, 0
      %s347 = sadd.s32 %s346, 1
      %s348 = scalar_select %p345, %s346, %s347
      %p351 = pneg %p345
      %p352 = scmp.eq.s32.totalorder %s38, 1
      %p353 = por %p351, %p352
      %p354 = scmp.ne.s32.totalorder %s346, %s349
      %p355 = scmp.eq.s32.totalorder %s38, 0
      %p356 = por %p354, %p355
      %p357 = scmp.ne.s32.totalorder %s346, %s349
      %p358 = scmp.eq.s32.totalorder %s43, 1
      %p359 = por %p357, %p358
      %p360 = scmp.ne.s32.totalorder %s349, %s350
      %p361 = scmp.eq.s32.totalorder %s43, 0
      %p362 = por %p360, %p361
      %p363 = scmp.ne.s32.totalorder %s349, %s350
      %p364 = scmp.eq.s32.totalorder %s44, 1
      %p365 = por %p363, %p364
      %p367 = scmp.ne.s32.totalorder %s350, %s366
      %p368 = scmp.eq.s32.totalorder %s44, 0
      %p369 = por %p367, %p368
      %s371 = sadd.s32 %s370, 1
      %p374 = scmp.eq.s32.totalorder %s38, 1
      %p375 = scmp.ne.s32.totalorder %s370, %s372
      %p376 = scmp.eq.s32.totalorder %s38, 0
      %p377 = por %p375, %p376
      %p378 = scmp.ne.s32.totalorder %s370, %s372
      %p379 = scmp.eq.s32.totalorder %s43, 1
      %p380 = por %p378, %p379
      %p381 = scmp.ne.s32.totalorder %s372, %s373
      %p382 = scmp.eq.s32.totalorder %s43, 0
      %p383 = por %p381, %p382
      %p384 = scmp.ne.s32.totalorder %s372, %s373
      %p385 = scmp.eq.s32.totalorder %s44, 1
      %p386 = por %p384, %p385
      %p388 = scmp.ne.s32.totalorder %s373, %s387
      %p389 = scmp.eq.s32.totalorder %s44, 0
      %p390 = por %p388, %p389
      %s392 = sadd.s32 %s391, 1
      %p395 = scmp.eq.s32.totalorder %s38, 1
      %p396 = scmp.ne.s32.totalorder %s391, %s393
      %p397 = scmp.eq.s32.totalorder %s38, 0
      %p398 = por %p396, %p397
      %p399 = scmp.ne.s32.totalorder %s391, %s393
      %p400 = scmp.eq.s32.totalorder %s43, 1
      %p401 = por %p399, %p400
      %p402 = scmp.ne.s32.totalorder %s393, %s394
      %p403 = scmp.eq.s32.totalorder %s43, 0
      %p404 = por %p402, %p403
      %p405 = scmp.ne.s32.totalorder %s393, %s394
      %p406 = scmp.eq.s32.totalorder %s44, 1
      %p407 = por %p405, %p406
      %p409 = scmp.ne.s32.totalorder %s394, %s408
      %p410 = scmp.eq.s32.totalorder %s44, 0
      %p411 = por %p409, %p410
      %s413 = sadd.s32 %s412, 1
      %p416 = scmp.eq.s32.totalorder %s38, 1
      %p417 = scmp.ne.s32.totalorder %s412, %s414
      %p418 = scmp.eq.s32.totalorder %s38, 0
      %p419 = por %p417, %p418
      %p420 = scmp.ne.s32.totalorder %s412, %s414
      %p421 = scmp.eq.s32.totalorder %s43, 1
      %p422 = por %p420, %p421
      %p423 = scmp.ne.s32.totalorder %s414, %s415
      %p424 = scmp.eq.s32.totalorder %s43, 0
      %p425 = por %p423, %p424
      %p426 = scmp.ne.s32.totalorder %s414, %s415
      %p427 = scmp.eq.s32.totalorder %s44, 1
      %p428 = por %p426, %p427
      %p430 = scmp.ne.s32.totalorder %s415, %s429
      %p431 = scmp.eq.s32.totalorder %s44, 0
      %p432 = por %p430, %p431
      %s433 = ssub.s32 %s45, %s57
      %p434 = scmp.eq.s32.totalorder %s433, 0
      %s436 = sadd.s32 %s435, 1
      %s437 = scalar_select %p434, %s435, %s436
      %p440 = pneg %p434
      %p441 = scmp.eq.s32.totalorder %s38, 1
      %p442 = por %p440, %p441
      %p443 = scmp.ne.s32.totalorder %s435, %s438
      %p444 = scmp.eq.s32.totalorder %s38, 0
      %p445 = por %p443, %p444
      %p446 = scmp.ne.s32.totalorder %s435, %s438
      %p447 = scmp.eq.s32.totalorder %s43, 1
      %p448 = por %p446, %p447
      %p449 = scmp.ne.s32.totalorder %s438, %s439
      %p450 = scmp.eq.s32.totalorder %s43, 0
      %p451 = por %p449, %p450
      %p452 = scmp.ne.s32.totalorder %s438, %s439
      %p453 = scmp.eq.s32.totalorder %s44, 1
      %p454 = por %p452, %p453
      %p456 = scmp.ne.s32.totalorder %s439, %s455
      %p457 = scmp.eq.s32.totalorder %s44, 0
      %p458 = por %p456, %p457
      %p459 = scmp.le.s32.totalorder 1, %s38
      %p460 = scmp.lt.s32.totalorder %s38, 3
      %p461 = pnand %p459, %p460
      %p462 = pneg %p461
      // Predicated region
      $region9: #{tpu_custom_call.1} parent=5 // pred_check
        _
      $region10: #{tpu_custom_call.1} parent=5 // pred_check_branch
        %464 = sbr.rel (%p461) target = $region12
      $region11: #{tpu_custom_call.1} parent=5 // pred_region
        %s465 = ssub.s32 %s38, 1
        // Predicated region
        $region13: #{tpu_custom_call.1} parent=11 // pred_check
          %p466 = pneg %p76
        $region14: #{tpu_custom_call.1} parent=11 // pred_check_branch
          %468 = sbr.rel (%p466) target = $region16
        $region15: #{tpu_custom_call.1} parent=11 // pred_region
          %s469 = smul.u32 2, %s47
          %s471 = ssub.s32 256, 256
          %472 = vsyncadd [#allocation5], %s471
          %s473 = smul.addr %s469, 128
          %s474 = scalar_lea.hbm %s0, %s473
          %s475 = sshll.u32 [#allocation4], 4
          %s476 = int_to_ptr.vmem [resolvable:$true] %s475
          %481 = dma.hbm_to_vmem [thread:$0]  %s474, 256, %s476, [#allocation5], 128, 128, 8
        $region16: #{tpu_custom_call.1} parent=11 // pred_fallthru
          _
        // Predicated region
        $region17: #{tpu_custom_call.1} parent=11 // pred_check
          %p482 = pneg %p102
        $region18: #{tpu_custom_call.1} parent=11 // pred_check_branch
          %484 = sbr.rel (%p482) target = $region20
        $region19: #{tpu_custom_call.1} parent=11 // pred_region
          %s485 = smul.u32 2, %s47
          %s487 = ssub.s32 256, 256
          %488 = vsyncadd [#allocation8], %s487
          %s489 = smul.addr %s485, 128
          %s490 = scalar_lea.hbm %s1, %s489
          %s491 = sshll.u32 [#allocation7], 4
          %s492 = int_to_ptr.vmem [resolvable:$true] %s491
          %497 = dma.hbm_to_vmem [thread:$0]  %s490, 256, %s492, [#allocation8], 128, 128, 8
        $region20: #{tpu_custom_call.1} parent=11 // pred_fallthru
          _
        // Predicated region
        $region21: #{tpu_custom_call.1} parent=11 // pred_check
          %p498 = pneg %p128
        $region22: #{tpu_custom_call.1} parent=11 // pred_check_branch
          %500 = sbr.rel (%p498) target = $region24
        $region23: #{tpu_custom_call.1} parent=11 // pred_region
          %s501 = smul.u32 2, %s47
          %s503 = ssub.s32 32, 32
          %504 = vsyncadd [#allocation8], %s503
          %s505 = smul.addr %s501, 16
          %s506 = scalar_lea.hbm %s2, %s505
          %s507 = sshll.u32 [#allocation9], 4
          %s508 = int_to_ptr.vmem [resolvable:$true] %s507
          %513 = dma.hbm_to_vmem [thread:$0]  %s506, 32, %s508, [#allocation8], 16, 16, 1
        $region24: #{tpu_custom_call.1} parent=11 // pred_fallthru
          _
        // Predicated region
        $region25: #{tpu_custom_call.1} parent=11 // pred_check
          %p514 = pneg %p154
        $region26: #{tpu_custom_call.1} parent=11 // pred_check_branch
          %516 = sbr.rel (%p514) target = $region28
        $region27: #{tpu_custom_call.1} parent=11 // pred_region
          %s517 = smul.u32 2, %s47
          %s519 = ssub.s32 256, 256
          %520 = vsyncadd [#allocation11], %s519
          %s521 = smul.addr %s517, 128
          %s522 = scalar_lea.hbm %s3, %s521
          %s523 = sshll.u32 [#allocation10], 4
          %s524 = int_to_ptr.vmem [resolvable:$true] %s523
          %529 = dma.hbm_to_vmem [thread:$0]  %s522, 256, %s524, [#allocation11], 128, 128, 8
        $region28: #{tpu_custom_call.1} parent=11 // pred_fallthru
          _
        // Predicated region
        $region29: #{tpu_custom_call.1} parent=11 // pred_check
          %p530 = pneg %p180
        $region30: #{tpu_custom_call.1} parent=11 // pred_check_branch
          %532 = sbr.rel (%p530) target = $region32
        $region31: #{tpu_custom_call.1} parent=11 // pred_region
          %s533 = smul.u32 2, %s47
          %s535 = ssub.s32 256, 256
          %536 = vsyncadd [#allocation11], %s535
          %s537 = smul.addr %s533, 128
          %s538 = scalar_lea.hbm %s4, %s537
          %s539 = sshll.u32 [#allocation12], 4
          %s540 = int_to_ptr.vmem [resolvable:$true] %s539
          %545 = dma.hbm_to_vmem [thread:$0]  %s538, 256, %s540, [#allocation11], 128, 128, 8
        $region32: #{tpu_custom_call.1} parent=11 // pred_fallthru
          _
        // Predicated region
        $region33: #{tpu_custom_call.1} parent=11 // pred_check
          %p546 = pneg %p383
        $region34: #{tpu_custom_call.1} parent=11 // pred_check_branch
          %548 = sbr.rel (%p546) target = $region36
        $region35: #{tpu_custom_call.1} parent=11 // pred_region
          %s550 = ssub.s32 32, 32
          %551 = vsyncadd [#allocation23], %s550
          %s553 = sshll.u32 [#allocation24], 4
          %s554 = int_to_ptr.vmem [resolvable:$true] %s553
          %556 = dma.hbm_to_vmem [thread:$0]  %s12, 32, %s554, [#allocation23]
        $region36: #{tpu_custom_call.1} parent=11 // pred_fallthru
          _
        // Predicated region
        $region37: #{tpu_custom_call.1} parent=11 // pred_check
          %p557 = pneg %p404
        $region38: #{tpu_custom_call.1} parent=11 // pred_check_branch
          %559 = sbr.rel (%p557) target = $region40
        $region39: #{tpu_custom_call.1} parent=11 // pred_region
          %s561 = ssub.s32 256, 256
          %562 = vsyncadd [#allocation26], %s561
          %s563 = sshll.u32 [#allocation25], 4
          %s564 = int_to_ptr.vmem [resolvable:$true] %s563
          %569 = dma.hbm_to_vmem [thread:$0]  %s13, 256, %s564, [#allocation26], 64, 64, 4
        $region40: #{tpu_custom_call.1} parent=11 // pred_fallthru
          _
        // Predicated region
        $region41: #{tpu_custom_call.1} parent=11 // pred_check
          %p570 = pneg %p425
        $region42: #{tpu_custom_call.1} parent=11 // pred_check_branch
          %572 = sbr.rel (%p570) target = $region44
        $region43: #{tpu_custom_call.1} parent=11 // pred_region
          %s574 = ssub.s32 16, 16
          %575 = vsyncadd [#allocation26], %s574
          %s577 = sshll.u32 [#allocation27], 4
          %s578 = int_to_ptr.vmem [resolvable:$true] %s577
          %580 = dma.hbm_to_vmem [thread:$0]  %s14, 16, %s578, [#allocation26]
        $region44: #{tpu_custom_call.1} parent=11 // pred_fallthru
          _
      $region12: #{tpu_custom_call.1} parent=5 // pred_fallthru
        _
      %p581 = scmp.lt.s32.totalorder %s38, 2
      // Predicated region
      $region45: #{tpu_custom_call.1} parent=5 // pred_check
        %p582 = pneg %p581
      $region46: #{tpu_custom_call.1} parent=5 // pred_check_branch
        %584 = sbr.rel (%p582) target = $region48
      $region47: #{tpu_custom_call.1} parent=5 // pred_region
        // Predicated region
        $region49: #{tpu_custom_call.1} parent=47 // pred_check
          %p585 = pneg %p200
        $region50: #{tpu_custom_call.1} parent=47 // pred_check_branch
          %587 = sbr.rel (%p585) target = $region52
        $region51: #{tpu_custom_call.1} parent=47 // pred_region
          %s588 = sand.u32 %s38, 1
          %s589 = scalar_lea.sflag [#allocation14], %s588
          %s590 = sand.u32 %s190, 1
          %s591 = smul.addr %s590, 16
          %s592 = scalar_lea.vmem [#allocation13], %s591
          %s594 = ssub.s32 256, 256
          %595 = vsyncadd %s589, %s594
          %s596 = smul.addr %s46, 4
          %s597 = smul.addr %s596, 64
          %s598 = scalar_lea.hbm %s5, %s597
          %s599 = sshll.u32 %s592, 4
          %s600 = int_to_ptr.vmem [resolvable:$true] %s599
          %605 = dma.hbm_to_vmem [thread:$0]  %s598, 256, %s600, %s589, 64, 64, 4
        $region52: #{tpu_custom_call.1} parent=47 // pred_fallthru
          _
        // Predicated region
        $region53: #{tpu_custom_call.1} parent=47 // pred_check
          %p606 = pneg %p226
        $region54: #{tpu_custom_call.1} parent=47 // pred_check_branch
          %608 = sbr.rel (%p606) target = $region56
        $region55: #{tpu_custom_call.1} parent=47 // pred_region
          %s609 = sand.u32 %s38, 1
          %s610 = scalar_lea.sflag [#allocation14], %s609
          %s611 = sand.u32 %s216, 1
          %s612 = smul.addr %s611, 16
          %s613 = scalar_lea.vmem [#allocation15], %s612
          %s615 = ssub.s32 256, 256
          %616 = vsyncadd %s610, %s615
          %s617 = smul.addr %s46, 4
          %s618 = smul.addr %s617, 64
          %s619 = scalar_lea.hbm %s6, %s618
          %s620 = sshll.u32 %s613, 4
          %s621 = int_to_ptr.vmem [resolvable:$true] %s620
          %626 = dma.hbm_to_vmem [thread:$0]  %s619, 256, %s621, %s610, 64, 64, 4
        $region56: #{tpu_custom_call.1} parent=47 // pred_fallthru
          _
        // Predicated region
        $region57: #{tpu_custom_call.1} parent=47 // pred_check
          %p627 = pneg %p252
        $region58: #{tpu_custom_call.1} parent=47 // pred_check_branch
          %629 = sbr.rel (%p627) target = $region60
        $region59: #{tpu_custom_call.1} parent=47 // pred_region
          %s630 = sand.u32 %s38, 1
          %s631 = scalar_lea.sflag [#allocation17], %s630
          %s632 = sand.u32 %s242, 1
          %s633 = smul.addr %s632, 16
          %s634 = scalar_lea.vmem [#allocation16], %s633
          %s636 = ssub.s32 256, 256
          %637 = vsyncadd %s631, %s636
          %s638 = smul.addr %s46, 4
          %s639 = smul.addr %s638, 64
          %s640 = scalar_lea.hbm %s7, %s639
          %s641 = sshll.u32 %s634, 4
          %s642 = int_to_ptr.vmem [resolvable:$true] %s641
          %647 = dma.hbm_to_vmem [thread:$0]  %s640, 256, %s642, %s631, 64, 64, 4
        $region60: #{tpu_custom_call.1} parent=47 // pred_fallthru
          _
        // Predicated region
        $region61: #{tpu_custom_call.1} parent=47 // pred_check
          %p648 = pneg %p278
        $region62: #{tpu_custom_call.1} parent=47 // pred_check_branch
          %650 = sbr.rel (%p648) target = $region64
        $region63: #{tpu_custom_call.1} parent=47 // pred_region
          %s651 = sand.u32 %s38, 1
          %s652 = scalar_lea.sflag [#allocation17], %s651
          %s653 = sand.u32 %s268, 1
          %s654 = smul.addr %s653, 64
          %s655 = scalar_lea.vmem [#allocation18], %s654
          %s657 = ssub.s32 1024, 1024
          %658 = vsyncadd %s652, %s657
          %s659 = smul.addr %s46, 16
          %s660 = smul.addr %s659, 64
          %s661 = scalar_lea.hbm %s8, %s660
          %s662 = sshll.u32 %s655, 4
          %s663 = int_to_ptr.vmem [resolvable:$true] %s662
          %668 = dma.hbm_to_vmem [thread:$0]  %s661, 1024, %s663, %s652, 64, 64, 4
        $region64: #{tpu_custom_call.1} parent=47 // pred_fallthru
          _
        // Predicated region
        $region65: #{tpu_custom_call.1} parent=47 // pred_check
          %p669 = pneg %p304
        $region66: #{tpu_custom_call.1} parent=47 // pred_check_branch
          %671 = sbr.rel (%p669) target = $region68
        $region67: #{tpu_custom_call.1} parent=47 // pred_region
          %s672 = sand.u32 %s38, 1
          %s673 = scalar_lea.sflag [#allocation20], %s672
          %s674 = sand.u32 %s294, 1
          %s675 = scalar_lea.vmem [#allocation19], %s674
          %s677 = ssub.s32 16, 16
          %678 = vsyncadd %s673, %s677
          %s679 = smul.addr %s46, 16
          %s680 = scalar_lea.hbm %s9, %s679
          %s682 = sshll.u32 %s675, 4
          %s683 = int_to_ptr.vmem [resolvable:$true] %s682
          %685 = dma.hbm_to_vmem [thread:$0]  %s680, 16, %s683, %s673
        $region68: #{tpu_custom_call.1} parent=47 // pred_fallthru
          _
        // Predicated region
        $region69: #{tpu_custom_call.1} parent=47 // pred_check
          %p686 = pneg %p330
        $region70: #{tpu_custom_call.1} parent=47 // pred_check_branch
          %688 = sbr.rel (%p686) target = $region72
        $region71: #{tpu_custom_call.1} parent=47 // pred_region
          %s689 = sand.u32 %s38, 1
          %s690 = scalar_lea.sflag [#allocation20], %s689
          %s691 = sand.u32 %s320, 1
          %s692 = scalar_lea.vmem [#allocation21], %s691
          %s694 = ssub.s32 16, 16
          %695 = vsyncadd %s690, %s694
          %s696 = smul.addr %s46, 16
          %s697 = scalar_lea.hbm %s10, %s696
          %s699 = sshll.u32 %s692, 4
          %s700 = int_to_ptr.vmem [resolvable:$true] %s699
          %702 = dma.hbm_to_vmem [thread:$0]  %s697, 16, %s700, %s690
        $region72: #{tpu_custom_call.1} parent=47 // pred_fallthru
          _
        // Predicated region
        $region73: #{tpu_custom_call.1} parent=47 // pred_check
          %p703 = pneg %p356
        $region74: #{tpu_custom_call.1} parent=47 // pred_check_branch
          %705 = sbr.rel (%p703) target = $region76
        $region75: #{tpu_custom_call.1} parent=47 // pred_region
          %s706 = sand.u32 %s38, 1
          %s707 = scalar_lea.sflag [#allocation23], %s706
          %s708 = sand.u32 %s346, 1
          %s709 = smul.addr %s708, 8
          %s710 = scalar_lea.vmem [#allocation22], %s709
          %s712 = ssub.s32 128, 128
          %713 = vsyncadd %s707, %s712
          %s714 = smul.addr %s46, 128
          %s715 = scalar_lea.hbm %s11, %s714
          %s717 = sshll.u32 %s710, 4
          %s718 = int_to_ptr.vmem [resolvable:$true] %s717
          %720 = dma.hbm_to_vmem [thread:$0]  %s715, 128, %s718, %s707
        $region76: #{tpu_custom_call.1} parent=47 // pred_fallthru
          _
      $region48: #{tpu_custom_call.1} parent=5 // pred_fallthru
        _
      %p721 = scmp.le.s32.totalorder 1, %s38
      %p722 = scmp.lt.s32.totalorder %s38, 3
      %p723 = pnand %p721, %p722
      %p724 = pneg %p723
      // Predicated region
      $region77: #{tpu_custom_call.1} parent=5 // pred_check
        _
      $region78: #{tpu_custom_call.1} parent=5 // pred_check_branch
        %726 = sbr.rel (%p723) target = $region80
      $region79: #{tpu_custom_call.1} parent=5 // pred_region
        %s727 = ssub.s32 %s38, 1
        // Predicated region
        $region81: #{tpu_custom_call.1} parent=79 // pred_check
          %p728 = pneg %p76
        $region82: #{tpu_custom_call.1} parent=79 // pred_check_branch
          %730 = sbr.rel (%p728) target = $region84
        $region83: #{tpu_custom_call.1} parent=79 // pred_region
          %731 = dma.done [#allocation5], 256
        $region84: #{tpu_custom_call.1} parent=79 // pred_fallthru
          _
        // Predicated region
        $region85: #{tpu_custom_call.1} parent=79 // pred_check
          %p732 = pneg %p102
        $region86: #{tpu_custom_call.1} parent=79 // pred_check_branch
          %734 = sbr.rel (%p732) target = $region88
        $region87: #{tpu_custom_call.1} parent=79 // pred_region
          %735 = dma.done [#allocation8], 256
        $region88: #{tpu_custom_call.1} parent=79 // pred_fallthru
          _
        // Predicated region
        $region89: #{tpu_custom_call.1} parent=79 // pred_check
          %p736 = pneg %p128
        $region90: #{tpu_custom_call.1} parent=79 // pred_check_branch
          %738 = sbr.rel (%p736) target = $region92
        $region91: #{tpu_custom_call.1} parent=79 // pred_region
          %739 = dma.done [#allocation8], 32
        $region92: #{tpu_custom_call.1} parent=79 // pred_fallthru
          _
        // Predicated region
        $region93: #{tpu_custom_call.1} parent=79 // pred_check
          %p740 = pneg %p154
        $region94: #{tpu_custom_call.1} parent=79 // pred_check_branch
          %742 = sbr.rel (%p740) target = $region96
        $region95: #{tpu_custom_call.1} parent=79 // pred_region
          %743 = dma.done [#allocation11], 256
        $region96: #{tpu_custom_call.1} parent=79 // pred_fallthru
          _
        // Predicated region
        $region97: #{tpu_custom_call.1} parent=79 // pred_check
          %p744 = pneg %p180
        $region98: #{tpu_custom_call.1} parent=79 // pred_check_branch
          %746 = sbr.rel (%p744) target = $region100
        $region99: #{tpu_custom_call.1} parent=79 // pred_region
          %747 = dma.done [#allocation11], 256
        $region100: #{tpu_custom_call.1} parent=79 // pred_fallthru
          _
        %s748 = sand.u32 %s43, 1
        %s749 = scalar_lea.sflag [#allocation14], %s748
        %s750 = sand.u32 %s193, 1
        %s751 = smul.addr %s750, 16
        %s752 = scalar_lea.vmem [#allocation13], %s751
        // Predicated region
        $region101: #{tpu_custom_call.1} parent=79 // pred_check
          %p753 = pneg %p206
        $region102: #{tpu_custom_call.1} parent=79 // pred_check_branch
          %755 = sbr.rel (%p753) target = $region104
        $region103: #{tpu_custom_call.1} parent=79 // pred_region
          %756 = dma.done %s749, 256
        $region104: #{tpu_custom_call.1} parent=79 // pred_fallthru
          _
        %s757 = sand.u32 %s43, 1
        %s758 = scalar_lea.sflag [#allocation14], %s757
        %s759 = sand.u32 %s219, 1
        %s760 = smul.addr %s759, 16
        %s761 = scalar_lea.vmem [#allocation15], %s760
        // Predicated region
        $region105: #{tpu_custom_call.1} parent=79 // pred_check
          %p762 = pneg %p232
        $region106: #{tpu_custom_call.1} parent=79 // pred_check_branch
          %764 = sbr.rel (%p762) target = $region108
        $region107: #{tpu_custom_call.1} parent=79 // pred_region
          %765 = dma.done %s758, 256
        $region108: #{tpu_custom_call.1} parent=79 // pred_fallthru
          _
        %s766 = sand.u32 %s43, 1
        %s767 = scalar_lea.sflag [#allocation17], %s766
        %s768 = sand.u32 %s245, 1
        %s769 = smul.addr %s768, 16
        %s770 = scalar_lea.vmem [#allocation16], %s769
        // Predicated region
        $region109: #{tpu_custom_call.1} parent=79 // pred_check
          %p771 = pneg %p258
        $region110: #{tpu_custom_call.1} parent=79 // pred_check_branch
          %773 = sbr.rel (%p771) target = $region112
        $region111: #{tpu_custom_call.1} parent=79 // pred_region
          %774 = dma.done %s767, 256
        $region112: #{tpu_custom_call.1} parent=79 // pred_fallthru
          _
        %s775 = sand.u32 %s43, 1
        %s776 = scalar_lea.sflag [#allocation17], %s775
        %s777 = sand.u32 %s271, 1
        %s778 = smul.addr %s777, 64
        %s779 = scalar_lea.vmem [#allocation18], %s778
        // Predicated region
        $region113: #{tpu_custom_call.1} parent=79 // pred_check
          %p780 = pneg %p284
        $region114: #{tpu_custom_call.1} parent=79 // pred_check_branch
          %782 = sbr.rel (%p780) target = $region116
        $region115: #{tpu_custom_call.1} parent=79 // pred_region
          %783 = dma.done %s776, 1024
        $region116: #{tpu_custom_call.1} parent=79 // pred_fallthru
          _
        %s784 = sand.u32 %s43, 1
        %s785 = scalar_lea.sflag [#allocation20], %s784
        %s786 = sand.u32 %s297, 1
        %s787 = scalar_lea.vmem [#allocation19], %s786
        // Predicated region
        $region117: #{tpu_custom_call.1} parent=79 // pred_check
          %p788 = pneg %p310
        $region118: #{tpu_custom_call.1} parent=79 // pred_check_branch
          %790 = sbr.rel (%p788) target = $region120
        $region119: #{tpu_custom_call.1} parent=79 // pred_region
          %791 = dma.done %s785, 16
        $region120: #{tpu_custom_call.1} parent=79 // pred_fallthru
          _
        %s792 = sand.u32 %s43, 1
        %s793 = scalar_lea.sflag [#allocation20], %s792
        %s794 = sand.u32 %s323, 1
        %s795 = scalar_lea.vmem [#allocation21], %s794
        // Predicated region
        $region121: #{tpu_custom_call.1} parent=79 // pred_check
          %p796 = pneg %p336
        $region122: #{tpu_custom_call.1} parent=79 // pred_check_branch
          %798 = sbr.rel (%p796) target = $region124
        $region123: #{tpu_custom_call.1} parent=79 // pred_region
          %799 = dma.done %s793, 16
        $region124: #{tpu_custom_call.1} parent=79 // pred_fallthru
          _
        %s800 = sand.u32 %s43, 1
        %s801 = scalar_lea.sflag [#allocation23], %s800
        %s802 = sand.u32 %s349, 1
        %s803 = smul.addr %s802, 8
        %s804 = scalar_lea.vmem [#allocation22], %s803
        // Predicated region
        $region125: #{tpu_custom_call.1} parent=79 // pred_check
          %p805 = pneg %p362
        $region126: #{tpu_custom_call.1} parent=79 // pred_check_branch
          %807 = sbr.rel (%p805) target = $region128
        $region127: #{tpu_custom_call.1} parent=79 // pred_region
          %808 = dma.done %s801, 128
        $region128: #{tpu_custom_call.1} parent=79 // pred_fallthru
          _
        // Predicated region
        $region129: #{tpu_custom_call.1} parent=79 // pred_check
          %p809 = pneg %p383
        $region130: #{tpu_custom_call.1} parent=79 // pred_check_branch
          %811 = sbr.rel (%p809) target = $region132
        $region131: #{tpu_custom_call.1} parent=79 // pred_region
          %812 = dma.done [#allocation23], 32
        $region132: #{tpu_custom_call.1} parent=79 // pred_fallthru
          _
        // Predicated region
        $region133: #{tpu_custom_call.1} parent=79 // pred_check
          %p813 = pneg %p404
        $region134: #{tpu_custom_call.1} parent=79 // pred_check_branch
          %815 = sbr.rel (%p813) target = $region136
        $region135: #{tpu_custom_call.1} parent=79 // pred_region
          %816 = dma.done [#allocation26], 256
        $region136: #{tpu_custom_call.1} parent=79 // pred_fallthru
          _
        // Predicated region
        $region137: #{tpu_custom_call.1} parent=79 // pred_check
          %p817 = pneg %p425
        $region138: #{tpu_custom_call.1} parent=79 // pred_check_branch
          %819 = sbr.rel (%p817) target = $region140
        $region139: #{tpu_custom_call.1} parent=79 // pred_region
          %820 = dma.done [#allocation26], 16
        $region140: #{tpu_custom_call.1} parent=79 // pred_fallthru
          _
        %p821 = pneg %p76
        %p822 = pneg %p73
        %p823 = pneg %p102
        %p824 = pneg %p99
        %p825 = pneg %p128
        %p826 = pneg %p125
        %p827 = pneg %p154
        %p828 = pneg %p151
        %p829 = pneg %p180
        %p830 = pneg %p177
        %s831 = sand.u32 %s43, 1
        %s832 = scalar_lea.sflag [#allocation14], %s831
        %s833 = sand.u32 %s193, 1
        %s834 = smul.addr %s833, 16
        %s835 = scalar_lea.vmem [#allocation13], %s834
        %p836 = pneg %p206
        %p837 = pneg %p203
        %s838 = sand.u32 %s43, 1
        %s839 = scalar_lea.sflag [#allocation14], %s838
        %s840 = sand.u32 %s219, 1
        %s841 = smul.addr %s840, 16
        %s842 = scalar_lea.vmem [#allocation15], %s841
        %p843 = pneg %p232
        %p844 = pneg %p229
        %s845 = sand.u32 %s43, 1
        %s846 = scalar_lea.sflag [#allocation17], %s845
        %s847 = sand.u32 %s245, 1
        %s848 = smul.addr %s847, 16
        %s849 = scalar_lea.vmem [#allocation16], %s848
        %p850 = pneg %p258
        %p851 = pneg %p255
        %s852 = sand.u32 %s43, 1
        %s853 = scalar_lea.sflag [#allocation17], %s852
        %s854 = sand.u32 %s271, 1
        %s855 = smul.addr %s854, 64
        %s856 = scalar_lea.vmem [#allocation18], %s855
        %p857 = pneg %p284
        %p858 = pneg %p281
        %s859 = sand.u32 %s43, 1
        %s860 = scalar_lea.sflag [#allocation20], %s859
        %s861 = sand.u32 %s297, 1
        %s862 = scalar_lea.vmem [#allocation19], %s861
        %p863 = pneg %p310
        %p864 = pneg %p307
        %s865 = sand.u32 %s43, 1
        %s866 = scalar_lea.sflag [#allocation20], %s865
        %s867 = sand.u32 %s323, 1
        %s868 = scalar_lea.vmem [#allocation21], %s867
        %p869 = pneg %p336
        %p870 = pneg %p333
        %s871 = sand.u32 %s43, 1
        %s872 = scalar_lea.sflag [#allocation23], %s871
        %s873 = sand.u32 %s349, 1
        %s874 = smul.addr %s873, 8
        %s875 = scalar_lea.vmem [#allocation22], %s874
        %p876 = pneg %p362
        %p877 = pneg %p359
        %p878 = pneg %p383
        %p879 = pneg %p380
        %p880 = pneg %p404
        %p881 = pneg %p401
        %p882 = pneg %p425
        %p883 = pneg %p422
        %p884 = pneg %p451
        %p885 = pneg %p448
        %s886 = smul.u32 2, %s47
        %s887 = smul.u32 2, %s47
        %s888 = smul.u32 2, %s47
        %s889 = smul.u32 2, %s47
        %s890 = smul.u32 2, %s47
        %p892 = scmp.eq.s32.totalorder %s48, 0
        // Predicated region
        $region141: #{tpu_custom_call.1} parent=79 // pred_check
          %p893 = pneg %p892
        $region142: #{tpu_custom_call.1} parent=79 // pred_check_branch
          %895 = sbr.rel (%p893) target = $region144
        $region143: #{tpu_custom_call.1} parent=79 // pred_region
          %v896 = vld [vmem:[#allocation4] sm:$0xff]
          %v897 = vld [vmem:[#allocation4 + $0x8] sm:$0xff]
          %vm898 = vcmask 261120
          %899 = vst.msk [vmem:[#allocation2] sm:$0xff] %vm898, %v896
          %900 = vst.msk [vmem:[#allocation2 + $0x8] sm:$0xff] %vm898, %v897
          %v901 = vlaneseq
          %v902 = vshrl.u32 %v901, 7
          %v903 = vlaneseq
          %v904 = vand.u32 %v903, 127
          %vm905 = vcmp.eq.s32.totalorder %v902, %v904
          %v906 = vsel %vm905, -1e+09, 0.0
          %v907 = vld [vmem:[#allocation10] sm:$0xff]
          %vm908 = vcmp.gt.f32.partialorder %v907, 0.5
          %v909 = vld [vmem:[#allocation9] sm:$0x1]
          %vm910 = vcmp.gt.f32.partialorder %v909, 0.5
          %v911 = vsel %vm908, 1, 0
          %912 = vset.pattern.permute.xlu0 0
          %913 = vperm.xlu0 %912, %v911
          %v914 = vpop.permute.xlu0 %913
          %vm915 = vcmp.eq.s32.totalorder %v914, 1
          %v916 = vsel %vm910, 1, 0
          %v917 = vlaneseq
          %v918 = vshrl.u32 %v917, 7
          %v919 = vsub.s32 0, %v918
          %v920 = vrot.slane %v916, %v919
          %vm921 = vcmp.eq.s32.totalorder %v920, 1
          %vm922 = vmor %vm915, %vm921
          %v923 = vsel %vm922, -1e+09, %v906
          %vm924 = vcmask 64512
          %925 = vst.msk [vmem:[#allocation3] sm:$0xff] %vm924, %v923
          %s926 = scalar_lea.vmem [#allocation10], 8
          %v927 = vld [vmem:[%s926] sm:$0xff]
          %vm928 = vcmp.gt.f32.partialorder %v927, 0.5
          %s929 = scalar_lea.vmem [#allocation9], 1
          %v930 = vld [vmem:[%s929] sm:$0x1]
          %vm931 = vcmp.gt.f32.partialorder %v930, 0.5
          %v932 = vsel %vm928, 1, 0
          %933 = vset.pattern.permute.xlu0 0
          %934 = vperm.xlu0 %933, %v932
          %v935 = vpop.permute.xlu0 %934
          %vm936 = vcmp.eq.s32.totalorder %v935, 1
          %v937 = vsel %vm931, 1, 0
          %v938 = vlaneseq
          %v939 = vshrl.u32 %v938, 7
          %v940 = vsub.s32 0, %v939
          %v941 = vrot.slane %v937, %v940
          %vm942 = vcmp.eq.s32.totalorder %v941, 1
          %vm943 = vmor %vm936, %vm942
          %v944 = vsel %vm943, -1e+09, %v906
          %s945 = scalar_lea.vmem [#allocation3], 8
          %946 = vst.msk [vmem:[%s945] sm:$0xff] %vm924, %v944
        $region144: #{tpu_custom_call.1} parent=79 // pred_fallthru
          _
        %v947 = vld [vmem:[#allocation2] sm:$0xff]
        %v948 = vld [vmem:[#allocation2 + $0x8] sm:$0xff]
        %v949 = vld [vmem:[#allocation7] sm:$0xff]
        %v950 = vld [vmem:[#allocation7 + $0x8] sm:$0xff]
        %v951 = vadd.f32 %v947, %v949
        %v952 = vadd.f32 %v948, %v950
        %v953 = vpack.c.bf16 %v952, %v951
        %v954 = vld [vmem:[%s752] sm:$0xf]
        %v955 = vld [vmem:[%s752 + $0x4] sm:$0xf]
        %v956 = vld [vmem:[%s752 + $0x8] sm:$0xf]
        %v957 = vld [vmem:[%s752 + $0xc] sm:$0xf]
        %v958 = vld [vmem:[%s787] sm:$0x1]
        %v960 = vlaneseq
        %v961 = vshrl.u32 %v960, 7
        %v962 = vsub.s32 0, %v961
        %v963 = vrot.slane %v958, %v962
        %v969 = vunpack.c.l.b16 %v954
        %v970 = vunpack.c.l.b16 %v955
        %v971 = vunpack.c.l.b16 %v956
        %v972 = vunpack.c.l.b16 %v957
        %v973 = vpack.c.b16 %v970, %v969
        %v974 = vpack.c.b16 %v972, %v971
        %vm977 = vcmask 261120
        %v979 = vsel %vm977, %v953, 0
        %981 = vmatprep.subr.bf16.mxu0 0
        %982 = vmatpush1.bf16.msra.mxu0 %v973
        %983 = vmatprep.subr.bf16.mxu0 0
        %984 = vmatpush1.bf16.msra.mxu0 %v974
        %985 = vmatprep.subr.bf16.mxu0 0
        %986 = vmatpush1.bf16.msra.mxu0 0
        %987 = vmatprep.subr.bf16.mxu0 0
        %988 = vmatpush1.bf16.msra.mxu0 0
        %989 = vmatprep.subr.bf16.mxu0 0
        %990 = vmatpush1.bf16.msra.mxu0 0
        %991 = vmatprep.subr.bf16.mxu0 0
        %992 = vmatpush1.bf16.msra.mxu0 0
        %993 = vmatprep.subr.bf16.mxu0 0
        %994 = vmatpush1.bf16.msra.mxu0 0
        %995 = vmatprep.subr.bf16.mxu0 0
        %996 = vmatpush1.bf16.msra.mxu0 0
        %997 = vmatprep.subr.bf16.mxu0 0
        %998 = vmatpush1.bf16.msra.mxu0 0
        %999 = vmatprep.subr.bf16.mxu0 0
        %1000 = vmatpush1.bf16.msra.mxu0 0
        %1001 = vmatprep.subr.bf16.mxu0 0
        %1002 = vmatpush1.bf16.msra.mxu0 0
        %1003 = vmatprep.subr.bf16.mxu0 0
        %1004 = vmatpush1.bf16.msra.mxu0 0
        %1005 = vmatprep.subr.bf16.mxu0 0
        %1006 = vmatpush1.bf16.msra.mxu0 0
        %1007 = vmatprep.subr.bf16.mxu0 0
        %1008 = vmatpush1.bf16.msra.mxu0 0
        %1009 = vmatprep.subr.bf16.mxu0 0
        %1010 = vmatpush1.bf16.msra.mxu0 0
        %1011 = vmatprep.subr.bf16.mxu0 0
        %1012 = vmatpush1.bf16.msra.mxu0 0
        %1013 = vmatprep.mubr.bf16.mxu0 0
        %1014 = vmatmul.mubr.bf16.gmra.mrb[0].mxu0 %v979
        %v1015 = vpop.f32.mrb[0].mxu0
        %v1016 = vadd.f32 %v963, %v1015
        %v1017 = vpop.f32.mrb[0].mxu0
        %v1018 = vpop.f32.mrb[0].mxu0
        %v1019 = vadd.f32 %v963, %v1018
        %v1020 = vpop.f32.mrb[0].mxu0
        %1021 = vdwg.mxu0
        %v1022 = vpack.c.bf16 %v1019, %v1016
        %v1023 = vld [vmem:[#allocation3] sm:$0xff]
        %1025 = vrot.lane.b32.xlu0 %v1022, 96
        %v1026 = vpop.permute.xlu0 %1025
        %vm1027 = vcmask 64512
        %v1029 = vsel %vm1027, %v1022, 0
        %v1032 = vsel %vm1027, %v1026, 0
        %1034 = vmatprep.subr.bf16.mxu0 0
        %1035 = vmatpush1.bf16.xpose.msra.mxu0 %v1032
        %1036 = vmatprep.subr.bf16.mxu0 0
        %1037 = vmatpush1.bf16.xpose.msra.mxu0 0
        %1038 = vmatprep.subr.bf16.mxu0 0
        %1039 = vmatpush1.bf16.xpose.msra.mxu0 0
        %1040 = vmatprep.subr.bf16.mxu0 0
        %1041 = vmatpush1.bf16.xpose.msra.mxu0 0
        %1042 = vmatprep.subr.bf16.mxu0 0
        %1043 = vmatpush1.bf16.xpose.msra.mxu0 0
        %1044 = vmatprep.subr.bf16.mxu0 0
        %1045 = vmatpush1.bf16.xpose.msra.mxu0 0
        %1046 = vmatprep.subr.bf16.mxu0 0
        %1047 = vmatpush1.bf16.xpose.msra.mxu0 0
        %1048 = vmatprep.subr.bf16.mxu0 0
        %1049 = vmatpush1.bf16.xpose.msra.mxu0 0
        %1050 = vmatprep.subr.bf16.mxu0 0
        %1051 = vmatpush1.bf16.xpose.msra.mxu0 0
        %1052 = vmatprep.subr.bf16.mxu0 0
        %1053 = vmatpush1.bf16.xpose.msra.mxu0 0
        %1054 = vmatprep.subr.bf16.mxu0 0
        %1055 = vmatpush1.bf16.xpose.msra.mxu0 0
        %1056 = vmatprep.subr.bf16.mxu0 0
        %1057 = vmatpush1.bf16.xpose.msra.mxu0 0
        %1058 = vmatprep.subr.bf16.mxu0 0
        %1059 = vmatpush1.bf16.xpose.msra.mxu0 0
        %1060 = vmatprep.subr.bf16.mxu0 0
        %1061 = vmatpush1.bf16.xpose.msra.mxu0 0
        %1062 = vmatprep.subr.bf16.mxu0 0
        %1063 = vmatpush1.bf16.xpose.msra.mxu0 0
        %1064 = vmatprep.subr.bf16.mxu0 0
        %1065 = vmatpush1.bf16.xpose.msra.mxu0 0
        %1066 = vmatprep.mubr.bf16.mxu0 0
        %1067 = vmatmul.mubr.bf16.gmra.mrb[0].mxu0 %v1029
        %v1068 = vpop.f32.mrb[0].mxu0
        %v1069 = vadd.f32 %v1023, %v1068
        %v1070 = vpop.f32.mrb[0].mxu0
        %v1071 = vpop.f32.mrb[0].mxu0
        %v1072 = vpop.f32.mrb[0].mxu0
        %1073 = vdwg.mxu0
        %v1074 = vsel %vm1027, %v1069, -inf
        %1075 = vmax.xlane.f32.xlu0 %v1074
        %v1076 = vpop.xlane.xlu0 %1075
        %v1077 = vsub.f32 %v1069, %v1076
        %v1078 = vmul.f32 %v1077, 1.442695
        %v1079 = vpow.pop %v1078
        %v1080 = vsel %vm1027, %v1079, 0.0
        %1081 = vadd.xlane.f32.xlu0 %v1080
        %v1082 = vpop.xlane.xlu0 %1081
        %v1083 = vrcp.pop %v1082
        %v1084 = vmul.f32 %v1079, %v1083
        %v1085 = vpack.c.bf16 %v1084, %v1084
        %1086 = vrot.lane.b32.xlu0 %v1022, 64
        %v1087 = vpop.permute.xlu0 %1086
        %v1089 = vsel %vm1027, %v1085, 0
        %vm1091 = vcmask 1043456
        %v1093 = vsel %vm1091, %v1087, 0
        %1095 = vmatprep.subr.bf16.mxu0 0
        %1096 = vmatpush1.bf16.msra.mxu0 %v1093
        %1097 = vmatprep.subr.bf16.mxu0 0
        %1098 = vmatpush1.bf16.msra.mxu0 0
        %1099 = vmatprep.subr.bf16.mxu0 0
        %1100 = vmatpush1.bf16.msra.mxu0 0
        %1101 = vmatprep.subr.bf16.mxu0 0
        %1102 = vmatpush1.bf16.msra.mxu0 0
        %1103 = vmatprep.subr.bf16.mxu0 0
        %1104 = vmatpush1.bf16.msra.mxu0 0
        %1105 = vmatprep.subr.bf16.mxu0 0
        %1106 = vmatpush1.bf16.msra.mxu0 0
        %1107 = vmatprep.subr.bf16.mxu0 0
        %1108 = vmatpush1.bf16.msra.mxu0 0
        %1109 = vmatprep.subr.bf16.mxu0 0
        %1110 = vmatpush1.bf16.msra.mxu0 0
        %1111 = vmatprep.subr.bf16.mxu0 0
        %1112 = vmatpush1.bf16.msra.mxu0 0
        %1113 = vmatprep.subr.bf16.mxu0 0
        %1114 = vmatpush1.bf16.msra.mxu0 0
        %1115 = vmatprep.subr.bf16.mxu0 0
        %1116 = vmatpush1.bf16.msra.mxu0 0
        %1117 = vmatprep.subr.bf16.mxu0 0
        %1118 = vmatpush1.bf16.msra.mxu0 0
        %1119 = vmatprep.subr.bf16.mxu0 0
        %1120 = vmatpush1.bf16.msra.mxu0 0
        %1121 = vmatprep.subr.bf16.mxu0 0
        %1122 = vmatpush1.bf16.msra.mxu0 0
        %1123 = vmatprep.subr.bf16.mxu0 0
        %1124 = vmatpush1.bf16.msra.mxu0 0
        %1125 = vmatprep.subr.bf16.mxu0 0
        %1126 = vmatpush1.bf16.msra.mxu0 0
        %1127 = vmatprep.mubr.bf16.mxu0 0
        %1128 = vmatmul.mubr.bf16.gmra.mrb[0].mxu0 %v1089
        %v1129 = vpop.f32.mrb[0].mxu0
        %v1130 = vadd.f32 0.0, %v1129
        %v1131 = vpop.f32.mrb[0].mxu0
        %v1132 = vpop.f32.mrb[0].mxu0
        %v1133 = vpop.f32.mrb[0].mxu0
        %1134 = vdwg.mxu0
        %1135 = vrot.lane.b32.xlu0 %v1022, 120
        %v1136 = vpop.permute.xlu0 %1135
        %1137 = vrot.lane.b32.xlu0 %v1022, 88
        %v1138 = vpop.permute.xlu0 %1137
        %v1140 = vsel %vm1027, %v1136, 0
        %v1143 = vsel %vm1027, %v1138, 0
        %1145 = vmatprep.subr.bf16.mxu0 0
        %1146 = vmatpush1.bf16.xpose.msra.mxu0 %v1143
        %1147 = vmatprep.subr.bf16.mxu0 0
        %1148 = vmatpush1.bf16.xpose.msra.mxu0 0
        %1149 = vmatprep.subr.bf16.mxu0 0
        %1150 = vmatpush1.bf16.xpose.msra.mxu0 0
        %1151 = vmatprep.subr.bf16.mxu0 0
        %1152 = vmatpush1.bf16.xpose.msra.mxu0 0
        %1153 = vmatprep.subr.bf16.mxu0 0
        %1154 = vmatpush1.bf16.xpose.msra.mxu0 0
        %1155 = vmatprep.subr.bf16.mxu0 0
        %1156 = vmatpush1.bf16.xpose.msra.mxu0 0
        %1157 = vmatprep.subr.bf16.mxu0 0
        %1158 = vmatpush1.bf16.xpose.msra.mxu0 0
        %1159 = vmatprep.subr.bf16.mxu0 0
        %1160 = vmatpush1.bf16.xpose.msra.mxu0 0
        %1161 = vmatprep.subr.bf16.mxu0 0
        %1162 = vmatpush1.bf16.xpose.msra.mxu0 0
        %1163 = vmatprep.subr.bf16.mxu0 0
        %1164 = vmatpush1.bf16.xpose.msra.mxu0 0
        %1165 = vmatprep.subr.bf16.mxu0 0
        %1166 = vmatpush1.bf16.xpose.msra.mxu0 0
        %1167 = vmatprep.subr.bf16.mxu0 0
        %1168 = vmatpush1.bf16.xpose.msra.mxu0 0
        %1169 = vmatprep.subr.bf16.mxu0 0
        %1170 = vmatpush1.bf16.xpose.msra.mxu0 0
        %1171 = vmatprep.subr.bf16.mxu0 0
        %1172 = vmatpush1.bf16.xpose.msra.mxu0 0
        %1173 = vmatprep.subr.bf16.mxu0 0
        %1174 = vmatpush1.bf16.xpose.msra.mxu0 0
        %1175 = vmatprep.subr.bf16.mxu0 0
        %1176 = vmatpush1.bf16.xpose.msra.mxu0 0
        %1177 = vmatprep.mubr.bf16.mxu0 0
        %1178 = vmatmul.mubr.bf16.gmra.mrb[0].mxu0 %v1140
        %v1179 = vpop.f32.mrb[0].mxu0
        %v1180 = vadd.f32 %v1023, %v1179
        %v1181 = vpop.f32.mrb[0].mxu0
        %v1182 = vpop.f32.mrb[0].mxu0
        %v1183 = vpop.f32.mrb[0].mxu0
        %1184 = vdwg.mxu0
        %v1185 = vsel %vm1027, %v1180, -inf
        %1186 = vmax.xlane.f32.xlu0 %v1185
        %v1187 = vpop.xlane.xlu0 %1186
        %v1188 = vsub.f32 %v1180, %v1187
        %v1189 = vmul.f32 %v1188, 1.442695
        %v1190 = vpow.pop %v1189
        %v1191 = vsel %vm1027, %v1190, 0.0
        %1192 = vadd.xlane.f32.xlu0 %v1191
        %v1193 = vpop.xlane.xlu0 %1192
        %v1194 = vrcp.pop %v1193
        %v1195 = vmul.f32 %v1190, %v1194
        %v1196 = vpack.c.bf16 %v1195, %v1195
        %1197 = vrot.lane.b32.xlu0 %v1022, 56
        %v1198 = vpop.permute.xlu0 %1197
        %v1200 = vsel %vm1027, %v1196, 0
        %v1203 = vsel %vm1091, %v1198, 0
        %1205 = vmatprep.subr.bf16.mxu0 0
        %1206 = vmatpush1.bf16.msra.mxu0 %v1203
        %1207 = vmatprep.subr.bf16.mxu0 0
        %1208 = vmatpush1.bf16.msra.mxu0 0
        %1209 = vmatprep.subr.bf16.mxu0 0
        %1210 = vmatpush1.bf16.msra.mxu0 0
        %1211 = vmatprep.subr.bf16.mxu0 0
        %1212 = vmatpush1.bf16.msra.mxu0 0
        %1213 = vmatprep.subr.bf16.mxu0 0
        %1214 = vmatpush1.bf16.msra.mxu0 0
        %1215 = vmatprep.subr.bf16.mxu0 0
        %1216 = vmatpush1.bf16.msra.mxu0 0
        %1217 = vmatprep.subr.bf16.mxu0 0
        %1218 = vmatpush1.bf16.msra.mxu0 0
        %1219 = vmatprep.subr.bf16.mxu0 0
        %1220 = vmatpush1.bf16.msra.mxu0 0
        %1221 = vmatprep.subr.bf16.mxu0 0
        %1222 = vmatpush1.bf16.msra.mxu0 0
        %1223 = vmatprep.subr.bf16.mxu0 0
        %1224 = vmatpush1.bf16.msra.mxu0 0
        %1225 = vmatprep.subr.bf16.mxu0 0
        %1226 = vmatpush1.bf16.msra.mxu0 0
        %1227 = vmatprep.subr.bf16.mxu0 0
        %1228 = vmatpush1.bf16.msra.mxu0 0
        %1229 = vmatprep.subr.bf16.mxu0 0
        %1230 = vmatpush1.bf16.msra.mxu0 0
        %1231 = vmatprep.subr.bf16.mxu0 0
        %1232 = vmatpush1.bf16.msra.mxu0 0
        %1233 = vmatprep.subr.bf16.mxu0 0
        %1234 = vmatpush1.bf16.msra.mxu0 0
        %1235 = vmatprep.subr.bf16.mxu0 0
        %1236 = vmatpush1.bf16.msra.mxu0 0
        %1237 = vmatprep.mubr.bf16.mxu0 0
        %1238 = vmatmul.mubr.bf16.gmra.mrb[0].mxu0 %v1200
        %v1239 = vpop.f32.mrb[0].mxu0
        %v1240 = vadd.f32 0.0, %v1239
        %v1241 = vpop.f32.mrb[0].mxu0
        %v1242 = vpop.f32.mrb[0].mxu0
        %v1243 = vpop.f32.mrb[0].mxu0
        %1244 = vdwg.mxu0
        %1245 = vrot.lane.b32.xlu0 %v1022, 112
        %v1246 = vpop.permute.xlu0 %1245
        %1247 = vrot.lane.b32.xlu0 %v1022, 80
        %v1248 = vpop.permute.xlu0 %1247
        %v1250 = vsel %vm1027, %v1246, 0
        %v1253 = vsel %vm1027, %v1248, 0
        %1255 = vmatprep.subr.bf16.mxu0 0
        %1256 = vmatpush1.bf16.xpose.msra.mxu0 %v1253
        %1257 = vmatprep.subr.bf16.mxu0 0
        %1258 = vmatpush1.bf16.xpose.msra.mxu0 0
        %1259 = vmatprep.subr.bf16.mxu0 0
        %1260 = vmatpush1.bf16.xpose.msra.mxu0 0
        %1261 = vmatprep.subr.bf16.mxu0 0
        %1262 = vmatpush1.bf16.xpose.msra.mxu0 0
        %1263 = vmatprep.subr.bf16.mxu0 0
        %1264 = vmatpush1.bf16.xpose.msra.mxu0 0
        %1265 = vmatprep.subr.bf16.mxu0 0
        %1266 = vmatpush1.bf16.xpose.msra.mxu0 0
        %1267 = vmatprep.subr.bf16.mxu0 0
        %1268 = vmatpush1.bf16.xpose.msra.mxu0 0
        %1269 = vmatprep.subr.bf16.mxu0 0
        %1270 = vmatpush1.bf16.xpose.msra.mxu0 0
        %1271 = vmatprep.subr.bf16.mxu0 0
        %1272 = vmatpush1.bf16.xpose.msra.mxu0 0
        %1273 = vmatprep.subr.bf16.mxu0 0
        %1274 = vmatpush1.bf16.xpose.msra.mxu0 0
        %1275 = vmatprep.subr.bf16.mxu0 0
        %1276 = vmatpush1.bf16.xpose.msra.mxu0 0
        %1277 = vmatprep.subr.bf16.mxu0 0
        %1278 = vmatpush1.bf16.xpose.msra.mxu0 0
        %1279 = vmatprep.subr.bf16.mxu0 0
        %1280 = vmatpush1.bf16.xpose.msra.mxu0 0
        %1281 = vmatprep.subr.bf16.mxu0 0
        %1282 = vmatpush1.bf16.xpose.msra.mxu0 0
        %1283 = vmatprep.subr.bf16.mxu0 0
        %1284 = vmatpush1.bf16.xpose.msra.mxu0 0
        %1285 = vmatprep.subr.bf16.mxu0 0
        %1286 = vmatpush1.bf16.xpose.msra.mxu0 0
        %1287 = vmatprep.mubr.bf16.mxu0 0
        %1288 = vmatmul.mubr.bf16.gmra.mrb[0].mxu0 %v1250
        %v1289 = vpop.f32.mrb[0].mxu0
        %v1290 = vadd.f32 %v1023, %v1289
        %v1291 = vpop.f32.mrb[0].mxu0
        %v1292 = vpop.f32.mrb[0].mxu0
        %v1293 = vpop.f32.mrb[0].mxu0
        %1294 = vdwg.mxu0
        %v1295 = vsel %vm1027, %v1290, -inf
        %1296 = vmax.xlane.f32.xlu0 %v1295
        %v1297 = vpop.xlane.xlu0 %1296
        %v1298 = vsub.f32 %v1290, %v1297
        %v1299 = vmul.f32 %v1298, 1.442695
        %v1300 = vpow.pop %v1299
        %v1301 = vsel %vm1027, %v1300, 0.0
        %1302 = vadd.xlane.f32.xlu0 %v1301
        %v1303 = vpop.xlane.xlu0 %1302
        %v1304 = vrcp.pop %v1303
        %v1305 = vmul.f32 %v1300, %v1304
        %v1306 = vpack.c.bf16 %v1305, %v1305
        %1307 = vrot.lane.b32.xlu0 %v1022, 48
        %v1308 = vpop.permute.xlu0 %1307
        %v1310 = vsel %vm1027, %v1306, 0
        %v1313 = vsel %vm1091, %v1308, 0
        %1315 = vmatprep.subr.bf16.mxu0 0
        %1316 = vmatpush1.bf16.msra.mxu0 %v1313
        %1317 = vmatprep.subr.bf16.mxu0 0
        %1318 = vmatpush1.bf16.msra.mxu0 0
        %1319 = vmatprep.subr.bf16.mxu0 0
        %1320 = vmatpush1.bf16.msra.mxu0 0
        %1321 = vmatprep.subr.bf16.mxu0 0
        %1322 = vmatpush1.bf16.msra.mxu0 0
        %1323 = vmatprep.subr.bf16.mxu0 0
        %1324 = vmatpush1.bf16.msra.mxu0 0
        %1325 = vmatprep.subr.bf16.mxu0 0
        %1326 = vmatpush1.bf16.msra.mxu0 0
        %1327 = vmatprep.subr.bf16.mxu0 0
        %1328 = vmatpush1.bf16.msra.mxu0 0
        %1329 = vmatprep.subr.bf16.mxu0 0
        %1330 = vmatpush1.bf16.msra.mxu0 0
        %1331 = vmatprep.subr.bf16.mxu0 0
        %1332 = vmatpush1.bf16.msra.mxu0 0
        %1333 = vmatprep.subr.bf16.mxu0 0
        %1334 = vmatpush1.bf16.msra.mxu0 0
        %1335 = vmatprep.subr.bf16.mxu0 0
        %1336 = vmatpush1.bf16.msra.mxu0 0
        %1337 = vmatprep.subr.bf16.mxu0 0
        %1338 = vmatpush1.bf16.msra.mxu0 0
        %1339 = vmatprep.subr.bf16.mxu0 0
        %1340 = vmatpush1.bf16.msra.mxu0 0
        %1341 = vmatprep.subr.bf16.mxu0 0
        %1342 = vmatpush1.bf16.msra.mxu0 0
        %1343 = vmatprep.subr.bf16.mxu0 0
        %1344 = vmatpush1.bf16.msra.mxu0 0
        %1345 = vmatprep.subr.bf16.mxu0 0
        %1346 = vmatpush1.bf16.msra.mxu0 0
        %1347 = vmatprep.mubr.bf16.mxu0 0
        %1348 = vmatmul.mubr.bf16.gmra.mrb[0].mxu0 %v1310
        %v1349 = vpop.f32.mrb[0].mxu0
        %v1350 = vadd.f32 0.0, %v1349
        %v1351 = vpop.f32.mrb[0].mxu0
        %v1352 = vpop.f32.mrb[0].mxu0
        %v1353 = vpop.f32.mrb[0].mxu0
        %1354 = vdwg.mxu0
        %1355 = vrot.lane.b32.xlu0 %v1022, 104
        %v1356 = vpop.permute.xlu0 %1355
        %1357 = vrot.lane.b32.xlu0 %v1022, 72
        %v1358 = vpop.permute.xlu0 %1357
        %v1360 = vsel %vm1027, %v1356, 0
        %v1363 = vsel %vm1027, %v1358, 0
        %1365 = vmatprep.subr.bf16.mxu0 0
        %1366 = vmatpush1.bf16.xpose.msra.mxu0 %v1363
        %1367 = vmatprep.subr.bf16.mxu0 0
        %1368 = vmatpush1.bf16.xpose.msra.mxu0 0
        %1369 = vmatprep.subr.bf16.mxu0 0
        %1370 = vmatpush1.bf16.xpose.msra.mxu0 0
        %1371 = vmatprep.subr.bf16.mxu0 0
        %1372 = vmatpush1.bf16.xpose.msra.mxu0 0
        %1373 = vmatprep.subr.bf16.mxu0 0
        %1374 = vmatpush1.bf16.xpose.msra.mxu0 0
        %1375 = vmatprep.subr.bf16.mxu0 0
        %1376 = vmatpush1.bf16.xpose.msra.mxu0 0
        %1377 = vmatprep.subr.bf16.mxu0 0
        %1378 = vmatpush1.bf16.xpose.msra.mxu0 0
        %1379 = vmatprep.subr.bf16.mxu0 0
        %1380 = vmatpush1.bf16.xpose.msra.mxu0 0
        %1381 = vmatprep.subr.bf16.mxu0 0
        %1382 = vmatpush1.bf16.xpose.msra.mxu0 0
        %1383 = vmatprep.subr.bf16.mxu0 0
        %1384 = vmatpush1.bf16.xpose.msra.mxu0 0
        %1385 = vmatprep.subr.bf16.mxu0 0
        %1386 = vmatpush1.bf16.xpose.msra.mxu0 0
        %1387 = vmatprep.subr.bf16.mxu0 0
        %1388 = vmatpush1.bf16.xpose.msra.mxu0 0
        %1389 = vmatprep.subr.bf16.mxu0 0
        %1390 = vmatpush1.bf16.xpose.msra.mxu0 0
        %1391 = vmatprep.subr.bf16.mxu0 0
        %1392 = vmatpush1.bf16.xpose.msra.mxu0 0
        %1393 = vmatprep.subr.bf16.mxu0 0
        %1394 = vmatpush1.bf16.xpose.msra.mxu0 0
        %1395 = vmatprep.subr.bf16.mxu0 0
        %1396 = vmatpush1.bf16.xpose.msra.mxu0 0
        %1397 = vmatprep.mubr.bf16.mxu0 0
        %1398 = vmatmul.mubr.bf16.gmra.mrb[0].mxu0 %v1360
        %v1399 = vpop.f32.mrb[0].mxu0
        %v1400 = vadd.f32 %v1023, %v1399
        %v1401 = vpop.f32.mrb[0].mxu0
        %v1402 = vpop.f32.mrb[0].mxu0
        %v1403 = vpop.f32.mrb[0].mxu0
        %1404 = vdwg.mxu0
        %v1405 = vsel %vm1027, %v1400, -inf
        %1406 = vmax.xlane.f32.xlu0 %v1405
        %v1407 = vpop.xlane.xlu0 %1406
        %v1408 = vsub.f32 %v1400, %v1407
        %v1409 = vmul.f32 %v1408, 1.442695
        %v1410 = vpow.pop %v1409
        %v1411 = vsel %vm1027, %v1410, 0.0
        %1412 = vadd.xlane.f32.xlu0 %v1411
        %v1413 = vpop.xlane.xlu0 %1412
        %v1414 = vrcp.pop %v1413
        %v1415 = vmul.f32 %v1410, %v1414
        %v1416 = vpack.c.bf16 %v1415, %v1415
        %1417 = vrot.lane.b32.xlu0 %v1022, 40
        %v1418 = vpop.permute.xlu0 %1417
        %v1420 = vsel %vm1027, %v1416, 0
        %v1423 = vsel %vm1091, %v1418, 0
        %1425 = vmatprep.subr.bf16.mxu0 0
        %1426 = vmatpush1.bf16.msra.mxu0 %v1423
        %1427 = vmatprep.subr.bf16.mxu0 0
        %1428 = vmatpush1.bf16.msra.mxu0 0
        %1429 = vmatprep.subr.bf16.mxu0 0
        %1430 = vmatpush1.bf16.msra.mxu0 0
        %1431 = vmatprep.subr.bf16.mxu0 0
        %1432 = vmatpush1.bf16.msra.mxu0 0
        %1433 = vmatprep.subr.bf16.mxu0 0
        %1434 = vmatpush1.bf16.msra.mxu0 0
        %1435 = vmatprep.subr.bf16.mxu0 0
        %1436 = vmatpush1.bf16.msra.mxu0 0
        %1437 = vmatprep.subr.bf16.mxu0 0
        %1438 = vmatpush1.bf16.msra.mxu0 0
        %1439 = vmatprep.subr.bf16.mxu0 0
        %1440 = vmatpush1.bf16.msra.mxu0 0
        %1441 = vmatprep.subr.bf16.mxu0 0
        %1442 = vmatpush1.bf16.msra.mxu0 0
        %1443 = vmatprep.subr.bf16.mxu0 0
        %1444 = vmatpush1.bf16.msra.mxu0 0
        %1445 = vmatprep.subr.bf16.mxu0 0
        %1446 = vmatpush1.bf16.msra.mxu0 0
        %1447 = vmatprep.subr.bf16.mxu0 0
        %1448 = vmatpush1.bf16.msra.mxu0 0
        %1449 = vmatprep.subr.bf16.mxu0 0
        %1450 = vmatpush1.bf16.msra.mxu0 0
        %1451 = vmatprep.subr.bf16.mxu0 0
        %1452 = vmatpush1.bf16.msra.mxu0 0
        %1453 = vmatprep.subr.bf16.mxu0 0
        %1454 = vmatpush1.bf16.msra.mxu0 0
        %1455 = vmatprep.subr.bf16.mxu0 0
        %1456 = vmatpush1.bf16.msra.mxu0 0
        %1457 = vmatprep.mubr.bf16.mxu0 0
        %1458 = vmatmul.mubr.bf16.gmra.mrb[0].mxu0 %v1420
        %v1459 = vpop.f32.mrb[0].mxu0
        %v1460 = vadd.f32 0.0, %v1459
        %v1461 = vpop.f32.mrb[0].mxu0
        %v1462 = vpop.f32.mrb[0].mxu0
        %v1463 = vpop.f32.mrb[0].mxu0
        %1464 = vdwg.mxu0
        %1466 = vrot.lane.b32.xlu0 %v1240, 8
        %v1467 = vpop.permute.xlu0 %1466
        %1470 = vrot.lane.b32.xlu0 %v1350, 16
        %v1471 = vpop.permute.xlu0 %1470
        %1474 = vrot.lane.b32.xlu0 %v1460, 24
        %v1475 = vpop.permute.xlu0 %1474
        %v1477 = vsel %vm1027, %v1130, %v1467
        %vm1478 = vcmask 130048
        %v1479 = vsel %vm1478, %v1477, %v1471
        %vm1480 = vcmask 195584
        %v1481 = vsel %vm1480, %v1479, %v1475
        %s1482 = scalar_lea.vmem [#allocation3], 8
        %v1483 = vld [vmem:[%s1482] sm:$0xff]
        %v1484 = vrot.slane %v1022, 4
        %1485 = vrot.lane.b32.xlu0 %v1484, 96
        %v1486 = vpop.permute.xlu0 %1485
        %v1488 = vsel %vm1027, %v1484, 0
        %v1491 = vsel %vm1027, %v1486, 0
        %1493 = vmatprep.subr.bf16.mxu0 0
        %1494 = vmatpush1.bf16.xpose.msra.mxu0 %v1491
        %1495 = vmatprep.subr.bf16.mxu0 0
        %1496 = vmatpush1.bf16.xpose.msra.mxu0 0
        %1497 = vmatprep.subr.bf16.mxu0 0
        %1498 = vmatpush1.bf16.xpose.msra.mxu0 0
        %1499 = vmatprep.subr.bf16.mxu0 0
        %1500 = vmatpush1.bf16.xpose.msra.mxu0 0
        %1501 = vmatprep.subr.bf16.mxu0 0
        %1502 = vmatpush1.bf16.xpose.msra.mxu0 0
        %1503 = vmatprep.subr.bf16.mxu0 0
        %1504 = vmatpush1.bf16.xpose.msra.mxu0 0
        %1505 = vmatprep.subr.bf16.mxu0 0
        %1506 = vmatpush1.bf16.xpose.msra.mxu0 0
        %1507 = vmatprep.subr.bf16.mxu0 0
        %1508 = vmatpush1.bf16.xpose.msra.mxu0 0
        %1509 = vmatprep.subr.bf16.mxu0 0
        %1510 = vmatpush1.bf16.xpose.msra.mxu0 0
        %1511 = vmatprep.subr.bf16.mxu0 0
        %1512 = vmatpush1.bf16.xpose.msra.mxu0 0
        %1513 = vmatprep.subr.bf16.mxu0 0
        %1514 = vmatpush1.bf16.xpose.msra.mxu0 0
        %1515 = vmatprep.subr.bf16.mxu0 0
        %1516 = vmatpush1.bf16.xpose.msra.mxu0 0
        %1517 = vmatprep.subr.bf16.mxu0 0
        %1518 = vmatpush1.bf16.xpose.msra.mxu0 0
        %1519 = vmatprep.subr.bf16.mxu0 0
        %1520 = vmatpush1.bf16.xpose.msra.mxu0 0
        %1521 = vmatprep.subr.bf16.mxu0 0
        %1522 = vmatpush1.bf16.xpose.msra.mxu0 0
        %1523 = vmatprep.subr.bf16.mxu0 0
        %1524 = vmatpush1.bf16.xpose.msra.mxu0 0
        %1525 = vmatprep.mubr.bf16.mxu0 0
        %1526 = vmatmul.mubr.bf16.gmra.mrb[0].mxu0 %v1488
        %v1527 = vpop.f32.mrb[0].mxu0
        %v1528 = vadd.f32 %v1483, %v1527
        %v1529 = vpop.f32.mrb[0].mxu0
        %v1530 = vpop.f32.mrb[0].mxu0
        %v1531 = vpop.f32.mrb[0].mxu0
        %1532 = vdwg.mxu0
        %v1533 = vsel %vm1027, %v1528, -inf
        %1534 = vmax.xlane.f32.xlu0 %v1533
        %v1535 = vpop.xlane.xlu0 %1534
        %v1536 = vsub.f32 %v1528, %v1535
        %v1537 = vmul.f32 %v1536, 1.442695
        %v1538 = vpow.pop %v1537
        %v1539 = vsel %vm1027, %v1538, 0.0
        %1540 = vadd.xlane.f32.xlu0 %v1539
        %v1541 = vpop.xlane.xlu0 %1540
        %v1542 = vrcp.pop %v1541
        %v1543 = vmul.f32 %v1538, %v1542
        %v1544 = vpack.c.bf16 %v1543, %v1543
        %1545 = vrot.lane.b32.xlu0 %v1484, 64
        %v1546 = vpop.permute.xlu0 %1545
        %v1548 = vsel %vm1027, %v1544, 0
        %v1551 = vsel %vm1091, %v1546, 0
        %1553 = vmatprep.subr.bf16.mxu0 0
        %1554 = vmatpush1.bf16.msra.mxu0 %v1551
        %1555 = vmatprep.subr.bf16.mxu0 0
        %1556 = vmatpush1.bf16.msra.mxu0 0
        %1557 = vmatprep.subr.bf16.mxu0 0
        %1558 = vmatpush1.bf16.msra.mxu0 0
        %1559 = vmatprep.subr.bf16.mxu0 0
        %1560 = vmatpush1.bf16.msra.mxu0 0
        %1561 = vmatprep.subr.bf16.mxu0 0
        %1562 = vmatpush1.bf16.msra.mxu0 0
        %1563 = vmatprep.subr.bf16.mxu0 0
        %1564 = vmatpush1.bf16.msra.mxu0 0
        %1565 = vmatprep.subr.bf16.mxu0 0
        %1566 = vmatpush1.bf16.msra.mxu0 0
        %1567 = vmatprep.subr.bf16.mxu0 0
        %1568 = vmatpush1.bf16.msra.mxu0 0
        %1569 = vmatprep.subr.bf16.mxu0 0
        %1570 = vmatpush1.bf16.msra.mxu0 0
        %1571 = vmatprep.subr.bf16.mxu0 0
        %1572 = vmatpush1.bf16.msra.mxu0 0
        %1573 = vmatprep.subr.bf16.mxu0 0
        %1574 = vmatpush1.bf16.msra.mxu0 0
        %1575 = vmatprep.subr.bf16.mxu0 0
        %1576 = vmatpush1.bf16.msra.mxu0 0
        %1577 = vmatprep.subr.bf16.mxu0 0
        %1578 = vmatpush1.bf16.msra.mxu0 0
        %1579 = vmatprep.subr.bf16.mxu0 0
        %1580 = vmatpush1.bf16.msra.mxu0 0
        %1581 = vmatprep.subr.bf16.mxu0 0
        %1582 = vmatpush1.bf16.msra.mxu0 0
        %1583 = vmatprep.subr.bf16.mxu0 0
        %1584 = vmatpush1.bf16.msra.mxu0 0
        %1585 = vmatprep.mubr.bf16.mxu0 0
        %1586 = vmatmul.mubr.bf16.gmra.mrb[0].mxu0 %v1548
        %v1587 = vpop.f32.mrb[0].mxu0
        %v1588 = vadd.f32 0.0, %v1587
        %v1589 = vpop.f32.mrb[0].mxu0
        %v1590 = vpop.f32.mrb[0].mxu0
        %v1591 = vpop.f32.mrb[0].mxu0
        %1592 = vdwg.mxu0
        %1593 = vrot.lane.b32.xlu0 %v1484, 120
        %v1594 = vpop.permute.xlu0 %1593
        %1595 = vrot.lane.b32.xlu0 %v1484, 88
        %v1596 = vpop.permute.xlu0 %1595
        %v1598 = vsel %vm1027, %v1594, 0
        %v1601 = vsel %vm1027, %v1596, 0
        %1603 = vmatprep.subr.bf16.mxu0 0
        %1604 = vmatpush1.bf16.xpose.msra.mxu0 %v1601
        %1605 = vmatprep.subr.bf16.mxu0 0
        %1606 = vmatpush1.bf16.xpose.msra.mxu0 0
        %1607 = vmatprep.subr.bf16.mxu0 0
        %1608 = vmatpush1.bf16.xpose.msra.mxu0 0
        %1609 = vmatprep.subr.bf16.mxu0 0
        %1610 = vmatpush1.bf16.xpose.msra.mxu0 0
        %1611 = vmatprep.subr.bf16.mxu0 0
        %1612 = vmatpush1.bf16.xpose.msra.mxu0 0
        %1613 = vmatprep.subr.bf16.mxu0 0
        %1614 = vmatpush1.bf16.xpose.msra.mxu0 0
        %1615 = vmatprep.subr.bf16.mxu0 0
        %1616 = vmatpush1.bf16.xpose.msra.mxu0 0
        %1617 = vmatprep.subr.bf16.mxu0 0
        %1618 = vmatpush1.bf16.xpose.msra.mxu0 0
        %1619 = vmatprep.subr.bf16.mxu0 0
        %1620 = vmatpush1.bf16.xpose.msra.mxu0 0
        %1621 = vmatprep.subr.bf16.mxu0 0
        %1622 = vmatpush1.bf16.xpose.msra.mxu0 0
        %1623 = vmatprep.subr.bf16.mxu0 0
        %1624 = vmatpush1.bf16.xpose.msra.mxu0 0
        %1625 = vmatprep.subr.bf16.mxu0 0
        %1626 = vmatpush1.bf16.xpose.msra.mxu0 0
        %1627 = vmatprep.subr.bf16.mxu0 0
        %1628 = vmatpush1.bf16.xpose.msra.mxu0 0
        %1629 = vmatprep.subr.bf16.mxu0 0
        %1630 = vmatpush1.bf16.xpose.msra.mxu0 0
        %1631 = vmatprep.subr.bf16.mxu0 0
        %1632 = vmatpush1.bf16.xpose.msra.mxu0 0
        %1633 = vmatprep.subr.bf16.mxu0 0
        %1634 = vmatpush1.bf16.xpose.msra.mxu0 0
        %1635 = vmatprep.mubr.bf16.mxu0 0
        %1636 = vmatmul.mubr.bf16.gmra.mrb[0].mxu0 %v1598
        %v1637 = vpop.f32.mrb[0].mxu0
        %v1638 = vadd.f32 %v1483, %v1637
        %v1639 = vpop.f32.mrb[0].mxu0
        %v1640 = vpop.f32.mrb[0].mxu0
        %v1641 = vpop.f32.mrb[0].mxu0
        %1642 = vdwg.mxu0
        %v1643 = vsel %vm1027, %v1638, -inf
        %1644 = vmax.xlane.f32.xlu0 %v1643
        %v1645 = vpop.xlane.xlu0 %1644
        %v1646 = vsub.f32 %v1638, %v1645
        %v1647 = vmul.f32 %v1646, 1.442695
        %v1648 = vpow.pop %v1647
        %v1649 = vsel %vm1027, %v1648, 0.0
        %1650 = vadd.xlane.f32.xlu0 %v1649
        %v1651 = vpop.xlane.xlu0 %1650
        %v1652 = vrcp.pop %v1651
        %v1653 = vmul.f32 %v1648, %v1652
        %v1654 = vpack.c.bf16 %v1653, %v1653
        %1655 = vrot.lane.b32.xlu0 %v1484, 56
        %v1656 = vpop.permute.xlu0 %1655
        %v1658 = vsel %vm1027, %v1654, 0
        %v1661 = vsel %vm1091, %v1656, 0
        %1663 = vmatprep.subr.bf16.mxu0 0
        %1664 = vmatpush1.bf16.msra.mxu0 %v1661
        %1665 = vmatprep.subr.bf16.mxu0 0
        %1666 = vmatpush1.bf16.msra.mxu0 0
        %1667 = vmatprep.subr.bf16.mxu0 0
        %1668 = vmatpush1.bf16.msra.mxu0 0
        %1669 = vmatprep.subr.bf16.mxu0 0
        %1670 = vmatpush1.bf16.msra.mxu0 0
        %1671 = vmatprep.subr.bf16.mxu0 0
        %1672 = vmatpush1.bf16.msra.mxu0 0
        %1673 = vmatprep.subr.bf16.mxu0 0
        %1674 = vmatpush1.bf16.msra.mxu0 0
        %1675 = vmatprep.subr.bf16.mxu0 0
        %1676 = vmatpush1.bf16.msra.mxu0 0
        %1677 = vmatprep.subr.bf16.mxu0 0
        %1678 = vmatpush1.bf16.msra.mxu0 0
        %1679 = vmatprep.subr.bf16.mxu0 0
        %1680 = vmatpush1.bf16.msra.mxu0 0
        %1681 = vmatprep.subr.bf16.mxu0 0
        %1682 = vmatpush1.bf16.msra.mxu0 0
        %1683 = vmatprep.subr.bf16.mxu0 0
        %1684 = vmatpush1.bf16.msra.mxu0 0
        %1685 = vmatprep.subr.bf16.mxu0 0
        %1686 = vmatpush1.bf16.msra.mxu0 0
        %1687 = vmatprep.subr.bf16.mxu0 0
        %1688 = vmatpush1.bf16.msra.mxu0 0
        %1689 = vmatprep.subr.bf16.mxu0 0
        %1690 = vmatpush1.bf16.msra.mxu0 0
        %1691 = vmatprep.subr.bf16.mxu0 0
        %1692 = vmatpush1.bf16.msra.mxu0 0
        %1693 = vmatprep.subr.bf16.mxu0 0
        %1694 = vmatpush1.bf16.msra.mxu0 0
        %1695 = vmatprep.mubr.bf16.mxu0 0
        %1696 = vmatmul.mubr.bf16.gmra.mrb[0].mxu0 %v1658
        %v1697 = vpop.f32.mrb[0].mxu0
        %v1698 = vadd.f32 0.0, %v1697
        %v1699 = vpop.f32.mrb[0].mxu0
        %v1700 = vpop.f32.mrb[0].mxu0
        %v1701 = vpop.f32.mrb[0].mxu0
        %1702 = vdwg.mxu0
        %1703 = vrot.lane.b32.xlu0 %v1484, 112
        %v1704 = vpop.permute.xlu0 %1703
        %1705 = vrot.lane.b32.xlu0 %v1484, 80
        %v1706 = vpop.permute.xlu0 %1705
        %v1708 = vsel %vm1027, %v1704, 0
        %v1711 = vsel %vm1027, %v1706, 0
        %1713 = vmatprep.subr.bf16.mxu0 0
        %1714 = vmatpush1.bf16.xpose.msra.mxu0 %v1711
        %1715 = vmatprep.subr.bf16.mxu0 0
        %1716 = vmatpush1.bf16.xpose.msra.mxu0 0
        %1717 = vmatprep.subr.bf16.mxu0 0
        %1718 = vmatpush1.bf16.xpose.msra.mxu0 0
        %1719 = vmatprep.subr.bf16.mxu0 0
        %1720 = vmatpush1.bf16.xpose.msra.mxu0 0
        %1721 = vmatprep.subr.bf16.mxu0 0
        %1722 = vmatpush1.bf16.xpose.msra.mxu0 0
        %1723 = vmatprep.subr.bf16.mxu0 0
        %1724 = vmatpush1.bf16.xpose.msra.mxu0 0
        %1725 = vmatprep.subr.bf16.mxu0 0
        %1726 = vmatpush1.bf16.xpose.msra.mxu0 0
        %1727 = vmatprep.subr.bf16.mxu0 0
        %1728 = vmatpush1.bf16.xpose.msra.mxu0 0
        %1729 = vmatprep.subr.bf16.mxu0 0
        %1730 = vmatpush1.bf16.xpose.msra.mxu0 0
        %1731 = vmatprep.subr.bf16.mxu0 0
        %1732 = vmatpush1.bf16.xpose.msra.mxu0 0
        %1733 = vmatprep.subr.bf16.mxu0 0
        %1734 = vmatpush1.bf16.xpose.msra.mxu0 0
        %1735 = vmatprep.subr.bf16.mxu0 0
        %1736 = vmatpush1.bf16.xpose.msra.mxu0 0
        %1737 = vmatprep.subr.bf16.mxu0 0
        %1738 = vmatpush1.bf16.xpose.msra.mxu0 0
        %1739 = vmatprep.subr.bf16.mxu0 0
        %1740 = vmatpush1.bf16.xpose.msra.mxu0 0
        %1741 = vmatprep.subr.bf16.mxu0 0
        %1742 = vmatpush1.bf16.xpose.msra.mxu0 0
        %1743 = vmatprep.subr.bf16.mxu0 0
        %1744 = vmatpush1.bf16.xpose.msra.mxu0 0
        %1745 = vmatprep.mubr.bf16.mxu0 0
        %1746 = vmatmul.mubr.bf16.gmra.mrb[0].mxu0 %v1708
        %v1747 = vpop.f32.mrb[0].mxu0
        %v1748 = vadd.f32 %v1483, %v1747
        %v1749 = vpop.f32.mrb[0].mxu0
        %v1750 = vpop.f32.mrb[0].mxu0
        %v1751 = vpop.f32.mrb[0].mxu0
        %1752 = vdwg.mxu0
        %v1753 = vsel %vm1027, %v1748, -inf
        %1754 = vmax.xlane.f32.xlu0 %v1753
        %v1755 = vpop.xlane.xlu0 %1754
        %v1756 = vsub.f32 %v1748, %v1755
        %v1757 = vmul.f32 %v1756, 1.442695
        %v1758 = vpow.pop %v1757
        %v1759 = vsel %vm1027, %v1758, 0.0
        %1760 = vadd.xlane.f32.xlu0 %v1759
        %v1761 = vpop.xlane.xlu0 %1760
        %v1762 = vrcp.pop %v1761
        %v1763 = vmul.f32 %v1758, %v1762
        %v1764 = vpack.c.bf16 %v1763, %v1763
        %1765 = vrot.lane.b32.xlu0 %v1484, 48
        %v1766 = vpop.permute.xlu0 %1765
        %v1768 = vsel %vm1027, %v1764, 0
        %v1771 = vsel %vm1091, %v1766, 0
        %1773 = vmatprep.subr.bf16.mxu0 0
        %1774 = vmatpush1.bf16.msra.mxu0 %v1771
        %1775 = vmatprep.subr.bf16.mxu0 0
        %1776 = vmatpush1.bf16.msra.mxu0 0
        %1777 = vmatprep.subr.bf16.mxu0 0
        %1778 = vmatpush1.bf16.msra.mxu0 0
        %1779 = vmatprep.subr.bf16.mxu0 0
        %1780 = vmatpush1.bf16.msra.mxu0 0
        %1781 = vmatprep.subr.bf16.mxu0 0
        %1782 = vmatpush1.bf16.msra.mxu0 0
        %1783 = vmatprep.subr.bf16.mxu0 0
        %1784 = vmatpush1.bf16.msra.mxu0 0
        %1785 = vmatprep.subr.bf16.mxu0 0
        %1786 = vmatpush1.bf16.msra.mxu0 0
        %1787 = vmatprep.subr.bf16.mxu0 0
        %1788 = vmatpush1.bf16.msra.mxu0 0
        %1789 = vmatprep.subr.bf16.mxu0 0
        %1790 = vmatpush1.bf16.msra.mxu0 0
        %1791 = vmatprep.subr.bf16.mxu0 0
        %1792 = vmatpush1.bf16.msra.mxu0 0
        %1793 = vmatprep.subr.bf16.mxu0 0
        %1794 = vmatpush1.bf16.msra.mxu0 0
        %1795 = vmatprep.subr.bf16.mxu0 0
        %1796 = vmatpush1.bf16.msra.mxu0 0
        %1797 = vmatprep.subr.bf16.mxu0 0
        %1798 = vmatpush1.bf16.msra.mxu0 0
        %1799 = vmatprep.subr.bf16.mxu0 0
        %1800 = vmatpush1.bf16.msra.mxu0 0
        %1801 = vmatprep.subr.bf16.mxu0 0
        %1802 = vmatpush1.bf16.msra.mxu0 0
        %1803 = vmatprep.subr.bf16.mxu0 0
        %1804 = vmatpush1.bf16.msra.mxu0 0
        %1805 = vmatprep.mubr.bf16.mxu0 0
        %1806 = vmatmul.mubr.bf16.gmra.mrb[0].mxu0 %v1768
        %v1807 = vpop.f32.mrb[0].mxu0
        %v1808 = vadd.f32 0.0, %v1807
        %v1809 = vpop.f32.mrb[0].mxu0
        %v1810 = vpop.f32.mrb[0].mxu0
        %v1811 = vpop.f32.mrb[0].mxu0
        %1812 = vdwg.mxu0
        %1813 = vrot.lane.b32.xlu0 %v1484, 104
        %v1814 = vpop.permute.xlu0 %1813
        %1815 = vrot.lane.b32.xlu0 %v1484, 72
        %v1816 = vpop.permute.xlu0 %1815
        %v1818 = vsel %vm1027, %v1814, 0
        %v1821 = vsel %vm1027, %v1816, 0
        %1823 = vmatprep.subr.bf16.mxu0 0
        %1824 = vmatpush1.bf16.xpose.msra.mxu0 %v1821
        %1825 = vmatprep.subr.bf16.mxu0 0
        %1826 = vmatpush1.bf16.xpose.msra.mxu0 0
        %1827 = vmatprep.subr.bf16.mxu0 0
        %1828 = vmatpush1.bf16.xpose.msra.mxu0 0
        %1829 = vmatprep.subr.bf16.mxu0 0
        %1830 = vmatpush1.bf16.xpose.msra.mxu0 0
        %1831 = vmatprep.subr.bf16.mxu0 0
        %1832 = vmatpush1.bf16.xpose.msra.mxu0 0
        %1833 = vmatprep.subr.bf16.mxu0 0
        %1834 = vmatpush1.bf16.xpose.msra.mxu0 0
        %1835 = vmatprep.subr.bf16.mxu0 0
        %1836 = vmatpush1.bf16.xpose.msra.mxu0 0
        %1837 = vmatprep.subr.bf16.mxu0 0
        %1838 = vmatpush1.bf16.xpose.msra.mxu0 0
        %1839 = vmatprep.subr.bf16.mxu0 0
        %1840 = vmatpush1.bf16.xpose.msra.mxu0 0
        %1841 = vmatprep.subr.bf16.mxu0 0
        %1842 = vmatpush1.bf16.xpose.msra.mxu0 0
        %1843 = vmatprep.subr.bf16.mxu0 0
        %1844 = vmatpush1.bf16.xpose.msra.mxu0 0
        %1845 = vmatprep.subr.bf16.mxu0 0
        %1846 = vmatpush1.bf16.xpose.msra.mxu0 0
        %1847 = vmatprep.subr.bf16.mxu0 0
        %1848 = vmatpush1.bf16.xpose.msra.mxu0 0
        %1849 = vmatprep.subr.bf16.mxu0 0
        %1850 = vmatpush1.bf16.xpose.msra.mxu0 0
        %1851 = vmatprep.subr.bf16.mxu0 0
        %1852 = vmatpush1.bf16.xpose.msra.mxu0 0
        %1853 = vmatprep.subr.bf16.mxu0 0
        %1854 = vmatpush1.bf16.xpose.msra.mxu0 0
        %1855 = vmatprep.mubr.bf16.mxu0 0
        %1856 = vmatmul.mubr.bf16.gmra.mrb[0].mxu0 %v1818
        %v1857 = vpop.f32.mrb[0].mxu0
        %v1858 = vadd.f32 %v1483, %v1857
        %v1859 = vpop.f32.mrb[0].mxu0
        %v1860 = vpop.f32.mrb[0].mxu0
        %v1861 = vpop.f32.mrb[0].mxu0
        %1862 = vdwg.mxu0
        %v1863 = vsel %vm1027, %v1858, -inf
        %1864 = vmax.xlane.f32.xlu0 %v1863
        %v1865 = vpop.xlane.xlu0 %1864
        %v1866 = vsub.f32 %v1858, %v1865
        %v1867 = vmul.f32 %v1866, 1.442695
        %v1868 = vpow.pop %v1867
        %v1869 = vsel %vm1027, %v1868, 0.0
        %1870 = vadd.xlane.f32.xlu0 %v1869
        %v1871 = vpop.xlane.xlu0 %1870
        %v1872 = vrcp.pop %v1871
        %v1873 = vmul.f32 %v1868, %v1872
        %v1874 = vpack.c.bf16 %v1873, %v1873
        %1875 = vrot.lane.b32.xlu0 %v1484, 40
        %v1876 = vpop.permute.xlu0 %1875
        %v1878 = vsel %vm1027, %v1874, 0
        %v1881 = vsel %vm1091, %v1876, 0
        %1883 = vmatprep.subr.bf16.mxu0 0
        %1884 = vmatpush1.bf16.msra.mxu0 %v1881
        %1885 = vmatprep.subr.bf16.mxu0 0
        %1886 = vmatpush1.bf16.msra.mxu0 0
        %1887 = vmatprep.subr.bf16.mxu0 0
        %1888 = vmatpush1.bf16.msra.mxu0 0
        %1889 = vmatprep.subr.bf16.mxu0 0
        %1890 = vmatpush1.bf16.msra.mxu0 0
        %1891 = vmatprep.subr.bf16.mxu0 0
        %1892 = vmatpush1.bf16.msra.mxu0 0
        %1893 = vmatprep.subr.bf16.mxu0 0
        %1894 = vmatpush1.bf16.msra.mxu0 0
        %1895 = vmatprep.subr.bf16.mxu0 0
        %1896 = vmatpush1.bf16.msra.mxu0 0
        %1897 = vmatprep.subr.bf16.mxu0 0
        %1898 = vmatpush1.bf16.msra.mxu0 0
        %1899 = vmatprep.subr.bf16.mxu0 0
        %1900 = vmatpush1.bf16.msra.mxu0 0
        %1901 = vmatprep.subr.bf16.mxu0 0
        %1902 = vmatpush1.bf16.msra.mxu0 0
        %1903 = vmatprep.subr.bf16.mxu0 0
        %1904 = vmatpush1.bf16.msra.mxu0 0
        %1905 = vmatprep.subr.bf16.mxu0 0
        %1906 = vmatpush1.bf16.msra.mxu0 0
        %1907 = vmatprep.subr.bf16.mxu0 0
        %1908 = vmatpush1.bf16.msra.mxu0 0
        %1909 = vmatprep.subr.bf16.mxu0 0
        %1910 = vmatpush1.bf16.msra.mxu0 0
        %1911 = vmatprep.subr.bf16.mxu0 0
        %1912 = vmatpush1.bf16.msra.mxu0 0
        %1913 = vmatprep.subr.bf16.mxu0 0
        %1914 = vmatpush1.bf16.msra.mxu0 0
        %1915 = vmatprep.mubr.bf16.mxu0 0
        %1916 = vmatmul.mubr.bf16.gmra.mrb[0].mxu0 %v1878
        %v1917 = vpop.f32.mrb[0].mxu0
        %v1918 = vadd.f32 0.0, %v1917
        %v1919 = vpop.f32.mrb[0].mxu0
        %v1920 = vpop.f32.mrb[0].mxu0
        %v1921 = vpop.f32.mrb[0].mxu0
        %1922 = vdwg.mxu0
        %1924 = vrot.lane.b32.xlu0 %v1698, 8
        %v1925 = vpop.permute.xlu0 %1924
        %1928 = vrot.lane.b32.xlu0 %v1808, 16
        %v1929 = vpop.permute.xlu0 %1928
        %1932 = vrot.lane.b32.xlu0 %v1918, 24
        %v1933 = vpop.permute.xlu0 %1932
        %v1935 = vsel %vm1027, %v1588, %v1925
        %v1936 = vsel %vm1478, %v1935, %v1929
        %v1937 = vsel %vm1480, %v1936, %v1933
        %v1938 = vld [vmem:[%s804] sm:$0x3f]
        %v1939 = vpack.c.bf16 %v1937, %v1481
        %v1940 = vld [vmem:[%s761] sm:$0xf]
        %v1941 = vld [vmem:[%s761 + $0x4] sm:$0xf]
        %v1942 = vld [vmem:[%s761 + $0x8] sm:$0xf]
        %v1943 = vld [vmem:[%s761 + $0xc] sm:$0xf]
        %v1944 = vlaneseq
        %v1945 = vshrl.u32 %v1944, 7
        %v1946 = vsub.s32 0, %v1945
        %v1947 = vrot.slane %v1938, %v1946
        %v1952 = vunpack.c.l.b16 %v1940
        %v1953 = vunpack.c.l.b16 %v1941
        %v1954 = vunpack.c.l.b16 %v1942
        %v1955 = vunpack.c.l.b16 %v1943
        %v1956 = vpack.c.b16 %v1953, %v1952
        %v1957 = vpack.c.b16 %v1955, %v1954
        %v1961 = vsel %vm977, %v1939, 0
        %1963 = vmatprep.subr.bf16.mxu0 0
        %1964 = vmatpush1.bf16.msra.mxu0 %v1956
        %1965 = vmatprep.subr.bf16.mxu0 0
        %1966 = vmatpush1.bf16.msra.mxu0 %v1957
        %1967 = vmatprep.subr.bf16.mxu0 0
        %1968 = vmatpush1.bf16.msra.mxu0 0
        %1969 = vmatprep.subr.bf16.mxu0 0
        %1970 = vmatpush1.bf16.msra.mxu0 0
        %1971 = vmatprep.subr.bf16.mxu0 0
        %1972 = vmatpush1.bf16.msra.mxu0 0
        %1973 = vmatprep.subr.bf16.mxu0 0
        %1974 = vmatpush1.bf16.msra.mxu0 0
        %1975 = vmatprep.subr.bf16.mxu0 0
        %1976 = vmatpush1.bf16.msra.mxu0 0
        %1977 = vmatprep.subr.bf16.mxu0 0
        %1978 = vmatpush1.bf16.msra.mxu0 0
        %1979 = vmatprep.subr.bf16.mxu0 0
        %1980 = vmatpush1.bf16.msra.mxu0 0
        %1981 = vmatprep.subr.bf16.mxu0 0
        %1982 = vmatpush1.bf16.msra.mxu0 0
        %1983 = vmatprep.subr.bf16.mxu0 0
        %1984 = vmatpush1.bf16.msra.mxu0 0
        %1985 = vmatprep.subr.bf16.mxu0 0
        %1986 = vmatpush1.bf16.msra.mxu0 0
        %1987 = vmatprep.subr.bf16.mxu0 0
        %1988 = vmatpush1.bf16.msra.mxu0 0
        %1989 = vmatprep.subr.bf16.mxu0 0
        %1990 = vmatpush1.bf16.msra.mxu0 0
        %1991 = vmatprep.subr.bf16.mxu0 0
        %1992 = vmatpush1.bf16.msra.mxu0 0
        %1993 = vmatprep.subr.bf16.mxu0 0
        %1994 = vmatpush1.bf16.msra.mxu0 0
        %1995 = vmatprep.mubr.bf16.mxu0 0
        %1996 = vmatmul.mubr.bf16.gmra.mrb[0].mxu0 %v1961
        %v1997 = vpop.f32.mrb[0].mxu0
        %v1998 = vadd.f32 %v1947, %v1997
        %v1999 = vpop.f32.mrb[0].mxu0
        %v2000 = vpop.f32.mrb[0].mxu0
        %v2001 = vadd.f32 %v1947, %v2000
        %v2002 = vpop.f32.mrb[0].mxu0
        %2003 = vdwg.mxu0
        %v2004 = vadd.f32 %v951, %v1998
        %v2005 = vadd.f32 %v952, %v2001
        %v2006 = vsel %vm977, %v2004, 0.0
        %2007 = vadd.xlane.f32.xlu0 %v2006
        %v2008 = vpop.xlane.xlu0 %2007
        %v2009 = vsel %vm977, %v2005, 0.0
        %2010 = vadd.xlane.f32.xlu0 %v2009
        %v2011 = vpop.xlane.xlu0 %2010
        %v2012 = vrcp.pop 32.0
        %v2013 = vmul.f32 %v2008, %v2012
        %v2014 = vmul.f32 %v2011, %v2012
        %v2015 = vsub.f32 %v2004, %v2013
        %v2016 = vsub.f32 %v2005, %v2014
        %v2017 = vmul.f32 %v2015, %v2015
        %v2018 = vmul.f32 %v2016, %v2016
        %v2019 = vsel %vm977, %v2017, 0.0
        %2020 = vadd.xlane.f32.xlu0 %v2019
        %v2021 = vpop.xlane.xlu0 %2020
        %v2022 = vsel %vm977, %v2018, 0.0
        %2023 = vadd.xlane.f32.xlu0 %v2022
        %v2024 = vpop.xlane.xlu0 %2023
        %v2025 = vmul.f32 %v2021, %v2012
        %v2026 = vmul.f32 %v2024, %v2012
        %v2027 = vadd.f32 %v2025, 1e-05
        %v2028 = vadd.f32 %v2026, 1e-05
        %v2029 = vrsqrt.pop %v2027
        %v2030 = vrsqrt.pop %v2028
        %v2031 = vmul.f32 %v2015, %v2029
        %v2032 = vmul.f32 %v2016, %v2030
        %v2033 = vlaneseq
        %v2034 = vshrl.u32 %v2033, 7
        %v2035 = vsub.s32 1, %v2034
        %v2036 = vrot.slane %v1938, %v2035
        %v2037 = vmul.f32 %v2031, %v2036
        %v2038 = vmul.f32 %v2032, %v2036
        %v2039 = vlaneseq
        %v2040 = vshrl.u32 %v2039, 7
        %v2041 = vsub.s32 2, %v2040
        %v2042 = vrot.slane %v1938, %v2041
        %v2043 = vadd.f32 %v2037, %v2042
        %v2044 = vadd.f32 %v2038, %v2042
        %v2045 = vpack.c.bf16 %v2044, %v2043
        %v2046 = vld [vmem:[%s795] sm:$0x1]
        %v2047 = vld [vmem:[%s770] sm:$0xf]
        %v2048 = vld [vmem:[%s770 + $0x4] sm:$0xf]
        %v2049 = vld [vmem:[%s770 + $0x8] sm:$0xf]
        %v2050 = vld [vmem:[%s770 + $0xc] sm:$0xf]
        %v2052 = vlaneseq
        %v2053 = vshrl.u32 %v2052, 7
        %v2054 = vsub.s32 0, %v2053
        %v2055 = vrot.slane %v2046, %v2054
        %v2061 = vunpack.c.l.b16 %v2047
        %v2062 = vunpack.c.l.b16 %v2048
        %v2063 = vunpack.c.l.b16 %v2049
        %v2064 = vunpack.c.l.b16 %v2050
        %v2065 = vpack.c.b16 %v2062, %v2061
        %v2066 = vpack.c.b16 %v2064, %v2063
        %v2070 = vsel %vm977, %v2045, 0
        %2072 = vmatprep.subr.bf16.mxu0 0
        %2073 = vmatpush1.bf16.msra.mxu0 %v2065
        %2074 = vmatprep.subr.bf16.mxu0 0
        %2075 = vmatpush1.bf16.msra.mxu0 %v2066
        %2076 = vmatprep.subr.bf16.mxu0 0
        %2077 = vmatpush1.bf16.msra.mxu0 0
        %2078 = vmatprep.subr.bf16.mxu0 0
        %2079 = vmatpush1.bf16.msra.mxu0 0
        %2080 = vmatprep.subr.bf16.mxu0 0
        %2081 = vmatpush1.bf16.msra.mxu0 0
        %2082 = vmatprep.subr.bf16.mxu0 0
        %2083 = vmatpush1.bf16.msra.mxu0 0
        %2084 = vmatprep.subr.bf16.mxu0 0
        %2085 = vmatpush1.bf16.msra.mxu0 0
        %2086 = vmatprep.subr.bf16.mxu0 0
        %2087 = vmatpush1.bf16.msra.mxu0 0
        %2088 = vmatprep.subr.bf16.mxu0 0
        %2089 = vmatpush1.bf16.msra.mxu0 0
        %2090 = vmatprep.subr.bf16.mxu0 0
        %2091 = vmatpush1.bf16.msra.mxu0 0
        %2092 = vmatprep.subr.bf16.mxu0 0
        %2093 = vmatpush1.bf16.msra.mxu0 0
        %2094 = vmatprep.subr.bf16.mxu0 0
        %2095 = vmatpush1.bf16.msra.mxu0 0
        %2096 = vmatprep.subr.bf16.mxu0 0
        %2097 = vmatpush1.bf16.msra.mxu0 0
        %2098 = vmatprep.subr.bf16.mxu0 0
        %2099 = vmatpush1.bf16.msra.mxu0 0
        %2100 = vmatprep.subr.bf16.mxu0 0
        %2101 = vmatpush1.bf16.msra.mxu0 0
        %2102 = vmatprep.subr.bf16.mxu0 0
        %2103 = vmatpush1.bf16.msra.mxu0 0
        %2104 = vmatprep.mubr.bf16.mxu0 0
        %2105 = vmatmul.mubr.bf16.gmra.mrb[0].mxu0 %v2070
        %v2106 = vpop.f32.mrb[0].mxu0
        %v2107 = vadd.f32 %v2055, %v2106
        %v2108 = vpop.f32.mrb[0].mxu0
        %v2109 = vpop.f32.mrb[0].mxu0
        %v2110 = vadd.f32 %v2055, %v2109
        %v2111 = vpop.f32.mrb[0].mxu0
        %2112 = vdwg.mxu0
        %v2113 = vmax.f32 %v2107, 0.0
        %v2114 = vmax.f32 %v2110, 0.0
        %v2115 = vpack.c.bf16 %v2114, %v2113
        %v2116 = vld [vmem:[%s779] sm:$0xf]
        %v2117 = vld [vmem:[%s779 + $0x4] sm:$0xf]
        %v2118 = vld [vmem:[%s779 + $0x8] sm:$0xf]
        %v2119 = vld [vmem:[%s779 + $0xc] sm:$0xf]
        %v2120 = vld [vmem:[%s779 + $0x10] sm:$0xf]
        %v2121 = vld [vmem:[%s779 + $0x14] sm:$0xf]
        %v2122 = vld [vmem:[%s779 + $0x18] sm:$0xf]
        %v2123 = vld [vmem:[%s779 + $0x1c] sm:$0xf]
        %v2124 = vld [vmem:[%s779 + $0x20] sm:$0xf]
        %v2125 = vld [vmem:[%s779 + $0x24] sm:$0xf]
        %v2126 = vld [vmem:[%s779 + $0x28] sm:$0xf]
        %v2127 = vld [vmem:[%s779 + $0x2c] sm:$0xf]
        %v2128 = vld [vmem:[%s779 + $0x30] sm:$0xf]
        %v2129 = vld [vmem:[%s779 + $0x34] sm:$0xf]
        %v2130 = vld [vmem:[%s779 + $0x38] sm:$0xf]
        %v2131 = vld [vmem:[%s779 + $0x3c] sm:$0xf]
        %v2148 = vunpack.c.l.b16 %v2116
        %v2149 = vunpack.c.l.b16 %v2117
        %v2150 = vunpack.c.l.b16 %v2118
        %v2151 = vunpack.c.l.b16 %v2119
        %v2152 = vunpack.c.l.b16 %v2120
        %v2153 = vunpack.c.l.b16 %v2121
        %v2154 = vunpack.c.l.b16 %v2122
        %v2155 = vunpack.c.l.b16 %v2123
        %v2156 = vunpack.c.l.b16 %v2124
        %v2157 = vunpack.c.l.b16 %v2125
        %v2158 = vunpack.c.l.b16 %v2126
        %v2159 = vunpack.c.l.b16 %v2127
        %v2160 = vunpack.c.l.b16 %v2128
        %v2161 = vunpack.c.l.b16 %v2129
        %v2162 = vunpack.c.l.b16 %v2130
        %v2163 = vunpack.c.l.b16 %v2131
        %v2164 = vpack.c.b16 %v2149, %v2148
        %v2165 = vpack.c.b16 %v2151, %v2150
        %v2166 = vpack.c.b16 %v2153, %v2152
        %v2167 = vpack.c.b16 %v2155, %v2154
        %v2168 = vpack.c.b16 %v2157, %v2156
        %v2169 = vpack.c.b16 %v2159, %v2158
        %v2170 = vpack.c.b16 %v2161, %v2160
        %v2171 = vpack.c.b16 %v2163, %v2162
        %2180 = vmatprep.subr.bf16.mxu0 0
        %2181 = vmatpush1.bf16.msra.mxu0 %v2164
        %2182 = vmatprep.subr.bf16.mxu0 0
        %2183 = vmatpush1.bf16.msra.mxu0 %v2165
        %2184 = vmatprep.subr.bf16.mxu0 0
        %2185 = vmatpush1.bf16.msra.mxu0 %v2166
        %2186 = vmatprep.subr.bf16.mxu0 0
        %2187 = vmatpush1.bf16.msra.mxu0 %v2167
        %2188 = vmatprep.subr.bf16.mxu0 0
        %2189 = vmatpush1.bf16.msra.mxu0 %v2168
        %2190 = vmatprep.subr.bf16.mxu0 0
        %2191 = vmatpush1.bf16.msra.mxu0 %v2169
        %2192 = vmatprep.subr.bf16.mxu0 0
        %2193 = vmatpush1.bf16.msra.mxu0 %v2170
        %2194 = vmatprep.subr.bf16.mxu0 0
        %2195 = vmatpush1.bf16.msra.mxu0 %v2171
        %2196 = vmatprep.subr.bf16.mxu0 0
        %2197 = vmatpush1.bf16.msra.mxu0 0
        %2198 = vmatprep.subr.bf16.mxu0 0
        %2199 = vmatpush1.bf16.msra.mxu0 0
        %2200 = vmatprep.subr.bf16.mxu0 0
        %2201 = vmatpush1.bf16.msra.mxu0 0
        %2202 = vmatprep.subr.bf16.mxu0 0
        %2203 = vmatpush1.bf16.msra.mxu0 0
        %2204 = vmatprep.subr.bf16.mxu0 0
        %2205 = vmatpush1.bf16.msra.mxu0 0
        %2206 = vmatprep.subr.bf16.mxu0 0
        %2207 = vmatpush1.bf16.msra.mxu0 0
        %2208 = vmatprep.subr.bf16.mxu0 0
        %2209 = vmatpush1.bf16.msra.mxu0 0
        %2210 = vmatprep.subr.bf16.mxu0 0
        %2211 = vmatpush1.bf16.msra.mxu0 0
        %2212 = vmatprep.mubr.bf16.mxu0 0
        %2213 = vmatmul.mubr.bf16.gmra.mrb[0].mxu0 %v2115
        %v2214 = vpop.f32.mrb[0].mxu0
        %v2215 = vadd.f32 0.0, %v2214
        %v2216 = vpop.f32.mrb[0].mxu0
        %v2217 = vpop.f32.mrb[0].mxu0
        %v2218 = vadd.f32 0.0, %v2217
        %v2219 = vpop.f32.mrb[0].mxu0
        %2220 = vdwg.mxu0
        %v2221 = vadd.f32 %v2043, %v2215
        %v2222 = vadd.f32 %v2044, %v2218
        %v2223 = vlaneseq
        %v2224 = vshrl.u32 %v2223, 7
        %v2225 = vsub.s32 3, %v2224
        %v2226 = vrot.slane %v1938, %v2225
        %v2227 = vadd.f32 %v2221, %v2226
        %v2228 = vadd.f32 %v2222, %v2226
        %v2229 = vsel %vm977, %v2227, 0.0
        %2230 = vadd.xlane.f32.xlu0 %v2229
        %v2231 = vpop.xlane.xlu0 %2230
        %v2232 = vsel %vm977, %v2228, 0.0
        %2233 = vadd.xlane.f32.xlu0 %v2232
        %v2234 = vpop.xlane.xlu0 %2233
        %v2235 = vmul.f32 %v2231, %v2012
        %v2236 = vmul.f32 %v2234, %v2012
        %v2237 = vsub.f32 %v2227, %v2235
        %v2238 = vsub.f32 %v2228, %v2236
        %v2239 = vmul.f32 %v2237, %v2237
        %v2240 = vmul.f32 %v2238, %v2238
        %v2241 = vsel %vm977, %v2239, 0.0
        %2242 = vadd.xlane.f32.xlu0 %v2241
        %v2243 = vpop.xlane.xlu0 %2242
        %v2244 = vsel %vm977, %v2240, 0.0
        %2245 = vadd.xlane.f32.xlu0 %v2244
        %v2246 = vpop.xlane.xlu0 %2245
        %v2247 = vmul.f32 %v2243, %v2012
        %v2248 = vmul.f32 %v2246, %v2012
        %v2249 = vadd.f32 %v2247, 1e-05
        %v2250 = vadd.f32 %v2248, 1e-05
        %v2251 = vrsqrt.pop %v2249
        %v2252 = vrsqrt.pop %v2250
        %v2253 = vmul.f32 %v2237, %v2251
        %v2254 = vmul.f32 %v2238, %v2252
        %v2255 = vlaneseq
        %v2256 = vshrl.u32 %v2255, 7
        %v2257 = vsub.s32 4, %v2256
        %v2258 = vrot.slane %v1938, %v2257
        %v2259 = vmul.f32 %v2253, %v2258
        %v2260 = vmul.f32 %v2254, %v2258
        %v2261 = vlaneseq
        %v2262 = vshrl.u32 %v2261, 7
        %v2263 = vsub.s32 5, %v2262
        %v2264 = vrot.slane %v1938, %v2263
        %v2265 = vadd.f32 %v2259, %v2264
        %v2266 = vadd.f32 %v2260, %v2264
        %v2267 = vld [vmem:[#allocation12] sm:$0xff]
        %v2268 = vld [vmem:[#allocation12 + $0x8] sm:$0xff]
        %vm2269 = vcmp.gt.f32.partialorder %v2267, 0.5
        %vm2270 = vcmp.gt.f32.partialorder %v2268, 0.5
        %v2271 = vsel %vm2269, 1, 0
        %v2272 = vsel %vm2270, 1, 0
        %2273 = vset.pattern.permute.xlu0 0
        %2274 = vperm.xlu0 %2273, %v2271
        %v2275 = vpop.permute.xlu0 %2274
        %2276 = vset.pattern.permute.xlu0 0
        %2277 = vperm.xlu0 %2276, %v2272
        %v2278 = vpop.permute.xlu0 %2277
        %vm2279 = vcmp.eq.s32.totalorder %v2275, 1
        %vm2280 = vcmp.eq.s32.totalorder %v2278, 1
        %v2281 = vsel %vm2279, 0.0, %v2265
        %v2282 = vsel %vm2280, 0.0, %v2266
        %2283 = vst.msk [vmem:[#allocation2] sm:$0xff] %vm977, %v2281
        %2284 = vst.msk [vmem:[#allocation2 + $0x8] sm:$0xff] %vm977, %v2282
        %p2285 = scmp.eq.s32.totalorder %s48, 1
        // Predicated region
        $region145: #{tpu_custom_call.1} parent=79 // pred_check
          %p2286 = pneg %p2285
        $region146: #{tpu_custom_call.1} parent=79 // pred_check_branch
          %2288 = sbr.rel (%p2286) target = $region148
        $region147: #{tpu_custom_call.1} parent=79 // pred_region
          %v2289 = vld [vmem:[#allocation2] sm:$0xff]
          %v2290 = vld [vmem:[#allocation2 + $0x8] sm:$0xff]
          %v2291 = vld [vmem:[#allocation24] sm:$0x1]
          %v2292 = vld [vmem:[#allocation24 + $0x1] sm:$0x1]
          %v2293 = vsel %vm977, %v2289, 0.0
          %2294 = vadd.xlane.f32.xlu0 %v2293
          %v2295 = vpop.xlane.xlu0 %2294
          %v2296 = vsel %vm977, %v2290, 0.0
          %2297 = vadd.xlane.f32.xlu0 %v2296
          %v2298 = vpop.xlane.xlu0 %2297
          %v2299 = vmul.f32 %v2295, %v2012
          %v2300 = vmul.f32 %v2298, %v2012
          %v2301 = vsub.f32 %v2289, %v2299
          %v2302 = vsub.f32 %v2290, %v2300
          %v2303 = vmul.f32 %v2301, %v2301
          %v2304 = vmul.f32 %v2302, %v2302
          %v2305 = vsel %vm977, %v2303, 0.0
          %2306 = vadd.xlane.f32.xlu0 %v2305
          %v2307 = vpop.xlane.xlu0 %2306
          %v2308 = vsel %vm977, %v2304, 0.0
          %2309 = vadd.xlane.f32.xlu0 %v2308
          %v2310 = vpop.xlane.xlu0 %2309
          %v2311 = vmul.f32 %v2307, %v2012
          %v2312 = vmul.f32 %v2310, %v2012
          %v2313 = vadd.f32 %v2311, 1e-05
          %v2314 = vadd.f32 %v2312, 1e-05
          %v2315 = vrsqrt.pop %v2313
          %v2316 = vrsqrt.pop %v2314
          %v2317 = vmul.f32 %v2301, %v2315
          %v2318 = vmul.f32 %v2302, %v2316
          %v2319 = vlaneseq
          %v2320 = vshrl.u32 %v2319, 7
          %v2321 = vsub.s32 0, %v2320
          %v2322 = vrot.slane %v2291, %v2321
          %v2323 = vmul.f32 %v2317, %v2322
          %v2324 = vmul.f32 %v2318, %v2322
          %v2325 = vlaneseq
          %v2326 = vshrl.u32 %v2325, 7
          %v2327 = vsub.s32 0, %v2326
          %v2328 = vrot.slane %v2292, %v2327
          %v2329 = vadd.f32 %v2323, %v2328
          %v2330 = vadd.f32 %v2324, %v2328
          %v2331 = vsel %vm977, %v2329, 0.0
          %v2332 = vrot.slane %v2331, 4
          %v2333 = vadd.f32 %v2331, %v2332
          %v2334 = vrot.slane %v2333, 2
          %v2335 = vadd.f32 %v2333, %v2334
          %v2336 = vrot.slane %v2335, 1
          %v2337 = vadd.f32 %v2335, %v2336
          %v2338 = vrcp.pop 8.0
          %v2339 = vmul.f32 %v2337, %v2338
          %v2340 = vsel %vm977, %v2330, 0.0
          %v2341 = vrot.slane %v2340, 4
          %v2342 = vadd.f32 %v2340, %v2341
          %v2343 = vrot.slane %v2342, 2
          %v2344 = vadd.f32 %v2342, %v2343
          %v2345 = vrot.slane %v2344, 1
          %v2346 = vadd.f32 %v2344, %v2345
          %v2347 = vmul.f32 %v2346, %v2338
          %vm2348 = vcmask 1040384
          %v2349 = vsel %vm2348, %v2339, %v2347
          %v2350 = vpack.c.bf16 %v2349, %v2349
          %v2351 = vld [vmem:[#allocation25] sm:$0xf]
          %v2352 = vld [vmem:[#allocation25 + $0x4] sm:$0xf]
          %v2353 = vld [vmem:[#allocation25 + $0x8] sm:$0xf]
          %v2354 = vld [vmem:[#allocation25 + $0xc] sm:$0xf]
          %v2355 = vld [vmem:[#allocation27] sm:$0x1]
          %v2357 = vlaneseq
          %v2358 = vshrl.u32 %v2357, 7
          %v2359 = vsub.s32 0, %v2358
          %v2360 = vrot.slane %v2355, %v2359
          %v2366 = vunpack.c.l.b16 %v2351
          %v2367 = vunpack.c.l.b16 %v2352
          %v2368 = vunpack.c.l.b16 %v2353
          %v2369 = vunpack.c.l.b16 %v2354
          %v2370 = vpack.c.b16 %v2367, %v2366
          %v2371 = vpack.c.b16 %v2369, %v2368
          %v2375 = vsel %vm977, %v2350, 0
          %2377 = vmatprep.subr.bf16.mxu0 0
          %2378 = vmatpush1.bf16.msra.mxu0 %v2370
          %2379 = vmatprep.subr.bf16.mxu0 0
          %2380 = vmatpush1.bf16.msra.mxu0 %v2371
          %2381 = vmatprep.subr.bf16.mxu0 0
          %2382 = vmatpush1.bf16.msra.mxu0 0
          %2383 = vmatprep.subr.bf16.mxu0 0
          %2384 = vmatpush1.bf16.msra.mxu0 0
          %2385 = vmatprep.subr.bf16.mxu0 0
          %2386 = vmatpush1.bf16.msra.mxu0 0
          %2387 = vmatprep.subr.bf16.mxu0 0
          %2388 = vmatpush1.bf16.msra.mxu0 0
          %2389 = vmatprep.subr.bf16.mxu0 0
          %2390 = vmatpush1.bf16.msra.mxu0 0
          %2391 = vmatprep.subr.bf16.mxu0 0
          %2392 = vmatpush1.bf16.msra.mxu0 0
          %2393 = vmatprep.subr.bf16.mxu0 0
          %2394 = vmatpush1.bf16.msra.mxu0 0
          %2395 = vmatprep.subr.bf16.mxu0 0
          %2396 = vmatpush1.bf16.msra.mxu0 0
          %2397 = vmatprep.subr.bf16.mxu0 0
          %2398 = vmatpush1.bf16.msra.mxu0 0
          %2399 = vmatprep.subr.bf16.mxu0 0
          %2400 = vmatpush1.bf16.msra.mxu0 0
          %2401 = vmatprep.subr.bf16.mxu0 0
          %2402 = vmatpush1.bf16.msra.mxu0 0
          %2403 = vmatprep.subr.bf16.mxu0 0
          %2404 = vmatpush1.bf16.msra.mxu0 0
          %2405 = vmatprep.subr.bf16.mxu0 0
          %2406 = vmatpush1.bf16.msra.mxu0 0
          %2407 = vmatprep.subr.bf16.mxu0 0
          %2408 = vmatpush1.bf16.msra.mxu0 0
          %2409 = vmatprep.mubr.bf16.mxu0 0
          %2410 = vmatmul.mubr.bf16.gmra.mrb[0].mxu0 %v2375
          %v2411 = vpop.f32.mrb[0].mxu0
          %v2412 = vadd.f32 %v2360, %v2411
          %v2413 = vpop.f32.mrb[0].mxu0
          %v2414 = vpop.f32.mrb[0].mxu0
          %v2415 = vpop.f32.mrb[0].mxu0
          %2416 = vdwg.mxu0
          %2417 = vst [vmem:[#allocation28] sm:$0x3] %v2412
        $region148: #{tpu_custom_call.1} parent=79 // pred_fallthru
          _
        // Predicated region
        $region149: #{tpu_custom_call.1} parent=79 // pred_check
          %p2418 = pneg %p448
        $region150: #{tpu_custom_call.1} parent=79 // pred_check_branch
          %2420 = sbr.rel (%p2418) target = $region152
        $region151: #{tpu_custom_call.1} parent=79 // pred_region
          %s2422 = ssub.s32 32, 32
          %2423 = vsyncadd [#allocation6], %s2422
          %s2424 = smul.addr %s47, 32
          %s2425 = scalar_lea.hbm %s15, %s2424
          %s2427 = sshll.u32 [#allocation28], 4
          %s2428 = int_to_ptr.vmem [resolvable:$true] %s2427
          %2430 = dma.vmem_to_hbm [thread:$0]  %s2428, 32, %s2425, [#allocation6]
        $region152: #{tpu_custom_call.1} parent=79 // pred_fallthru
          _
        // Predicated region
        $region153: #{tpu_custom_call.1} parent=79 // pred_check
          %p2431 = pneg %p448
        $region154: #{tpu_custom_call.1} parent=79 // pred_check_branch
          %2433 = sbr.rel (%p2431) target = $region156
        $region155: #{tpu_custom_call.1} parent=79 // pred_region
          %2434 = dma.done [#allocation6], 32
        $region156: #{tpu_custom_call.1} parent=79 // pred_fallthru
          _
      $region80: #{tpu_custom_call.1} parent=5 // pred_fallthru
        _
      %p2435 = scmp.le.s32.totalorder 2, %s38
      // Predicated region
      $region157: #{tpu_custom_call.1} parent=5 // pred_check
        %p2436 = pneg %p2435
      $region158: #{tpu_custom_call.1} parent=5 // pred_check_branch
        %2438 = sbr.rel (%p2436) target = $region160
      $region159: #{tpu_custom_call.1} parent=5 // pred_region
        %s2439 = ssub.s32 %s38, 2
      $region160: #{tpu_custom_call.1} parent=5 // pred_fallthru
        _
    $region6: #{tpu_custom_call.1} parent=1 // loop_footer
      %s42 = sadd.s32 1, %s38
    $region7: #{tpu_custom_call.1} parent=1 // loop_footer_branch
      %37 = sbr.rel target = $region3
    $region8: #{tpu_custom_call.1} parent=1 // loop_exit
      _
    %2440 = vsyncpa [#allocation5], 1
    %s2441 = scalar_lea.sflag [#allocation5], 1
    %2442 = vsyncpa %s2441, 1
    %2443 = vsyncpa [#allocation8], 1
    %2444 = vsyncpa [#allocation11], 1
    %2445 = vsyncpa [#allocation14], 1
    %s2446 = scalar_lea.sflag [#allocation14], 1
    %2447 = vsyncpa %s2446, 1
    %2448 = vsyncpa [#allocation17], 1
    %s2449 = scalar_lea.sflag [#allocation17], 1
    %2450 = vsyncpa %s2449, 1
    %2451 = vsyncpa [#allocation20], 1
    %s2452 = scalar_lea.sflag [#allocation20], 1
    %2453 = vsyncpa %s2452, 1
    %2454 = vsyncpa [#allocation23], 1
    %s2455 = scalar_lea.sflag [#allocation23], 1
    %2456 = vsyncpa %s2455, 1
    %2457 = vsyncpa [#allocation26], 1
    %2458 = vsyncpa [#allocation6], 1
    %s2459 = scalar_lea.sflag [#allocation6], 1
    %2460 = vsyncpa %s2459, 1

</llo_original>
